<compile_context>
chip_gen: v7x
topology: tpu7x:2x2x1
jax: 0.10.0
libtpu: 0.0.40
codegen_flags: <defaults>
</compile_context>

<pallas_src>
import functools

import jax
import jax.numpy as jnp
from jax import lax
from jax.experimental import pallas as pl
from jax.experimental.pallas import tpu as pltpu

IN_FEATURES = 10
OUT_FEATURES = 5

MIN_PALLAS_ROWS = 4096      # below this, XLA's fused matmul+bias already wins.

_MIB = 1024 * 1024
# (tb,10) and (tb,5) f32 blocks each pad the last dim to 128 lanes -> 512 B/row
# per buffer; double-buffered input + output => ~2 KiB per row of VMEM.
_PADDED_BYTES_PER_ROW = 2048


@functools.lru_cache(maxsize=None)
def _generation_limits():
    """Return (max_block_rows, vmem_limit_cap_bytes) sized from this chip's VMEM."""
    try:
        vmem_cap = pltpu.get_tpu_info().vmem_capacity_bytes
    except Exception:
        vmem_cap = 0  # unknown -> use conservative (v7x-safe) settings
    if vmem_cap >= 96 * _MIB:
        # v5e / v6e: 128 MiB VMEM per TensorCore.
        return 32768, 72 * _MIB
    # v7x (64 MiB per TC) or unknown backend: safe everywhere.
    return 12288, 48 * _MIB


def _linear_kernel(x_ref, w_ref, b_ref, o_ref):
    # x_ref: (tb, IN) streamed block; w_ref: (OUT, IN) torch-layout weight
    # (constant block); b_ref: (1, OUT); o_ref: (tb, OUT).
    # Contract dim 1 of x with dim 1 of w (== x @ W^T), f32 accumulation on MXU.
    y = lax.dot_general(
        x_ref[...],
        w_ref[...],
        dimension_numbers=(((1,), (1,)), ((), ())),
        preferred_element_type=jnp.float32,
    )
    o_ref[...] = (y + b_ref[...]).astype(o_ref.dtype)


def _linear_pallas_2d(x2, weight, bias2, block_rows):
    """Gridded/pipelined path for flattened (B, IN) inputs."""
    B = x2.shape[0]
    max_tb, vmem_cap = _generation_limits()

    tb = min(block_rows if block_rows is not None else max_tb, max_tb, B)
    if tb != B:
        # Block row-count must be a multiple of 8 (or equal the full dim).
        tb = max(8, (tb // 8) * 8)
    grid = (pl.cdiv(B, tb),)

    # Double-buffered in+out tiles plus slack, floored at the usual 32 MiB
    # default and capped per generation.
    vmem_limit = int(min(max(tb * _PADDED_BYTES_PER_ROW + 8 * _MIB, 32 * _MIB),
                         vmem_cap))

    cost = pl.CostEstimate(
        flops=2 * B * IN_FEATURES * OUT_FEATURES,
        transcendentals=0,
        bytes_accessed=(B * (IN_FEATURES + OUT_FEATURES)
                        + OUT_FEATURES * IN_FEATURES + OUT_FEATURES) * 4,
    )

    return pl.pallas_call(
        _linear_kernel,
        out_shape=jax.ShapeDtypeStruct((B, OUT_FEATURES), x2.dtype),
        grid=grid,
        in_specs=[
            pl.BlockSpec((tb, IN_FEATURES), lambda i: (i, 0)),            # streamed x tiles
            pl.BlockSpec((OUT_FEATURES, IN_FEATURES), lambda i: (0, 0)),  # resident weight
            pl.BlockSpec((1, OUT_FEATURES), lambda i: (0, 0)),            # resident bias
        ],
        out_specs=pl.BlockSpec((tb, OUT_FEATURES), lambda i: (i, 0)),
        compiler_params=pltpu.CompilerParams(
            dimension_semantics=("parallel",),
            vmem_limit_bytes=vmem_limit,
        ),
        cost_estimate=cost,
    )(x2, weight, bias2)


def linear_pallas(x, weight, bias, *, block_rows=None,
                  min_pallas_rows=MIN_PALLAS_ROWS):
    """Forward of nn.Linear(10, 5): y = x @ weight.T + bias.

    x: (..., 10); weight: (5, 10) [torch layout]; bias: (5,).
    """
    orig_1d = x.ndim == 1
    x2 = x.reshape(1, IN_FEATURES) if orig_1d else x.reshape(-1, IN_FEATURES)
    B = x2.shape[0]

    if B < min_pallas_rows:
        # Small batch (incl. the module's canonical (10,) input): launch + DMA
        # fixed cost would dominate; let XLA fuse matmul + bias.
        out = x2 @ weight.T + bias[None, :]
    else:
        out = _linear_pallas_2d(x2, weight, bias.reshape(1, OUT_FEATURES),
                                block_rows)

    if orig_1d:
        return out.reshape(OUT_FEATURES)
    return out.reshape(x.shape[:-1] + (OUT_FEATURES,))


if __name__ == "__main__":
    key = jax.random.PRNGKey(0)
    k_w, k_b, k_x1, k_x2, k_x3, k_x4 = jax.random.split(key, 6)

    # Deterministic params mimicking nn.Linear's uniform(-1/sqrt(in), 1/sqrt(in)).
    bound = 1.0 / jnp.sqrt(float(IN_FEATURES))
    weight = jax.random.uniform(
        k_w, (OUT_FEATURES, IN_FEATURES), jnp.float32, minval=-bound, maxval=bound
    )
    bias = jax.random.uniform(
        k_b, (OUT_FEATURES,), jnp.float32, minval=-bound, maxval=bound
    )

    # Canonical module input: a single length-10 vector (tiny path, fused XLA).
    x_vec = jax.random.normal(k_x1, (IN_FEATURES,), jnp.float32)
    # Small batch (tiny path).
    x_small = jax.random.normal(k_x2, (8, IN_FEATURES), jnp.float32)
    # Batch large enough for the default Pallas path (single block, tb == B).
    x_single = jax.random.normal(k_x3, (4096, IN_FEATURES), jnp.float32)
    # Batch exercising the multi-step pipelined grid incl. a ragged last block
    # (2500 rows with 1024-row tiles -> grid of 3, third block masked).
    x_ragged = jax.random.normal(k_x4, (2500, IN_FEATURES), jnp.float32)

    y_vec = jax.block_until_ready(linear_pallas(x_vec, weight, bias))
    y_small = jax.block_until_ready(linear_pallas(x_small, weight, bias))
    y_single = jax.block_until_ready(linear_pallas(x_single, weight, bias))
    y_ragged = jax.block_until_ready(
        linear_pallas(x_ragged, weight, bias, block_rows=1024, min_pallas_rows=0)
    )

    ref = lambda x: x @ weight.T + bias

    assert y_vec.shape == (OUT_FEATURES,)
    assert y_small.shape == (8, OUT_FEATURES)
    assert y_single.shape == (4096, OUT_FEATURES)
    assert y_ragged.shape == (2500, OUT_FEATURES)
    assert jnp.allclose(y_vec, ref(x_vec), atol=1e-5, rtol=1e-5)
    assert jnp.allclose(y_small, ref(x_small), atol=1e-5, rtol=1e-5)
    assert jnp.allclose(y_single, ref(x_single), atol=1e-5, rtol=1e-5)
    assert jnp.allclose(y_ragged, ref(x_ragged), atol=1e-5, rtol=1e-5)

    print("KERNEL_OK")
</pallas_src>

<mosaic_0001>
module attributes {stable_mosaic.version = 11 : i64} {
  func.func @_linear_kernel(%arg0: i32, %arg1: memref<4096x10xf32, #tpu.memory_space<vmem>>, %arg2: memref<5x10xf32, #tpu.memory_space<vmem>>, %arg3: memref<1x5xf32, #tpu.memory_space<vmem>>, %arg4: memref<4096x5xf32, #tpu.memory_space<vmem>>) attributes {dimension_semantics = [#tpu.dimension_semantics<parallel>], iteration_bounds = array<i64: 1>, scalar_prefetch = 0 : i64, scratch_operands = 0 : i64, tpu.core_type = #tpu.core_type<tc>, window_params = [{transform_indices = @transform_0, window_bounds = array<i64: 4096, 10>}, {pipeline_mode = #tpu.pipeline_mode<synchronous>, transform_indices = @transform_1, window_bounds = array<i64: 5, 10>}, {pipeline_mode = #tpu.pipeline_mode<synchronous>, transform_indices = @transform_2, window_bounds = array<i64: 1, 5>}, {transform_indices = @transform_3, window_bounds = array<i64: 4096, 5>}]} {
    %c0 = arith.constant 0 : index
    %c0_0 = arith.constant 0 : index
    %0 = vector.load %arg1[%c0, %c0_0] : memref<4096x10xf32, #tpu.memory_space<vmem>>, vector<4096x10xf32>
    %c0_1 = arith.constant 0 : index
    %c0_2 = arith.constant 0 : index
    %1 = vector.load %arg2[%c0_1, %c0_2] : memref<5x10xf32, #tpu.memory_space<vmem>>, vector<5x10xf32>
    %cst = arith.constant dense<0.000000e+00> : vector<4096x5xf32>
    %2 = tpu.matmul %0, %1, %cst {dimension_numbers = #tpu.dot_dimension_numbers<[1], [1], [0], [0], [0, 0, 1, 0], [], []>} : vector<4096x10xf32>, vector<5x10xf32>, vector<4096x5xf32> -> vector<4096x5xf32>
    %c0_3 = arith.constant 0 : index
    %c0_4 = arith.constant 0 : index
    %3 = vector.load %arg3[%c0_3, %c0_4] : memref<1x5xf32, #tpu.memory_space<vmem>>, vector<1x5xf32>
    %4 = vector.broadcast %3 : vector<1x5xf32> to vector<4096x5xf32>
    %5 = arith.addf %2, %4 : vector<4096x5xf32>
    %c0_5 = arith.constant 0 : index
    %c0_6 = arith.constant 0 : index
    %6 = vector.load %arg4[%c0_5, %c0_6] : memref<4096x5xf32, #tpu.memory_space<vmem>>, vector<4096x5xf32>
    tpu.vector_store %arg4[%c0_5, %c0_6], %5 {strides = array<i32>} : memref<4096x5xf32, #tpu.memory_space<vmem>>, vector<4096x5xf32>,
    return
  }
  func.func @transform_0(%arg0: i32) -> (i32, i32) {
    %c0_i32 = arith.constant 0 : i32
    %c0_i32_0 = arith.constant 0 : i32
    return %arg0, %c0_i32 : i32, i32
  }
  func.func @transform_1(%arg0: i32) -> (i32, i32) {
    %c0_i32 = arith.constant 0 : i32
    %c0_i32_0 = arith.constant 0 : i32
    %c0_i32_1 = arith.constant 0 : i32
    return %c0_i32, %c0_i32_0 : i32, i32
  }
  func.func @transform_2(%arg0: i32) -> (i32, i32) {
    %c0_i32 = arith.constant 0 : i32
    %c0_i32_0 = arith.constant 0 : i32
    %c0_i32_1 = arith.constant 0 : i32
    return %c0_i32, %c0_i32_0 : i32, i32
  }
  func.func @transform_3(%arg0: i32) -> (i32, i32) {
    %c0_i32 = arith.constant 0 : i32
    %c0_i32_0 = arith.constant 0 : i32
    return %arg0, %c0_i32 : i32, i32
  }
}

</mosaic_0001>

<llo_original>
// kernel: tpu_custom_call.1
$region0: #{tpu_custom_call.1}
  #allocation0 [shape = 'u32[]', space=smem, size = 0x4, offset = 0x4, fixed_abs, tag = 'smem constant byte address 0x4 - core index']
  #allocation1 [shape = 'u32[144,128]{1,0:T(1,128)}', space=vmem, size = 0x12000, scoped, tag = 'internal scratch']
  %s0 = inlined_call_operand.vmem [shape: f32[4096,10], index: 0, kind: input, shape index: {}]
  %s1 = inlined_call_operand.vmem [shape: f32[5,10], index: 1, kind: input, shape index: {}]
  %s2 = inlined_call_operand.vmem [shape: f32[1,5], index: 2, kind: input, shape index: {}]
  %s3 = inlined_call_operand.vmem [shape: f32[4096,5], index: 3, kind: output, shape index: {}]
  %s4 = sld [smem:[#allocation0]]
  $region22: #{tpu_custom_call.1} parent=0
    _
  %s6 = ssub.s32 1, %s4
  %s7 = scalar_select 0, %s6, %s4
  // Predicated region
  $region2: #{tpu_custom_call.1} parent=0 // pred_check
    _
  $region3: #{tpu_custom_call.1} parent=0 // pred_check_branch
    %9 = sbr.rel (0) target = $region5
  $region4: #{tpu_custom_call.1} parent=0 // pred_region
    _
  $region5: #{tpu_custom_call.1} parent=0 // pred_fallthru
    _
  // Predicated region
  $region6: #{tpu_custom_call.1} parent=0 // pred_check
    _
  $region7: #{tpu_custom_call.1} parent=0 // pred_check_branch
    %11 = sbr.rel (0) target = $region9
  $region8: #{tpu_custom_call.1} parent=0 // pred_region
    _
  $region9: #{tpu_custom_call.1} parent=0 // pred_fallthru
    _
  // Predicated region
  $region10: #{tpu_custom_call.1} parent=0 // pred_check
    _
  $region11: #{tpu_custom_call.1} parent=0 // pred_check_branch
    %13 = sbr.rel (0) target = $region13
  $region12: #{tpu_custom_call.1} parent=0 // pred_region
    _
  $region13: #{tpu_custom_call.1} parent=0 // pred_fallthru
    _
  %v14 = vld [vmem:[%s0] sm:$0xff]
  %v15 = vld [vmem:[%s0 + $0x8] sm:$0xff]
  %v16 = vld [vmem:[%s0 + $0x10] sm:$0xff]
  %v17 = vld [vmem:[%s0 + $0x18] sm:$0xff]
  %v18 = vld [vmem:[%s0 + $0x20] sm:$0xff]
  %v19 = vld [vmem:[%s0 + $0x28] sm:$0xff]
  %v20 = vld [vmem:[%s0 + $0x30] sm:$0xff]
  %v21 = vld [vmem:[%s0 + $0x38] sm:$0xff]
  %v22 = vld [vmem:[%s0 + $0x40] sm:$0xff]
  %v23 = vld [vmem:[%s0 + $0x48] sm:$0xff]
  %v24 = vld [vmem:[%s0 + $0x50] sm:$0xff]
  %v25 = vld [vmem:[%s0 + $0x58] sm:$0xff]
  %v26 = vld [vmem:[%s0 + $0x60] sm:$0xff]
  %v27 = vld [vmem:[%s0 + $0x68] sm:$0xff]
  %v28 = vld [vmem:[%s0 + $0x70] sm:$0xff]
  %v29 = vld [vmem:[%s0 + $0x78] sm:$0xff]
  %v30 = vld [vmem:[%s0 + $0x80] sm:$0xff]
  %v31 = vld [vmem:[%s0 + $0x88] sm:$0xff]
  %v32 = vld [vmem:[%s0 + $0x90] sm:$0xff]
  %v33 = vld [vmem:[%s0 + $0x98] sm:$0xff]
  %v34 = vld [vmem:[%s0 + $0xa0] sm:$0xff]
  %v35 = vld [vmem:[%s0 + $0xa8] sm:$0xff]
  %v36 = vld [vmem:[%s0 + $0xb0] sm:$0xff]
  %v37 = vld [vmem:[%s0 + $0xb8] sm:$0xff]
  %v38 = vld [vmem:[%s0 + $0xc0] sm:$0xff]
  %v39 = vld [vmem:[%s0 + $0xc8] sm:$0xff]
  %v40 = vld [vmem:[%s0 + $0xd0] sm:$0xff]
  %v41 = vld [vmem:[%s0 + $0xd8] sm:$0xff]
  %v42 = vld [vmem:[%s0 + $0xe0] sm:$0xff]
  %v43 = vld [vmem:[%s0 + $0xe8] sm:$0xff]
  %v44 = vld [vmem:[%s0 + $0xf0] sm:$0xff]
  %v45 = vld [vmem:[%s0 + $0xf8] sm:$0xff]
  %v46 = vld [vmem:[%s0 + $0x100] sm:$0xff]
  %v47 = vld [vmem:[%s0 + $0x108] sm:$0xff]
  %v48 = vld [vmem:[%s0 + $0x110] sm:$0xff]
  %v49 = vld [vmem:[%s0 + $0x118] sm:$0xff]
  %v50 = vld [vmem:[%s0 + $0x120] sm:$0xff]
  %v51 = vld [vmem:[%s0 + $0x128] sm:$0xff]
  %v52 = vld [vmem:[%s0 + $0x130] sm:$0xff]
  %v53 = vld [vmem:[%s0 + $0x138] sm:$0xff]
  %v54 = vld [vmem:[%s0 + $0x140] sm:$0xff]
  %v55 = vld [vmem:[%s0 + $0x148] sm:$0xff]
  %v56 = vld [vmem:[%s0 + $0x150] sm:$0xff]
  %v57 = vld [vmem:[%s0 + $0x158] sm:$0xff]
  %v58 = vld [vmem:[%s0 + $0x160] sm:$0xff]
  %v59 = vld [vmem:[%s0 + $0x168] sm:$0xff]
  %v60 = vld [vmem:[%s0 + $0x170] sm:$0xff]
  %v61 = vld [vmem:[%s0 + $0x178] sm:$0xff]
  %v62 = vld [vmem:[%s0 + $0x180] sm:$0xff]
  %v63 = vld [vmem:[%s0 + $0x188] sm:$0xff]
  %v64 = vld [vmem:[%s0 + $0x190] sm:$0xff]
  %v65 = vld [vmem:[%s0 + $0x198] sm:$0xff]
  %v66 = vld [vmem:[%s0 + $0x1a0] sm:$0xff]
  %v67 = vld [vmem:[%s0 + $0x1a8] sm:$0xff]
  %v68 = vld [vmem:[%s0 + $0x1b0] sm:$0xff]
  %v69 = vld [vmem:[%s0 + $0x1b8] sm:$0xff]
  %v70 = vld [vmem:[%s0 + $0x1c0] sm:$0xff]
  %v71 = vld [vmem:[%s0 + $0x1c8] sm:$0xff]
  %v72 = vld [vmem:[%s0 + $0x1d0] sm:$0xff]
  %v73 = vld [vmem:[%s0 + $0x1d8] sm:$0xff]
  %v74 = vld [vmem:[%s0 + $0x1e0] sm:$0xff]
  %v75 = vld [vmem:[%s0 + $0x1e8] sm:$0xff]
  %v76 = vld [vmem:[%s0 + $0x1f0] sm:$0xff]
  %v77 = vld [vmem:[%s0 + $0x1f8] sm:$0xff]
  %v78 = vld [vmem:[%s0 + $0x200] sm:$0xff]
  %v79 = vld [vmem:[%s0 + $0x208] sm:$0xff]
  %v80 = vld [vmem:[%s0 + $0x210] sm:$0xff]
  %v81 = vld [vmem:[%s0 + $0x218] sm:$0xff]
  %v82 = vld [vmem:[%s0 + $0x220] sm:$0xff]
  %v83 = vld [vmem:[%s0 + $0x228] sm:$0xff]
  %v84 = vld [vmem:[%s0 + $0x230] sm:$0xff]
  %v85 = vld [vmem:[%s0 + $0x238] sm:$0xff]
  %v86 = vld [vmem:[%s0 + $0x240] sm:$0xff]
  %v87 = vld [vmem:[%s0 + $0x248] sm:$0xff]
  %v88 = vld [vmem:[%s0 + $0x250] sm:$0xff]
  %v89 = vld [vmem:[%s0 + $0x258] sm:$0xff]
  %v90 = vld [vmem:[%s0 + $0x260] sm:$0xff]
  %v91 = vld [vmem:[%s0 + $0x268] sm:$0xff]
  %v92 = vld [vmem:[%s0 + $0x270] sm:$0xff]
  %v93 = vld [vmem:[%s0 + $0x278] sm:$0xff]
  %v94 = vld [vmem:[%s0 + $0x280] sm:$0xff]
  %v95 = vld [vmem:[%s0 + $0x288] sm:$0xff]
  %v96 = vld [vmem:[%s0 + $0x290] sm:$0xff]
  %v97 = vld [vmem:[%s0 + $0x298] sm:$0xff]
  %v98 = vld [vmem:[%s0 + $0x2a0] sm:$0xff]
  %v99 = vld [vmem:[%s0 + $0x2a8] sm:$0xff]
  %v100 = vld [vmem:[%s0 + $0x2b0] sm:$0xff]
  %v101 = vld [vmem:[%s0 + $0x2b8] sm:$0xff]
  %v102 = vld [vmem:[%s0 + $0x2c0] sm:$0xff]
  %v103 = vld [vmem:[%s0 + $0x2c8] sm:$0xff]
  %v104 = vld [vmem:[%s0 + $0x2d0] sm:$0xff]
  %v105 = vld [vmem:[%s0 + $0x2d8] sm:$0xff]
  %v106 = vld [vmem:[%s0 + $0x2e0] sm:$0xff]
  %v107 = vld [vmem:[%s0 + $0x2e8] sm:$0xff]
  %v108 = vld [vmem:[%s0 + $0x2f0] sm:$0xff]
  %v109 = vld [vmem:[%s0 + $0x2f8] sm:$0xff]
  %v110 = vld [vmem:[%s0 + $0x300] sm:$0xff]
  %v111 = vld [vmem:[%s0 + $0x308] sm:$0xff]
  %v112 = vld [vmem:[%s0 + $0x310] sm:$0xff]
  %v113 = vld [vmem:[%s0 + $0x318] sm:$0xff]
  %v114 = vld [vmem:[%s0 + $0x320] sm:$0xff]
  %v115 = vld [vmem:[%s0 + $0x328] sm:$0xff]
  %v116 = vld [vmem:[%s0 + $0x330] sm:$0xff]
  %v117 = vld [vmem:[%s0 + $0x338] sm:$0xff]
  %v118 = vld [vmem:[%s0 + $0x340] sm:$0xff]
  %v119 = vld [vmem:[%s0 + $0x348] sm:$0xff]
  %v120 = vld [vmem:[%s0 + $0x350] sm:$0xff]
  %v121 = vld [vmem:[%s0 + $0x358] sm:$0xff]
  %v122 = vld [vmem:[%s0 + $0x360] sm:$0xff]
  %v123 = vld [vmem:[%s0 + $0x368] sm:$0xff]
  %v124 = vld [vmem:[%s0 + $0x370] sm:$0xff]
  %v125 = vld [vmem:[%s0 + $0x378] sm:$0xff]
  %v126 = vld [vmem:[%s0 + $0x380] sm:$0xff]
  %v127 = vld [vmem:[%s0 + $0x388] sm:$0xff]
  %v128 = vld [vmem:[%s0 + $0x390] sm:$0xff]
  %v129 = vld [vmem:[%s0 + $0x398] sm:$0xff]
  %v130 = vld [vmem:[%s0 + $0x3a0] sm:$0xff]
  %v131 = vld [vmem:[%s0 + $0x3a8] sm:$0xff]
  %v132 = vld [vmem:[%s0 + $0x3b0] sm:$0xff]
  %v133 = vld [vmem:[%s0 + $0x3b8] sm:$0xff]
  %v134 = vld [vmem:[%s0 + $0x3c0] sm:$0xff]
  %v135 = vld [vmem:[%s0 + $0x3c8] sm:$0xff]
  %v136 = vld [vmem:[%s0 + $0x3d0] sm:$0xff]
  %v137 = vld [vmem:[%s0 + $0x3d8] sm:$0xff]
  %v138 = vld [vmem:[%s0 + $0x3e0] sm:$0xff]
  %v139 = vld [vmem:[%s0 + $0x3e8] sm:$0xff]
  %v140 = vld [vmem:[%s0 + $0x3f0] sm:$0xff]
  %v141 = vld [vmem:[%s0 + $0x3f8] sm:$0xff]
  %v142 = vld [vmem:[%s0 + $0x400] sm:$0xff]
  %v143 = vld [vmem:[%s0 + $0x408] sm:$0xff]
  %v144 = vld [vmem:[%s0 + $0x410] sm:$0xff]
  %v145 = vld [vmem:[%s0 + $0x418] sm:$0xff]
  %v146 = vld [vmem:[%s0 + $0x420] sm:$0xff]
  %v147 = vld [vmem:[%s0 + $0x428] sm:$0xff]
  %v148 = vld [vmem:[%s0 + $0x430] sm:$0xff]
  %v149 = vld [vmem:[%s0 + $0x438] sm:$0xff]
  %v150 = vld [vmem:[%s0 + $0x440] sm:$0xff]
  %v151 = vld [vmem:[%s0 + $0x448] sm:$0xff]
  %v152 = vld [vmem:[%s0 + $0x450] sm:$0xff]
  %v153 = vld [vmem:[%s0 + $0x458] sm:$0xff]
  %v154 = vld [vmem:[%s0 + $0x460] sm:$0xff]
  %v155 = vld [vmem:[%s0 + $0x468] sm:$0xff]
  %v156 = vld [vmem:[%s0 + $0x470] sm:$0xff]
  %v157 = vld [vmem:[%s0 + $0x478] sm:$0xff]
  %v158 = vld [vmem:[%s0 + $0x480] sm:$0xff]
  %v159 = vld [vmem:[%s0 + $0x488] sm:$0xff]
  %v160 = vld [vmem:[%s0 + $0x490] sm:$0xff]
  %v161 = vld [vmem:[%s0 + $0x498] sm:$0xff]
  %v162 = vld [vmem:[%s0 + $0x4a0] sm:$0xff]
  %v163 = vld [vmem:[%s0 + $0x4a8] sm:$0xff]
  %v164 = vld [vmem:[%s0 + $0x4b0] sm:$0xff]
  %v165 = vld [vmem:[%s0 + $0x4b8] sm:$0xff]
  %v166 = vld [vmem:[%s0 + $0x4c0] sm:$0xff]
  %v167 = vld [vmem:[%s0 + $0x4c8] sm:$0xff]
  %v168 = vld [vmem:[%s0 + $0x4d0] sm:$0xff]
  %v169 = vld [vmem:[%s0 + $0x4d8] sm:$0xff]
  %v170 = vld [vmem:[%s0 + $0x4e0] sm:$0xff]
  %v171 = vld [vmem:[%s0 + $0x4e8] sm:$0xff]
  %v172 = vld [vmem:[%s0 + $0x4f0] sm:$0xff]
  %v173 = vld [vmem:[%s0 + $0x4f8] sm:$0xff]
  %v174 = vld [vmem:[%s0 + $0x500] sm:$0xff]
  %v175 = vld [vmem:[%s0 + $0x508] sm:$0xff]
  %v176 = vld [vmem:[%s0 + $0x510] sm:$0xff]
  %v177 = vld [vmem:[%s0 + $0x518] sm:$0xff]
  %v178 = vld [vmem:[%s0 + $0x520] sm:$0xff]
  %v179 = vld [vmem:[%s0 + $0x528] sm:$0xff]
  %v180 = vld [vmem:[%s0 + $0x530] sm:$0xff]
  %v181 = vld [vmem:[%s0 + $0x538] sm:$0xff]
  %v182 = vld [vmem:[%s0 + $0x540] sm:$0xff]
  %v183 = vld [vmem:[%s0 + $0x548] sm:$0xff]
  %v184 = vld [vmem:[%s0 + $0x550] sm:$0xff]
  %v185 = vld [vmem:[%s0 + $0x558] sm:$0xff]
  %v186 = vld [vmem:[%s0 + $0x560] sm:$0xff]
  %v187 = vld [vmem:[%s0 + $0x568] sm:$0xff]
  %v188 = vld [vmem:[%s0 + $0x570] sm:$0xff]
  %v189 = vld [vmem:[%s0 + $0x578] sm:$0xff]
  %v190 = vld [vmem:[%s0 + $0x580] sm:$0xff]
  %v191 = vld [vmem:[%s0 + $0x588] sm:$0xff]
  %v192 = vld [vmem:[%s0 + $0x590] sm:$0xff]
  %v193 = vld [vmem:[%s0 + $0x598] sm:$0xff]
  %v194 = vld [vmem:[%s0 + $0x5a0] sm:$0xff]
  %v195 = vld [vmem:[%s0 + $0x5a8] sm:$0xff]
  %v196 = vld [vmem:[%s0 + $0x5b0] sm:$0xff]
  %v197 = vld [vmem:[%s0 + $0x5b8] sm:$0xff]
  %v198 = vld [vmem:[%s0 + $0x5c0] sm:$0xff]
  %v199 = vld [vmem:[%s0 + $0x5c8] sm:$0xff]
  %v200 = vld [vmem:[%s0 + $0x5d0] sm:$0xff]
  %v201 = vld [vmem:[%s0 + $0x5d8] sm:$0xff]
  %v202 = vld [vmem:[%s0 + $0x5e0] sm:$0xff]
  %v203 = vld [vmem:[%s0 + $0x5e8] sm:$0xff]
  %v204 = vld [vmem:[%s0 + $0x5f0] sm:$0xff]
  %v205 = vld [vmem:[%s0 + $0x5f8] sm:$0xff]
  %v206 = vld [vmem:[%s0 + $0x600] sm:$0xff]
  %v207 = vld [vmem:[%s0 + $0x608] sm:$0xff]
  %v208 = vld [vmem:[%s0 + $0x610] sm:$0xff]
  %v209 = vld [vmem:[%s0 + $0x618] sm:$0xff]
  %v210 = vld [vmem:[%s0 + $0x620] sm:$0xff]
  %v211 = vld [vmem:[%s0 + $0x628] sm:$0xff]
  %v212 = vld [vmem:[%s0 + $0x630] sm:$0xff]
  %v213 = vld [vmem:[%s0 + $0x638] sm:$0xff]
  %v214 = vld [vmem:[%s0 + $0x640] sm:$0xff]
  %v215 = vld [vmem:[%s0 + $0x648] sm:$0xff]
  %v216 = vld [vmem:[%s0 + $0x650] sm:$0xff]
  %v217 = vld [vmem:[%s0 + $0x658] sm:$0xff]
  %v218 = vld [vmem:[%s0 + $0x660] sm:$0xff]
  %v219 = vld [vmem:[%s0 + $0x668] sm:$0xff]
  %v220 = vld [vmem:[%s0 + $0x670] sm:$0xff]
  %v221 = vld [vmem:[%s0 + $0x678] sm:$0xff]
  %v222 = vld [vmem:[%s0 + $0x680] sm:$0xff]
  %v223 = vld [vmem:[%s0 + $0x688] sm:$0xff]
  %v224 = vld [vmem:[%s0 + $0x690] sm:$0xff]
  %v225 = vld [vmem:[%s0 + $0x698] sm:$0xff]
  %v226 = vld [vmem:[%s0 + $0x6a0] sm:$0xff]
  %v227 = vld [vmem:[%s0 + $0x6a8] sm:$0xff]
  %v228 = vld [vmem:[%s0 + $0x6b0] sm:$0xff]
  %v229 = vld [vmem:[%s0 + $0x6b8] sm:$0xff]
  %v230 = vld [vmem:[%s0 + $0x6c0] sm:$0xff]
  %v231 = vld [vmem:[%s0 + $0x6c8] sm:$0xff]
  %v232 = vld [vmem:[%s0 + $0x6d0] sm:$0xff]
  %v233 = vld [vmem:[%s0 + $0x6d8] sm:$0xff]
  %v234 = vld [vmem:[%s0 + $0x6e0] sm:$0xff]
  %v235 = vld [vmem:[%s0 + $0x6e8] sm:$0xff]
  %v236 = vld [vmem:[%s0 + $0x6f0] sm:$0xff]
  %v237 = vld [vmem:[%s0 + $0x6f8] sm:$0xff]
  %v238 = vld [vmem:[%s0 + $0x700] sm:$0xff]
  %v239 = vld [vmem:[%s0 + $0x708] sm:$0xff]
  %v240 = vld [vmem:[%s0 + $0x710] sm:$0xff]
  %v241 = vld [vmem:[%s0 + $0x718] sm:$0xff]
  %v242 = vld [vmem:[%s0 + $0x720] sm:$0xff]
  %v243 = vld [vmem:[%s0 + $0x728] sm:$0xff]
  %v244 = vld [vmem:[%s0 + $0x730] sm:$0xff]
  %v245 = vld [vmem:[%s0 + $0x738] sm:$0xff]
  %v246 = vld [vmem:[%s0 + $0x740] sm:$0xff]
  %v247 = vld [vmem:[%s0 + $0x748] sm:$0xff]
  %v248 = vld [vmem:[%s0 + $0x750] sm:$0xff]
  %v249 = vld [vmem:[%s0 + $0x758] sm:$0xff]
  %v250 = vld [vmem:[%s0 + $0x760] sm:$0xff]
  %v251 = vld [vmem:[%s0 + $0x768] sm:$0xff]
  %v252 = vld [vmem:[%s0 + $0x770] sm:$0xff]
  %v253 = vld [vmem:[%s0 + $0x778] sm:$0xff]
  %v254 = vld [vmem:[%s0 + $0x780] sm:$0xff]
  %v255 = vld [vmem:[%s0 + $0x788] sm:$0xff]
  %v256 = vld [vmem:[%s0 + $0x790] sm:$0xff]
  %v257 = vld [vmem:[%s0 + $0x798] sm:$0xff]
  %v258 = vld [vmem:[%s0 + $0x7a0] sm:$0xff]
  %v259 = vld [vmem:[%s0 + $0x7a8] sm:$0xff]
  %v260 = vld [vmem:[%s0 + $0x7b0] sm:$0xff]
  %v261 = vld [vmem:[%s0 + $0x7b8] sm:$0xff]
  %v262 = vld [vmem:[%s0 + $0x7c0] sm:$0xff]
  %v263 = vld [vmem:[%s0 + $0x7c8] sm:$0xff]
  %v264 = vld [vmem:[%s0 + $0x7d0] sm:$0xff]
  %v265 = vld [vmem:[%s0 + $0x7d8] sm:$0xff]
  %v266 = vld [vmem:[%s0 + $0x7e0] sm:$0xff]
  %v267 = vld [vmem:[%s0 + $0x7e8] sm:$0xff]
  %v268 = vld [vmem:[%s0 + $0x7f0] sm:$0xff]
  %v269 = vld [vmem:[%s0 + $0x7f8] sm:$0xff]
  %v270 = vld [vmem:[%s0 + $0x800] sm:$0xff]
  %v271 = vld [vmem:[%s0 + $0x808] sm:$0xff]
  %v272 = vld [vmem:[%s0 + $0x810] sm:$0xff]
  %v273 = vld [vmem:[%s0 + $0x818] sm:$0xff]
  %v274 = vld [vmem:[%s0 + $0x820] sm:$0xff]
  %v275 = vld [vmem:[%s0 + $0x828] sm:$0xff]
  %v276 = vld [vmem:[%s0 + $0x830] sm:$0xff]
  %v277 = vld [vmem:[%s0 + $0x838] sm:$0xff]
  %v278 = vld [vmem:[%s0 + $0x840] sm:$0xff]
  %v279 = vld [vmem:[%s0 + $0x848] sm:$0xff]
  %v280 = vld [vmem:[%s0 + $0x850] sm:$0xff]
  %v281 = vld [vmem:[%s0 + $0x858] sm:$0xff]
  %v282 = vld [vmem:[%s0 + $0x860] sm:$0xff]
  %v283 = vld [vmem:[%s0 + $0x868] sm:$0xff]
  %v284 = vld [vmem:[%s0 + $0x870] sm:$0xff]
  %v285 = vld [vmem:[%s0 + $0x878] sm:$0xff]
  %v286 = vld [vmem:[%s0 + $0x880] sm:$0xff]
  %v287 = vld [vmem:[%s0 + $0x888] sm:$0xff]
  %v288 = vld [vmem:[%s0 + $0x890] sm:$0xff]
  %v289 = vld [vmem:[%s0 + $0x898] sm:$0xff]
  %v290 = vld [vmem:[%s0 + $0x8a0] sm:$0xff]
  %v291 = vld [vmem:[%s0 + $0x8a8] sm:$0xff]
  %v292 = vld [vmem:[%s0 + $0x8b0] sm:$0xff]
  %v293 = vld [vmem:[%s0 + $0x8b8] sm:$0xff]
  %v294 = vld [vmem:[%s0 + $0x8c0] sm:$0xff]
  %v295 = vld [vmem:[%s0 + $0x8c8] sm:$0xff]
  %v296 = vld [vmem:[%s0 + $0x8d0] sm:$0xff]
  %v297 = vld [vmem:[%s0 + $0x8d8] sm:$0xff]
  %v298 = vld [vmem:[%s0 + $0x8e0] sm:$0xff]
  %v299 = vld [vmem:[%s0 + $0x8e8] sm:$0xff]
  %v300 = vld [vmem:[%s0 + $0x8f0] sm:$0xff]
  %v301 = vld [vmem:[%s0 + $0x8f8] sm:$0xff]
  %v302 = vld [vmem:[%s0 + $0x900] sm:$0xff]
  %v303 = vld [vmem:[%s0 + $0x908] sm:$0xff]
  %v304 = vld [vmem:[%s0 + $0x910] sm:$0xff]
  %v305 = vld [vmem:[%s0 + $0x918] sm:$0xff]
  %v306 = vld [vmem:[%s0 + $0x920] sm:$0xff]
  %v307 = vld [vmem:[%s0 + $0x928] sm:$0xff]
  %v308 = vld [vmem:[%s0 + $0x930] sm:$0xff]
  %v309 = vld [vmem:[%s0 + $0x938] sm:$0xff]
  %v310 = vld [vmem:[%s0 + $0x940] sm:$0xff]
  %v311 = vld [vmem:[%s0 + $0x948] sm:$0xff]
  %v312 = vld [vmem:[%s0 + $0x950] sm:$0xff]
  %v313 = vld [vmem:[%s0 + $0x958] sm:$0xff]
  %v314 = vld [vmem:[%s0 + $0x960] sm:$0xff]
  %v315 = vld [vmem:[%s0 + $0x968] sm:$0xff]
  %v316 = vld [vmem:[%s0 + $0x970] sm:$0xff]
  %v317 = vld [vmem:[%s0 + $0x978] sm:$0xff]
  %v318 = vld [vmem:[%s0 + $0x980] sm:$0xff]
  %v319 = vld [vmem:[%s0 + $0x988] sm:$0xff]
  %v320 = vld [vmem:[%s0 + $0x990] sm:$0xff]
  %v321 = vld [vmem:[%s0 + $0x998] sm:$0xff]
  %v322 = vld [vmem:[%s0 + $0x9a0] sm:$0xff]
  %v323 = vld [vmem:[%s0 + $0x9a8] sm:$0xff]
  %v324 = vld [vmem:[%s0 + $0x9b0] sm:$0xff]
  %v325 = vld [vmem:[%s0 + $0x9b8] sm:$0xff]
  %v326 = vld [vmem:[%s0 + $0x9c0] sm:$0xff]
  %v327 = vld [vmem:[%s0 + $0x9c8] sm:$0xff]
  %v328 = vld [vmem:[%s0 + $0x9d0] sm:$0xff]
  %v329 = vld [vmem:[%s0 + $0x9d8] sm:$0xff]
  %v330 = vld [vmem:[%s0 + $0x9e0] sm:$0xff]
  %v331 = vld [vmem:[%s0 + $0x9e8] sm:$0xff]
  %v332 = vld [vmem:[%s0 + $0x9f0] sm:$0xff]
  %v333 = vld [vmem:[%s0 + $0x9f8] sm:$0xff]
  %v334 = vld [vmem:[%s0 + $0xa00] sm:$0xff]
  %v335 = vld [vmem:[%s0 + $0xa08] sm:$0xff]
  %v336 = vld [vmem:[%s0 + $0xa10] sm:$0xff]
  %v337 = vld [vmem:[%s0 + $0xa18] sm:$0xff]
  %v338 = vld [vmem:[%s0 + $0xa20] sm:$0xff]
  %v339 = vld [vmem:[%s0 + $0xa28] sm:$0xff]
  %v340 = vld [vmem:[%s0 + $0xa30] sm:$0xff]
  %v341 = vld [vmem:[%s0 + $0xa38] sm:$0xff]
  %v342 = vld [vmem:[%s0 + $0xa40] sm:$0xff]
  %v343 = vld [vmem:[%s0 + $0xa48] sm:$0xff]
  %v344 = vld [vmem:[%s0 + $0xa50] sm:$0xff]
  %v345 = vld [vmem:[%s0 + $0xa58] sm:$0xff]
  %v346 = vld [vmem:[%s0 + $0xa60] sm:$0xff]
  %v347 = vld [vmem:[%s0 + $0xa68] sm:$0xff]
  %v348 = vld [vmem:[%s0 + $0xa70] sm:$0xff]
  %v349 = vld [vmem:[%s0 + $0xa78] sm:$0xff]
  %v350 = vld [vmem:[%s0 + $0xa80] sm:$0xff]
  %v351 = vld [vmem:[%s0 + $0xa88] sm:$0xff]
  %v352 = vld [vmem:[%s0 + $0xa90] sm:$0xff]
  %v353 = vld [vmem:[%s0 + $0xa98] sm:$0xff]
  %v354 = vld [vmem:[%s0 + $0xaa0] sm:$0xff]
  %v355 = vld [vmem:[%s0 + $0xaa8] sm:$0xff]
  %v356 = vld [vmem:[%s0 + $0xab0] sm:$0xff]
  %v357 = vld [vmem:[%s0 + $0xab8] sm:$0xff]
  %v358 = vld [vmem:[%s0 + $0xac0] sm:$0xff]
  %v359 = vld [vmem:[%s0 + $0xac8] sm:$0xff]
  %v360 = vld [vmem:[%s0 + $0xad0] sm:$0xff]
  %v361 = vld [vmem:[%s0 + $0xad8] sm:$0xff]
  %v362 = vld [vmem:[%s0 + $0xae0] sm:$0xff]
  %v363 = vld [vmem:[%s0 + $0xae8] sm:$0xff]
  %v364 = vld [vmem:[%s0 + $0xaf0] sm:$0xff]
  %v365 = vld [vmem:[%s0 + $0xaf8] sm:$0xff]
  %v366 = vld [vmem:[%s0 + $0xb00] sm:$0xff]
  %v367 = vld [vmem:[%s0 + $0xb08] sm:$0xff]
  %v368 = vld [vmem:[%s0 + $0xb10] sm:$0xff]
  %v369 = vld [vmem:[%s0 + $0xb18] sm:$0xff]
  %v370 = vld [vmem:[%s0 + $0xb20] sm:$0xff]
  %v371 = vld [vmem:[%s0 + $0xb28] sm:$0xff]
  %v372 = vld [vmem:[%s0 + $0xb30] sm:$0xff]
  %v373 = vld [vmem:[%s0 + $0xb38] sm:$0xff]
  %v374 = vld [vmem:[%s0 + $0xb40] sm:$0xff]
  %v375 = vld [vmem:[%s0 + $0xb48] sm:$0xff]
  %v376 = vld [vmem:[%s0 + $0xb50] sm:$0xff]
  %v377 = vld [vmem:[%s0 + $0xb58] sm:$0xff]
  %v378 = vld [vmem:[%s0 + $0xb60] sm:$0xff]
  %v379 = vld [vmem:[%s0 + $0xb68] sm:$0xff]
  %v380 = vld [vmem:[%s0 + $0xb70] sm:$0xff]
  %v381 = vld [vmem:[%s0 + $0xb78] sm:$0xff]
  %v382 = vld [vmem:[%s0 + $0xb80] sm:$0xff]
  %v383 = vld [vmem:[%s0 + $0xb88] sm:$0xff]
  %v384 = vld [vmem:[%s0 + $0xb90] sm:$0xff]
  %v385 = vld [vmem:[%s0 + $0xb98] sm:$0xff]
  %v386 = vld [vmem:[%s0 + $0xba0] sm:$0xff]
  %v387 = vld [vmem:[%s0 + $0xba8] sm:$0xff]
  %v388 = vld [vmem:[%s0 + $0xbb0] sm:$0xff]
  %v389 = vld [vmem:[%s0 + $0xbb8] sm:$0xff]
  %v390 = vld [vmem:[%s0 + $0xbc0] sm:$0xff]
  %v391 = vld [vmem:[%s0 + $0xbc8] sm:$0xff]
  %v392 = vld [vmem:[%s0 + $0xbd0] sm:$0xff]
  %v393 = vld [vmem:[%s0 + $0xbd8] sm:$0xff]
  %v394 = vld [vmem:[%s0 + $0xbe0] sm:$0xff]
  %v395 = vld [vmem:[%s0 + $0xbe8] sm:$0xff]
  %v396 = vld [vmem:[%s0 + $0xbf0] sm:$0xff]
  %v397 = vld [vmem:[%s0 + $0xbf8] sm:$0xff]
  %v398 = vld [vmem:[%s0 + $0xc00] sm:$0xff]
  %v399 = vld [vmem:[%s0 + $0xc08] sm:$0xff]
  %v400 = vld [vmem:[%s0 + $0xc10] sm:$0xff]
  %v401 = vld [vmem:[%s0 + $0xc18] sm:$0xff]
  %v402 = vld [vmem:[%s0 + $0xc20] sm:$0xff]
  %v403 = vld [vmem:[%s0 + $0xc28] sm:$0xff]
  %v404 = vld [vmem:[%s0 + $0xc30] sm:$0xff]
  %v405 = vld [vmem:[%s0 + $0xc38] sm:$0xff]
  %v406 = vld [vmem:[%s0 + $0xc40] sm:$0xff]
  %v407 = vld [vmem:[%s0 + $0xc48] sm:$0xff]
  %v408 = vld [vmem:[%s0 + $0xc50] sm:$0xff]
  %v409 = vld [vmem:[%s0 + $0xc58] sm:$0xff]
  %v410 = vld [vmem:[%s0 + $0xc60] sm:$0xff]
  %v411 = vld [vmem:[%s0 + $0xc68] sm:$0xff]
  %v412 = vld [vmem:[%s0 + $0xc70] sm:$0xff]
  %v413 = vld [vmem:[%s0 + $0xc78] sm:$0xff]
  %v414 = vld [vmem:[%s0 + $0xc80] sm:$0xff]
  %v415 = vld [vmem:[%s0 + $0xc88] sm:$0xff]
  %v416 = vld [vmem:[%s0 + $0xc90] sm:$0xff]
  %v417 = vld [vmem:[%s0 + $0xc98] sm:$0xff]
  %v418 = vld [vmem:[%s0 + $0xca0] sm:$0xff]
  %v419 = vld [vmem:[%s0 + $0xca8] sm:$0xff]
  %v420 = vld [vmem:[%s0 + $0xcb0] sm:$0xff]
  %v421 = vld [vmem:[%s0 + $0xcb8] sm:$0xff]
  %v422 = vld [vmem:[%s0 + $0xcc0] sm:$0xff]
  %v423 = vld [vmem:[%s0 + $0xcc8] sm:$0xff]
  %v424 = vld [vmem:[%s0 + $0xcd0] sm:$0xff]
  %v425 = vld [vmem:[%s0 + $0xcd8] sm:$0xff]
  %v426 = vld [vmem:[%s0 + $0xce0] sm:$0xff]
  %v427 = vld [vmem:[%s0 + $0xce8] sm:$0xff]
  %v428 = vld [vmem:[%s0 + $0xcf0] sm:$0xff]
  %v429 = vld [vmem:[%s0 + $0xcf8] sm:$0xff]
  %v430 = vld [vmem:[%s0 + $0xd00] sm:$0xff]
  %v431 = vld [vmem:[%s0 + $0xd08] sm:$0xff]
  %v432 = vld [vmem:[%s0 + $0xd10] sm:$0xff]
  %v433 = vld [vmem:[%s0 + $0xd18] sm:$0xff]
  %v434 = vld [vmem:[%s0 + $0xd20] sm:$0xff]
  %v435 = vld [vmem:[%s0 + $0xd28] sm:$0xff]
  %v436 = vld [vmem:[%s0 + $0xd30] sm:$0xff]
  %v437 = vld [vmem:[%s0 + $0xd38] sm:$0xff]
  %v438 = vld [vmem:[%s0 + $0xd40] sm:$0xff]
  %v439 = vld [vmem:[%s0 + $0xd48] sm:$0xff]
  %v440 = vld [vmem:[%s0 + $0xd50] sm:$0xff]
  %v441 = vld [vmem:[%s0 + $0xd58] sm:$0xff]
  %v442 = vld [vmem:[%s0 + $0xd60] sm:$0xff]
  %v443 = vld [vmem:[%s0 + $0xd68] sm:$0xff]
  %v444 = vld [vmem:[%s0 + $0xd70] sm:$0xff]
  %v445 = vld [vmem:[%s0 + $0xd78] sm:$0xff]
  %v446 = vld [vmem:[%s0 + $0xd80] sm:$0xff]
  %v447 = vld [vmem:[%s0 + $0xd88] sm:$0xff]
  %v448 = vld [vmem:[%s0 + $0xd90] sm:$0xff]
  %v449 = vld [vmem:[%s0 + $0xd98] sm:$0xff]
  %v450 = vld [vmem:[%s0 + $0xda0] sm:$0xff]
  %v451 = vld [vmem:[%s0 + $0xda8] sm:$0xff]
  %v452 = vld [vmem:[%s0 + $0xdb0] sm:$0xff]
  %v453 = vld [vmem:[%s0 + $0xdb8] sm:$0xff]
  %v454 = vld [vmem:[%s0 + $0xdc0] sm:$0xff]
  %v455 = vld [vmem:[%s0 + $0xdc8] sm:$0xff]
  %v456 = vld [vmem:[%s0 + $0xdd0] sm:$0xff]
  %v457 = vld [vmem:[%s0 + $0xdd8] sm:$0xff]
  %v458 = vld [vmem:[%s0 + $0xde0] sm:$0xff]
  %v459 = vld [vmem:[%s0 + $0xde8] sm:$0xff]
  %v460 = vld [vmem:[%s0 + $0xdf0] sm:$0xff]
  %v461 = vld [vmem:[%s0 + $0xdf8] sm:$0xff]
  %v462 = vld [vmem:[%s0 + $0xe00] sm:$0xff]
  %v463 = vld [vmem:[%s0 + $0xe08] sm:$0xff]
  %v464 = vld [vmem:[%s0 + $0xe10] sm:$0xff]
  %v465 = vld [vmem:[%s0 + $0xe18] sm:$0xff]
  %v466 = vld [vmem:[%s0 + $0xe20] sm:$0xff]
  %v467 = vld [vmem:[%s0 + $0xe28] sm:$0xff]
  %v468 = vld [vmem:[%s0 + $0xe30] sm:$0xff]
  %v469 = vld [vmem:[%s0 + $0xe38] sm:$0xff]
  %v470 = vld [vmem:[%s0 + $0xe40] sm:$0xff]
  %v471 = vld [vmem:[%s0 + $0xe48] sm:$0xff]
  %v472 = vld [vmem:[%s0 + $0xe50] sm:$0xff]
  %v473 = vld [vmem:[%s0 + $0xe58] sm:$0xff]
  %v474 = vld [vmem:[%s0 + $0xe60] sm:$0xff]
  %v475 = vld [vmem:[%s0 + $0xe68] sm:$0xff]
  %v476 = vld [vmem:[%s0 + $0xe70] sm:$0xff]
  %v477 = vld [vmem:[%s0 + $0xe78] sm:$0xff]
  %v478 = vld [vmem:[%s0 + $0xe80] sm:$0xff]
  %v479 = vld [vmem:[%s0 + $0xe88] sm:$0xff]
  %v480 = vld [vmem:[%s0 + $0xe90] sm:$0xff]
  %v481 = vld [vmem:[%s0 + $0xe98] sm:$0xff]
  %v482 = vld [vmem:[%s0 + $0xea0] sm:$0xff]
  %v483 = vld [vmem:[%s0 + $0xea8] sm:$0xff]
  %v484 = vld [vmem:[%s0 + $0xeb0] sm:$0xff]
  %v485 = vld [vmem:[%s0 + $0xeb8] sm:$0xff]
  %v486 = vld [vmem:[%s0 + $0xec0] sm:$0xff]
  %v487 = vld [vmem:[%s0 + $0xec8] sm:$0xff]
  %v488 = vld [vmem:[%s0 + $0xed0] sm:$0xff]
  %v489 = vld [vmem:[%s0 + $0xed8] sm:$0xff]
  %v490 = vld [vmem:[%s0 + $0xee0] sm:$0xff]
  %v491 = vld [vmem:[%s0 + $0xee8] sm:$0xff]
  %v492 = vld [vmem:[%s0 + $0xef0] sm:$0xff]
  %v493 = vld [vmem:[%s0 + $0xef8] sm:$0xff]
  %v494 = vld [vmem:[%s0 + $0xf00] sm:$0xff]
  %v495 = vld [vmem:[%s0 + $0xf08] sm:$0xff]
  %v496 = vld [vmem:[%s0 + $0xf10] sm:$0xff]
  %v497 = vld [vmem:[%s0 + $0xf18] sm:$0xff]
  %v498 = vld [vmem:[%s0 + $0xf20] sm:$0xff]
  %v499 = vld [vmem:[%s0 + $0xf28] sm:$0xff]
  %v500 = vld [vmem:[%s0 + $0xf30] sm:$0xff]
  %v501 = vld [vmem:[%s0 + $0xf38] sm:$0xff]
  %v502 = vld [vmem:[%s0 + $0xf40] sm:$0xff]
  %v503 = vld [vmem:[%s0 + $0xf48] sm:$0xff]
  %v504 = vld [vmem:[%s0 + $0xf50] sm:$0xff]
  %v505 = vld [vmem:[%s0 + $0xf58] sm:$0xff]
  %v506 = vld [vmem:[%s0 + $0xf60] sm:$0xff]
  %v507 = vld [vmem:[%s0 + $0xf68] sm:$0xff]
  %v508 = vld [vmem:[%s0 + $0xf70] sm:$0xff]
  %v509 = vld [vmem:[%s0 + $0xf78] sm:$0xff]
  %v510 = vld [vmem:[%s0 + $0xf80] sm:$0xff]
  %v511 = vld [vmem:[%s0 + $0xf88] sm:$0xff]
  %v512 = vld [vmem:[%s0 + $0xf90] sm:$0xff]
  %v513 = vld [vmem:[%s0 + $0xf98] sm:$0xff]
  %v514 = vld [vmem:[%s0 + $0xfa0] sm:$0xff]
  %v515 = vld [vmem:[%s0 + $0xfa8] sm:$0xff]
  %v516 = vld [vmem:[%s0 + $0xfb0] sm:$0xff]
  %v517 = vld [vmem:[%s0 + $0xfb8] sm:$0xff]
  %v518 = vld [vmem:[%s0 + $0xfc0] sm:$0xff]
  %v519 = vld [vmem:[%s0 + $0xfc8] sm:$0xff]
  %v520 = vld [vmem:[%s0 + $0xfd0] sm:$0xff]
  %v521 = vld [vmem:[%s0 + $0xfd8] sm:$0xff]
  %v522 = vld [vmem:[%s0 + $0xfe0] sm:$0xff]
  %v523 = vld [vmem:[%s0 + $0xfe8] sm:$0xff]
  %v524 = vld [vmem:[%s0 + $0xff0] sm:$0xff]
  %v525 = vld [vmem:[%s0 + $0xff8] sm:$0xff]
  %v526 = vld [vmem:[%s1] sm:$0x1f]
  %v527 = vld [vmem:[%s2] sm:$0x1]
  %v529 = vlaneseq
  %v530 = vshrl.u32 %v529, 7
  %v531 = vsub.s32 0, %v530
  %v532 = vrot.slane %v527, %v531
  %vm534 = vcmask 80896
  %v536 = vsel %vm534, %v14, 0
  %v539 = vsel %vm534, %v15, 0
  %v542 = vsel %vm534, %v16, 0
  %v545 = vsel %vm534, %v17, 0
  %v548 = vsel %vm534, %v18, 0
  %v551 = vsel %vm534, %v19, 0
  %v554 = vsel %vm534, %v20, 0
  %v557 = vsel %vm534, %v21, 0
  %v560 = vsel %vm534, %v22, 0
  %v563 = vsel %vm534, %v23, 0
  %v566 = vsel %vm534, %v24, 0
  %v569 = vsel %vm534, %v25, 0
  %v572 = vsel %vm534, %v26, 0
  %v575 = vsel %vm534, %v27, 0
  %v578 = vsel %vm534, %v28, 0
  %v581 = vsel %vm534, %v29, 0
  %v584 = vsel %vm534, %v30, 0
  %v587 = vsel %vm534, %v31, 0
  %v590 = vsel %vm534, %v32, 0
  %v593 = vsel %vm534, %v33, 0
  %v596 = vsel %vm534, %v34, 0
  %v599 = vsel %vm534, %v35, 0
  %v602 = vsel %vm534, %v36, 0
  %v605 = vsel %vm534, %v37, 0
  %v608 = vsel %vm534, %v38, 0
  %v611 = vsel %vm534, %v39, 0
  %v614 = vsel %vm534, %v40, 0
  %v617 = vsel %vm534, %v41, 0
  %v620 = vsel %vm534, %v42, 0
  %v623 = vsel %vm534, %v43, 0
  %v626 = vsel %vm534, %v44, 0
  %v629 = vsel %vm534, %v45, 0
  %v632 = vsel %vm534, %v46, 0
  %v635 = vsel %vm534, %v47, 0
  %v638 = vsel %vm534, %v48, 0
  %v641 = vsel %vm534, %v49, 0
  %v644 = vsel %vm534, %v50, 0
  %v647 = vsel %vm534, %v51, 0
  %v650 = vsel %vm534, %v52, 0
  %v653 = vsel %vm534, %v53, 0
  %v656 = vsel %vm534, %v54, 0
  %v659 = vsel %vm534, %v55, 0
  %v662 = vsel %vm534, %v56, 0
  %v665 = vsel %vm534, %v57, 0
  %v668 = vsel %vm534, %v58, 0
  %v671 = vsel %vm534, %v59, 0
  %v674 = vsel %vm534, %v60, 0
  %v677 = vsel %vm534, %v61, 0
  %v680 = vsel %vm534, %v62, 0
  %v683 = vsel %vm534, %v63, 0
  %v686 = vsel %vm534, %v64, 0
  %v689 = vsel %vm534, %v65, 0
  %v692 = vsel %vm534, %v66, 0
  %v695 = vsel %vm534, %v67, 0
  %v698 = vsel %vm534, %v68, 0
  %v701 = vsel %vm534, %v69, 0
  %v704 = vsel %vm534, %v70, 0
  %v707 = vsel %vm534, %v71, 0
  %v710 = vsel %vm534, %v72, 0
  %v713 = vsel %vm534, %v73, 0
  %v716 = vsel %vm534, %v74, 0
  %v719 = vsel %vm534, %v75, 0
  %v722 = vsel %vm534, %v76, 0
  %v725 = vsel %vm534, %v77, 0
  %v728 = vsel %vm534, %v78, 0
  %v731 = vsel %vm534, %v79, 0
  %v734 = vsel %vm534, %v80, 0
  %v737 = vsel %vm534, %v81, 0
  %v740 = vsel %vm534, %v82, 0
  %v743 = vsel %vm534, %v83, 0
  %v746 = vsel %vm534, %v84, 0
  %v749 = vsel %vm534, %v85, 0
  %v752 = vsel %vm534, %v86, 0
  %v755 = vsel %vm534, %v87, 0
  %v758 = vsel %vm534, %v88, 0
  %v761 = vsel %vm534, %v89, 0
  %v764 = vsel %vm534, %v90, 0
  %v767 = vsel %vm534, %v91, 0
  %v770 = vsel %vm534, %v92, 0
  %v773 = vsel %vm534, %v93, 0
  %v776 = vsel %vm534, %v94, 0
  %v779 = vsel %vm534, %v95, 0
  %v782 = vsel %vm534, %v96, 0
  %v785 = vsel %vm534, %v97, 0
  %v788 = vsel %vm534, %v98, 0
  %v791 = vsel %vm534, %v99, 0
  %v794 = vsel %vm534, %v100, 0
  %v797 = vsel %vm534, %v101, 0
  %v800 = vsel %vm534, %v102, 0
  %v803 = vsel %vm534, %v103, 0
  %v806 = vsel %vm534, %v104, 0
  %v809 = vsel %vm534, %v105, 0
  %v812 = vsel %vm534, %v106, 0
  %v815 = vsel %vm534, %v107, 0
  %v818 = vsel %vm534, %v108, 0
  %v821 = vsel %vm534, %v109, 0
  %v824 = vsel %vm534, %v110, 0
  %v827 = vsel %vm534, %v111, 0
  %v830 = vsel %vm534, %v112, 0
  %v833 = vsel %vm534, %v113, 0
  %v836 = vsel %vm534, %v114, 0
  %v839 = vsel %vm534, %v115, 0
  %v842 = vsel %vm534, %v116, 0
  %v845 = vsel %vm534, %v117, 0
  %v848 = vsel %vm534, %v118, 0
  %v851 = vsel %vm534, %v119, 0
  %v854 = vsel %vm534, %v120, 0
  %v857 = vsel %vm534, %v121, 0
  %v860 = vsel %vm534, %v122, 0
  %v863 = vsel %vm534, %v123, 0
  %v866 = vsel %vm534, %v124, 0
  %v869 = vsel %vm534, %v125, 0
  %v872 = vsel %vm534, %v126, 0
  %v875 = vsel %vm534, %v127, 0
  %v878 = vsel %vm534, %v128, 0
  %v881 = vsel %vm534, %v129, 0
  %v884 = vsel %vm534, %v130, 0
  %v887 = vsel %vm534, %v131, 0
  %v890 = vsel %vm534, %v132, 0
  %v893 = vsel %vm534, %v133, 0
  %v896 = vsel %vm534, %v134, 0
  %v899 = vsel %vm534, %v135, 0
  %v902 = vsel %vm534, %v136, 0
  %v905 = vsel %vm534, %v137, 0
  %v908 = vsel %vm534, %v138, 0
  %v911 = vsel %vm534, %v139, 0
  %v914 = vsel %vm534, %v140, 0
  %v917 = vsel %vm534, %v141, 0
  %v920 = vsel %vm534, %v142, 0
  %v923 = vsel %vm534, %v143, 0
  %v926 = vsel %vm534, %v144, 0
  %v929 = vsel %vm534, %v145, 0
  %v932 = vsel %vm534, %v146, 0
  %v935 = vsel %vm534, %v147, 0
  %v938 = vsel %vm534, %v148, 0
  %v941 = vsel %vm534, %v149, 0
  %v944 = vsel %vm534, %v150, 0
  %v947 = vsel %vm534, %v151, 0
  %v950 = vsel %vm534, %v152, 0
  %v953 = vsel %vm534, %v153, 0
  %v956 = vsel %vm534, %v154, 0
  %v959 = vsel %vm534, %v155, 0
  %v962 = vsel %vm534, %v156, 0
  %v965 = vsel %vm534, %v157, 0
  %v968 = vsel %vm534, %v158, 0
  %v971 = vsel %vm534, %v159, 0
  %v974 = vsel %vm534, %v160, 0
  %v977 = vsel %vm534, %v161, 0
  %v980 = vsel %vm534, %v162, 0
  %v983 = vsel %vm534, %v163, 0
  %v986 = vsel %vm534, %v164, 0
  %v989 = vsel %vm534, %v165, 0
  %v992 = vsel %vm534, %v166, 0
  %v995 = vsel %vm534, %v167, 0
  %v998 = vsel %vm534, %v168, 0
  %v1001 = vsel %vm534, %v169, 0
  %v1004 = vsel %vm534, %v170, 0
  %v1007 = vsel %vm534, %v171, 0
  %v1010 = vsel %vm534, %v172, 0
  %v1013 = vsel %vm534, %v173, 0
  %v1016 = vsel %vm534, %v174, 0
  %v1019 = vsel %vm534, %v175, 0
  %v1022 = vsel %vm534, %v176, 0
  %v1025 = vsel %vm534, %v177, 0
  %v1028 = vsel %vm534, %v178, 0
  %v1031 = vsel %vm534, %v179, 0
  %v1034 = vsel %vm534, %v180, 0
  %v1037 = vsel %vm534, %v181, 0
  %v1040 = vsel %vm534, %v182, 0
  %v1043 = vsel %vm534, %v183, 0
  %v1046 = vsel %vm534, %v184, 0
  %v1049 = vsel %vm534, %v185, 0
  %v1052 = vsel %vm534, %v186, 0
  %v1055 = vsel %vm534, %v187, 0
  %v1058 = vsel %vm534, %v188, 0
  %v1061 = vsel %vm534, %v189, 0
  %v1064 = vsel %vm534, %v190, 0
  %v1067 = vsel %vm534, %v191, 0
  %v1070 = vsel %vm534, %v192, 0
  %v1073 = vsel %vm534, %v193, 0
  %v1076 = vsel %vm534, %v194, 0
  %v1079 = vsel %vm534, %v195, 0
  %v1082 = vsel %vm534, %v196, 0
  %v1085 = vsel %vm534, %v197, 0
  %v1088 = vsel %vm534, %v198, 0
  %v1091 = vsel %vm534, %v199, 0
  %v1094 = vsel %vm534, %v200, 0
  %v1097 = vsel %vm534, %v201, 0
  %v1100 = vsel %vm534, %v202, 0
  %v1103 = vsel %vm534, %v203, 0
  %v1106 = vsel %vm534, %v204, 0
  %v1109 = vsel %vm534, %v205, 0
  %v1112 = vsel %vm534, %v206, 0
  %v1115 = vsel %vm534, %v207, 0
  %v1118 = vsel %vm534, %v208, 0
  %v1121 = vsel %vm534, %v209, 0
  %v1124 = vsel %vm534, %v210, 0
  %v1127 = vsel %vm534, %v211, 0
  %v1130 = vsel %vm534, %v212, 0
  %v1133 = vsel %vm534, %v213, 0
  %v1136 = vsel %vm534, %v214, 0
  %v1139 = vsel %vm534, %v215, 0
  %v1142 = vsel %vm534, %v216, 0
  %v1145 = vsel %vm534, %v217, 0
  %v1148 = vsel %vm534, %v218, 0
  %v1151 = vsel %vm534, %v219, 0
  %v1154 = vsel %vm534, %v220, 0
  %v1157 = vsel %vm534, %v221, 0
  %v1160 = vsel %vm534, %v222, 0
  %v1163 = vsel %vm534, %v223, 0
  %v1166 = vsel %vm534, %v224, 0
  %v1169 = vsel %vm534, %v225, 0
  %v1172 = vsel %vm534, %v226, 0
  %v1175 = vsel %vm534, %v227, 0
  %v1178 = vsel %vm534, %v228, 0
  %v1181 = vsel %vm534, %v229, 0
  %v1184 = vsel %vm534, %v230, 0
  %v1187 = vsel %vm534, %v231, 0
  %v1190 = vsel %vm534, %v232, 0
  %v1193 = vsel %vm534, %v233, 0
  %v1196 = vsel %vm534, %v234, 0
  %v1199 = vsel %vm534, %v235, 0
  %v1202 = vsel %vm534, %v236, 0
  %v1205 = vsel %vm534, %v237, 0
  %v1208 = vsel %vm534, %v238, 0
  %v1211 = vsel %vm534, %v239, 0
  %v1214 = vsel %vm534, %v240, 0
  %v1217 = vsel %vm534, %v241, 0
  %v1220 = vsel %vm534, %v242, 0
  %v1223 = vsel %vm534, %v243, 0
  %v1226 = vsel %vm534, %v244, 0
  %v1229 = vsel %vm534, %v245, 0
  %v1232 = vsel %vm534, %v246, 0
  %v1235 = vsel %vm534, %v247, 0
  %v1238 = vsel %vm534, %v248, 0
  %v1241 = vsel %vm534, %v249, 0
  %v1244 = vsel %vm534, %v250, 0
  %v1247 = vsel %vm534, %v251, 0
  %v1250 = vsel %vm534, %v252, 0
  %v1253 = vsel %vm534, %v253, 0
  %v1256 = vsel %vm534, %v254, 0
  %v1259 = vsel %vm534, %v255, 0
  %v1262 = vsel %vm534, %v256, 0
  %v1265 = vsel %vm534, %v257, 0
  %v1268 = vsel %vm534, %v258, 0
  %v1271 = vsel %vm534, %v259, 0
  %v1274 = vsel %vm534, %v260, 0
  %v1277 = vsel %vm534, %v261, 0
  %v1280 = vsel %vm534, %v262, 0
  %v1283 = vsel %vm534, %v263, 0
  %v1286 = vsel %vm534, %v264, 0
  %v1289 = vsel %vm534, %v265, 0
  %v1292 = vsel %vm534, %v266, 0
  %v1295 = vsel %vm534, %v267, 0
  %v1298 = vsel %vm534, %v268, 0
  %v1301 = vsel %vm534, %v269, 0
  %v1304 = vsel %vm534, %v270, 0
  %v1307 = vsel %vm534, %v271, 0
  %v1310 = vsel %vm534, %v272, 0
  %v1313 = vsel %vm534, %v273, 0
  %v1316 = vsel %vm534, %v274, 0
  %v1319 = vsel %vm534, %v275, 0
  %v1322 = vsel %vm534, %v276, 0
  %v1325 = vsel %vm534, %v277, 0
  %v1328 = vsel %vm534, %v278, 0
  %v1331 = vsel %vm534, %v279, 0
  %v1334 = vsel %vm534, %v280, 0
  %v1337 = vsel %vm534, %v281, 0
  %v1340 = vsel %vm534, %v282, 0
  %v1343 = vsel %vm534, %v283, 0
  %v1346 = vsel %vm534, %v284, 0
  %v1349 = vsel %vm534, %v285, 0
  %v1352 = vsel %vm534, %v286, 0
  %v1355 = vsel %vm534, %v287, 0
  %v1358 = vsel %vm534, %v288, 0
  %v1361 = vsel %vm534, %v289, 0
  %v1364 = vsel %vm534, %v290, 0
  %v1367 = vsel %vm534, %v291, 0
  %v1370 = vsel %vm534, %v292, 0
  %v1373 = vsel %vm534, %v293, 0
  %v1376 = vsel %vm534, %v294, 0
  %v1379 = vsel %vm534, %v295, 0
  %v1382 = vsel %vm534, %v296, 0
  %v1385 = vsel %vm534, %v297, 0
  %v1388 = vsel %vm534, %v298, 0
  %v1391 = vsel %vm534, %v299, 0
  %v1394 = vsel %vm534, %v300, 0
  %v1397 = vsel %vm534, %v301, 0
  %v1400 = vsel %vm534, %v302, 0
  %v1403 = vsel %vm534, %v303, 0
  %v1406 = vsel %vm534, %v304, 0
  %v1409 = vsel %vm534, %v305, 0
  %v1412 = vsel %vm534, %v306, 0
  %v1415 = vsel %vm534, %v307, 0
  %v1418 = vsel %vm534, %v308, 0
  %v1421 = vsel %vm534, %v309, 0
  %v1424 = vsel %vm534, %v310, 0
  %v1427 = vsel %vm534, %v311, 0
  %v1430 = vsel %vm534, %v312, 0
  %v1433 = vsel %vm534, %v313, 0
  %v1436 = vsel %vm534, %v314, 0
  %v1439 = vsel %vm534, %v315, 0
  %v1442 = vsel %vm534, %v316, 0
  %v1445 = vsel %vm534, %v317, 0
  %v1448 = vsel %vm534, %v318, 0
  %v1451 = vsel %vm534, %v319, 0
  %v1454 = vsel %vm534, %v320, 0
  %v1457 = vsel %vm534, %v321, 0
  %v1460 = vsel %vm534, %v322, 0
  %v1463 = vsel %vm534, %v323, 0
  %v1466 = vsel %vm534, %v324, 0
  %v1469 = vsel %vm534, %v325, 0
  %v1472 = vsel %vm534, %v326, 0
  %v1475 = vsel %vm534, %v327, 0
  %v1478 = vsel %vm534, %v328, 0
  %v1481 = vsel %vm534, %v329, 0
  %v1484 = vsel %vm534, %v330, 0
  %v1487 = vsel %vm534, %v331, 0
  %v1490 = vsel %vm534, %v332, 0
  %v1493 = vsel %vm534, %v333, 0
  %v1496 = vsel %vm534, %v334, 0
  %v1499 = vsel %vm534, %v335, 0
  %v1502 = vsel %vm534, %v336, 0
  %v1505 = vsel %vm534, %v337, 0
  %v1508 = vsel %vm534, %v338, 0
  %v1511 = vsel %vm534, %v339, 0
  %v1514 = vsel %vm534, %v340, 0
  %v1517 = vsel %vm534, %v341, 0
  %v1520 = vsel %vm534, %v342, 0
  %v1523 = vsel %vm534, %v343, 0
  %v1526 = vsel %vm534, %v344, 0
  %v1529 = vsel %vm534, %v345, 0
  %v1532 = vsel %vm534, %v346, 0
  %v1535 = vsel %vm534, %v347, 0
  %v1538 = vsel %vm534, %v348, 0
  %v1541 = vsel %vm534, %v349, 0
  %v1544 = vsel %vm534, %v350, 0
  %v1547 = vsel %vm534, %v351, 0
  %v1550 = vsel %vm534, %v352, 0
  %v1553 = vsel %vm534, %v353, 0
  %v1556 = vsel %vm534, %v354, 0
  %v1559 = vsel %vm534, %v355, 0
  %v1562 = vsel %vm534, %v356, 0
  %v1565 = vsel %vm534, %v357, 0
  %v1568 = vsel %vm534, %v358, 0
  %v1571 = vsel %vm534, %v359, 0
  %v1574 = vsel %vm534, %v360, 0
  %v1577 = vsel %vm534, %v361, 0
  %v1580 = vsel %vm534, %v362, 0
  %v1583 = vsel %vm534, %v363, 0
  %v1586 = vsel %vm534, %v364, 0
  %v1589 = vsel %vm534, %v365, 0
  %v1592 = vsel %vm534, %v366, 0
  %v1595 = vsel %vm534, %v367, 0
  %v1598 = vsel %vm534, %v368, 0
  %v1601 = vsel %vm534, %v369, 0
  %v1604 = vsel %vm534, %v370, 0
  %v1607 = vsel %vm534, %v371, 0
  %v1610 = vsel %vm534, %v372, 0
  %v1613 = vsel %vm534, %v373, 0
  %v1616 = vsel %vm534, %v374, 0
  %v1619 = vsel %vm534, %v375, 0
  %v1622 = vsel %vm534, %v376, 0
  %v1625 = vsel %vm534, %v377, 0
  %v1628 = vsel %vm534, %v378, 0
  %v1631 = vsel %vm534, %v379, 0
  %v1634 = vsel %vm534, %v380, 0
  %v1637 = vsel %vm534, %v381, 0
  %v1640 = vsel %vm534, %v382, 0
  %v1643 = vsel %vm534, %v383, 0
  %v1646 = vsel %vm534, %v384, 0
  %v1649 = vsel %vm534, %v385, 0
  %v1652 = vsel %vm534, %v386, 0
  %v1655 = vsel %vm534, %v387, 0
  %v1658 = vsel %vm534, %v388, 0
  %v1661 = vsel %vm534, %v389, 0
  %v1664 = vsel %vm534, %v390, 0
  %v1667 = vsel %vm534, %v391, 0
  %v1670 = vsel %vm534, %v392, 0
  %v1673 = vsel %vm534, %v393, 0
  %v1676 = vsel %vm534, %v394, 0
  %v1679 = vsel %vm534, %v395, 0
  %v1682 = vsel %vm534, %v396, 0
  %v1685 = vsel %vm534, %v397, 0
  %v1688 = vsel %vm534, %v398, 0
  %v1691 = vsel %vm534, %v399, 0
  %v1694 = vsel %vm534, %v400, 0
  %v1697 = vsel %vm534, %v401, 0
  %v1700 = vsel %vm534, %v402, 0
  %v1703 = vsel %vm534, %v403, 0
  %v1706 = vsel %vm534, %v404, 0
  %v1709 = vsel %vm534, %v405, 0
  %v1712 = vsel %vm534, %v406, 0
  %v1715 = vsel %vm534, %v407, 0
  %v1718 = vsel %vm534, %v408, 0
  %v1721 = vsel %vm534, %v409, 0
  %v1724 = vsel %vm534, %v410, 0
  %v1727 = vsel %vm534, %v411, 0
  %v1730 = vsel %vm534, %v412, 0
  %v1733 = vsel %vm534, %v413, 0
  %v1736 = vsel %vm534, %v414, 0
  %v1739 = vsel %vm534, %v415, 0
  %v1742 = vsel %vm534, %v416, 0
  %v1745 = vsel %vm534, %v417, 0
  %v1748 = vsel %vm534, %v418, 0
  %v1751 = vsel %vm534, %v419, 0
  %v1754 = vsel %vm534, %v420, 0
  %v1757 = vsel %vm534, %v421, 0
  %v1760 = vsel %vm534, %v422, 0
  %v1763 = vsel %vm534, %v423, 0
  %v1766 = vsel %vm534, %v424, 0
  %v1769 = vsel %vm534, %v425, 0
  %v1772 = vsel %vm534, %v426, 0
  %v1775 = vsel %vm534, %v427, 0
  %v1778 = vsel %vm534, %v428, 0
  %v1781 = vsel %vm534, %v429, 0
  %v1784 = vsel %vm534, %v430, 0
  %v1787 = vsel %vm534, %v431, 0
  %v1790 = vsel %vm534, %v432, 0
  %v1793 = vsel %vm534, %v433, 0
  %v1796 = vsel %vm534, %v434, 0
  %v1799 = vsel %vm534, %v435, 0
  %v1802 = vsel %vm534, %v436, 0
  %v1805 = vsel %vm534, %v437, 0
  %v1808 = vsel %vm534, %v438, 0
  %v1811 = vsel %vm534, %v439, 0
  %v1814 = vsel %vm534, %v440, 0
  %v1817 = vsel %vm534, %v441, 0
  %v1820 = vsel %vm534, %v442, 0
  %v1823 = vsel %vm534, %v443, 0
  %v1826 = vsel %vm534, %v444, 0
  %v1829 = vsel %vm534, %v445, 0
  %v1832 = vsel %vm534, %v446, 0
  %v1835 = vsel %vm534, %v447, 0
  %v1838 = vsel %vm534, %v448, 0
  %v1841 = vsel %vm534, %v449, 0
  %v1844 = vsel %vm534, %v450, 0
  %v1847 = vsel %vm534, %v451, 0
  %v1850 = vsel %vm534, %v452, 0
  %v1853 = vsel %vm534, %v453, 0
  %v1856 = vsel %vm534, %v454, 0
  %v1859 = vsel %vm534, %v455, 0
  %v1862 = vsel %vm534, %v456, 0
  %v1865 = vsel %vm534, %v457, 0
  %v1868 = vsel %vm534, %v458, 0
  %v1871 = vsel %vm534, %v459, 0
  %v1874 = vsel %vm534, %v460, 0
  %v1877 = vsel %vm534, %v461, 0
  %v1880 = vsel %vm534, %v462, 0
  %v1883 = vsel %vm534, %v463, 0
  %v1886 = vsel %vm534, %v464, 0
  %v1889 = vsel %vm534, %v465, 0
  %v1892 = vsel %vm534, %v466, 0
  %v1895 = vsel %vm534, %v467, 0
  %v1898 = vsel %vm534, %v468, 0
  %v1901 = vsel %vm534, %v469, 0
  %v1904 = vsel %vm534, %v470, 0
  %v1907 = vsel %vm534, %v471, 0
  %v1910 = vsel %vm534, %v472, 0
  %v1913 = vsel %vm534, %v473, 0
  %v1916 = vsel %vm534, %v474, 0
  %v1919 = vsel %vm534, %v475, 0
  %v1922 = vsel %vm534, %v476, 0
  %v1925 = vsel %vm534, %v477, 0
  %v1928 = vsel %vm534, %v478, 0
  %v1931 = vsel %vm534, %v479, 0
  %v1934 = vsel %vm534, %v480, 0
  %v1937 = vsel %vm534, %v481, 0
  %v1940 = vsel %vm534, %v482, 0
  %v1943 = vsel %vm534, %v483, 0
  %v1946 = vsel %vm534, %v484, 0
  %v1949 = vsel %vm534, %v485, 0
  %v1952 = vsel %vm534, %v486, 0
  %v1955 = vsel %vm534, %v487, 0
  %v1958 = vsel %vm534, %v488, 0
  %v1961 = vsel %vm534, %v489, 0
  %v1964 = vsel %vm534, %v490, 0
  %v1967 = vsel %vm534, %v491, 0
  %v1970 = vsel %vm534, %v492, 0
  %v1973 = vsel %vm534, %v493, 0
  %v1976 = vsel %vm534, %v494, 0
  %v1979 = vsel %vm534, %v495, 0
  %v1982 = vsel %vm534, %v496, 0
  %v1985 = vsel %vm534, %v497, 0
  %v1988 = vsel %vm534, %v498, 0
  %v1991 = vsel %vm534, %v499, 0
  %v1994 = vsel %vm534, %v500, 0
  %v1997 = vsel %vm534, %v501, 0
  %v2000 = vsel %vm534, %v502, 0
  %v2003 = vsel %vm534, %v503, 0
  %v2006 = vsel %vm534, %v504, 0
  %v2009 = vsel %vm534, %v505, 0
  %v2012 = vsel %vm534, %v506, 0
  %v2015 = vsel %vm534, %v507, 0
  %v2018 = vsel %vm534, %v508, 0
  %v2021 = vsel %vm534, %v509, 0
  %v2024 = vsel %vm534, %v510, 0
  %v2027 = vsel %vm534, %v511, 0
  %v2030 = vsel %vm534, %v512, 0
  %v2033 = vsel %vm534, %v513, 0
  %v2036 = vsel %vm534, %v514, 0
  %v2039 = vsel %vm534, %v515, 0
  %v2042 = vsel %vm534, %v516, 0
  %v2045 = vsel %vm534, %v517, 0
  %v2048 = vsel %vm534, %v518, 0
  %v2051 = vsel %vm534, %v519, 0
  %v2054 = vsel %vm534, %v520, 0
  %v2057 = vsel %vm534, %v521, 0
  %v2060 = vsel %vm534, %v522, 0
  %v2063 = vsel %vm534, %v523, 0
  %v2066 = vsel %vm534, %v524, 0
  %v2069 = vsel %vm534, %v525, 0
  %v2072 = vsel %vm534, %v526, 0
  %2074 = vmatprep.subr.mxu0 0.0
  %2075 = vmatpush1.xpose.msra.mxu0 %v2072
  %2076 = vmatprep.subr.mxu0 0.0
  %2077 = vmatpush1.xpose.msra.mxu0 0.0
  %2078 = vmatprep.subr.mxu0 0.0
  %2079 = vmatpush1.xpose.msra.mxu0 0.0
  %2080 = vmatprep.subr.mxu0 0.0
  %2081 = vmatpush1.xpose.msra.mxu0 0.0
  %2082 = vmatprep.subr.mxu0 0.0
  %2083 = vmatpush1.xpose.msra.mxu0 0.0
  %2084 = vmatprep.subr.mxu0 0.0
  %2085 = vmatpush1.xpose.msra.mxu0 0.0
  %2086 = vmatprep.subr.mxu0 0.0
  %2087 = vmatpush1.xpose.msra.mxu0 0.0
  %2088 = vmatprep.subr.mxu0 0.0
  %2089 = vmatpush1.xpose.msra.mxu0 0.0
  %2090 = vmatprep.subr.mxu0 0.0
  %2091 = vmatpush1.xpose.msra.mxu0 0.0
  %2092 = vmatprep.subr.mxu0 0.0
  %2093 = vmatpush1.xpose.msra.mxu0 0.0
  %2094 = vmatprep.subr.mxu0 0.0
  %2095 = vmatpush1.xpose.msra.mxu0 0.0
  %2096 = vmatprep.subr.mxu0 0.0
  %2097 = vmatpush1.xpose.msra.mxu0 0.0
  %2098 = vmatprep.subr.mxu0 0.0
  %2099 = vmatpush1.xpose.msra.mxu0 0.0
  %2100 = vmatprep.subr.mxu0 0.0
  %2101 = vmatpush1.xpose.msra.mxu0 0.0
  %2102 = vmatprep.subr.mxu0 0.0
  %2103 = vmatpush1.xpose.msra.mxu0 0.0
  %2104 = vmatprep.subr.mxu0 0.0
  %2105 = vmatpush1.xpose.msra.mxu0 0.0
  %2106 = vmatprep.subr.mxu0 0.0
  %2107 = vmatpush1.xpose.msra.mxu0 0.0
  %2108 = vmatprep.subr.mxu0 0.0
  %2109 = vmatpush1.xpose.msra.mxu0 0.0
  %2110 = vmatprep.subr.mxu0 0.0
  %2111 = vmatpush1.xpose.msra.mxu0 0.0
  %2112 = vmatprep.subr.mxu0 0.0
  %2113 = vmatpush1.xpose.msra.mxu0 0.0
  %2114 = vmatprep.subr.mxu0 0.0
  %2115 = vmatpush1.xpose.msra.mxu0 0.0
  %2116 = vmatprep.subr.mxu0 0.0
  %2117 = vmatpush1.xpose.msra.mxu0 0.0
  %2118 = vmatprep.subr.mxu0 0.0
  %2119 = vmatpush1.xpose.msra.mxu0 0.0
  %2120 = vmatprep.subr.mxu0 0.0
  %2121 = vmatpush1.xpose.msra.mxu0 0.0
  %2122 = vmatprep.subr.mxu0 0.0
  %2123 = vmatpush1.xpose.msra.mxu0 0.0
  %2124 = vmatprep.subr.mxu0 0.0
  %2125 = vmatpush1.xpose.msra.mxu0 0.0
  %2126 = vmatprep.subr.mxu0 0.0
  %2127 = vmatpush1.xpose.msra.mxu0 0.0
  %2128 = vmatprep.subr.mxu0 0.0
  %2129 = vmatpush1.xpose.msra.mxu0 0.0
  %2130 = vmatprep.subr.mxu0 0.0
  %2131 = vmatpush1.xpose.msra.mxu0 0.0
  %2132 = vmatprep.subr.mxu0 0.0
  %2133 = vmatpush1.xpose.msra.mxu0 0.0
  %2134 = vmatprep.subr.mxu0 0.0
  %2135 = vmatpush1.xpose.msra.mxu0 0.0
  %2136 = vmatprep.subr.mxu0 0.0
  %2137 = vmatpush1.xpose.msra.mxu0 0.0
  %2138 = vmatprep.mubr.f32.mxu0 0.0
  %2139 = vmatmul.mubr.f32.gmra.mrb[0].mxu0 %v536
  %v2140 = vpop.f32.mrb[0].mxu0
  %v2141 = vadd.f32 %v532, %v2140
  %v2142 = vpop.f32.mrb[0].mxu0
  %2143 = vmatprep.mubr.f32.mxu0 0.0
  %2144 = vmatmul.mubr.f32.gmra.mrb[0].mxu0 %v539
  %v2145 = vpop.f32.mrb[0].mxu0
  %v2146 = vadd.f32 %v532, %v2145
  %v2147 = vpop.f32.mrb[0].mxu0
  %2148 = vmatprep.mubr.f32.mxu0 0.0
  %2149 = vmatmul.mubr.f32.gmra.mrb[0].mxu0 %v542
  %v2150 = vpop.f32.mrb[0].mxu0
  %v2151 = vadd.f32 %v532, %v2150
  %v2152 = vpop.f32.mrb[0].mxu0
  %2153 = vmatprep.mubr.f32.mxu0 0.0
  %2154 = vmatmul.mubr.f32.gmra.mrb[0].mxu0 %v545
  %v2155 = vpop.f32.mrb[0].mxu0
  %v2156 = vadd.f32 %v532, %v2155
  %v2157 = vpop.f32.mrb[0].mxu0
  %2158 = vmatprep.mubr.f32.mxu0 0.0
  %2159 = vmatmul.mubr.f32.gmra.mrb[0].mxu0 %v548
  %v2160 = vpop.f32.mrb[0].mxu0
  %v2161 = vadd.f32 %v532, %v2160
  %v2162 = vpop.f32.mrb[0].mxu0
  %2163 = vmatprep.mubr.f32.mxu0 0.0
  %2164 = vmatmul.mubr.f32.gmra.mrb[0].mxu0 %v551
  %v2165 = vpop.f32.mrb[0].mxu0
  %v2166 = vadd.f32 %v532, %v2165
  %v2167 = vpop.f32.mrb[0].mxu0
  %2168 = vmatprep.mubr.f32.mxu0 0.0
  %2169 = vmatmul.mubr.f32.gmra.mrb[0].mxu0 %v554
  %v2170 = vpop.f32.mrb[0].mxu0
  %v2171 = vadd.f32 %v532, %v2170
  %v2172 = vpop.f32.mrb[0].mxu0
  %2173 = vmatprep.mubr.f32.mxu0 0.0
  %2174 = vmatmul.mubr.f32.gmra.mrb[0].mxu0 %v557
  %v2175 = vpop.f32.mrb[0].mxu0
  %v2176 = vadd.f32 %v532, %v2175
  %v2177 = vpop.f32.mrb[0].mxu0
  %2178 = vmatprep.mubr.f32.mxu0 0.0
  %2179 = vmatmul.mubr.f32.gmra.mrb[0].mxu0 %v560
  %v2180 = vpop.f32.mrb[0].mxu0
  %v2181 = vadd.f32 %v532, %v2180
  %v2182 = vpop.f32.mrb[0].mxu0
  %2183 = vmatprep.mubr.f32.mxu0 0.0
  %2184 = vmatmul.mubr.f32.gmra.mrb[0].mxu0 %v563
  %v2185 = vpop.f32.mrb[0].mxu0
  %v2186 = vadd.f32 %v532, %v2185
  %v2187 = vpop.f32.mrb[0].mxu0
  %2188 = vmatprep.mubr.f32.mxu0 0.0
  %2189 = vmatmul.mubr.f32.gmra.mrb[0].mxu0 %v566
  %v2190 = vpop.f32.mrb[0].mxu0
  %v2191 = vadd.f32 %v532, %v2190
  %v2192 = vpop.f32.mrb[0].mxu0
  %2193 = vmatprep.mubr.f32.mxu0 0.0
  %2194 = vmatmul.mubr.f32.gmra.mrb[0].mxu0 %v569
  %v2195 = vpop.f32.mrb[0].mxu0
  %v2196 = vadd.f32 %v532, %v2195
  %v2197 = vpop.f32.mrb[0].mxu0
  %2198 = vmatprep.mubr.f32.mxu0 0.0
  %2199 = vmatmul.mubr.f32.gmra.mrb[0].mxu0 %v572
  %v2200 = vpop.f32.mrb[0].mxu0
  %v2201 = vadd.f32 %v532, %v2200
  %v2202 = vpop.f32.mrb[0].mxu0
  %2203 = vmatprep.mubr.f32.mxu0 0.0
  %2204 = vmatmul.mubr.f32.gmra.mrb[0].mxu0 %v575
  %v2205 = vpop.f32.mrb[0].mxu0
  %v2206 = vadd.f32 %v532, %v2205
  %v2207 = vpop.f32.mrb[0].mxu0
  %2208 = vmatprep.mubr.f32.mxu0 0.0
  %2209 = vmatmul.mubr.f32.gmra.mrb[0].mxu0 %v578
  %v2210 = vpop.f32.mrb[0].mxu0
  %v2211 = vadd.f32 %v532, %v2210
  %v2212 = vpop.f32.mrb[0].mxu0
  %2213 = vmatprep.mubr.f32.mxu0 0.0
  %2214 = vmatmul.mubr.f32.gmra.mrb[0].mxu0 %v581
  %v2215 = vpop.f32.mrb[0].mxu0
  %v2216 = vadd.f32 %v532, %v2215
  %v2217 = vpop.f32.mrb[0].mxu0
  %2218 = vmatprep.mubr.f32.mxu0 0.0
  %2219 = vmatmul.mubr.f32.gmra.mrb[0].mxu0 %v584
  %v2220 = vpop.f32.mrb[0].mxu0
  %v2221 = vadd.f32 %v532, %v2220
  %v2222 = vpop.f32.mrb[0].mxu0
  %2223 = vmatprep.mubr.f32.mxu0 0.0
  %2224 = vmatmul.mubr.f32.gmra.mrb[0].mxu0 %v587
  %v2225 = vpop.f32.mrb[0].mxu0
  %v2226 = vadd.f32 %v532, %v2225
  %v2227 = vpop.f32.mrb[0].mxu0
  %2228 = vmatprep.mubr.f32.mxu0 0.0
  %2229 = vmatmul.mubr.f32.gmra.mrb[0].mxu0 %v590
  %v2230 = vpop.f32.mrb[0].mxu0
  %v2231 = vadd.f32 %v532, %v2230
  %v2232 = vpop.f32.mrb[0].mxu0
  %2233 = vmatprep.mubr.f32.mxu0 0.0
  %2234 = vmatmul.mubr.f32.gmra.mrb[0].mxu0 %v593
  %v2235 = vpop.f32.mrb[0].mxu0
  %v2236 = vadd.f32 %v532, %v2235
  %v2237 = vpop.f32.mrb[0].mxu0
  %2238 = vmatprep.mubr.f32.mxu0 0.0
  %2239 = vmatmul.mubr.f32.gmra.mrb[0].mxu0 %v596
  %v2240 = vpop.f32.mrb[0].mxu0
  %v2241 = vadd.f32 %v532, %v2240
  %v2242 = vpop.f32.mrb[0].mxu0
  %2243 = vmatprep.mubr.f32.mxu0 0.0
  %2244 = vmatmul.mubr.f32.gmra.mrb[0].mxu0 %v599
  %v2245 = vpop.f32.mrb[0].mxu0
  %v2246 = vadd.f32 %v532, %v2245
  %v2247 = vpop.f32.mrb[0].mxu0
  %2248 = vmatprep.mubr.f32.mxu0 0.0
  %2249 = vmatmul.mubr.f32.gmra.mrb[0].mxu0 %v602
  %v2250 = vpop.f32.mrb[0].mxu0
  %v2251 = vadd.f32 %v532, %v2250
  %v2252 = vpop.f32.mrb[0].mxu0
  %2253 = vmatprep.mubr.f32.mxu0 0.0
  %2254 = vmatmul.mubr.f32.gmra.mrb[0].mxu0 %v605
  %v2255 = vpop.f32.mrb[0].mxu0
  %v2256 = vadd.f32 %v532, %v2255
  %v2257 = vpop.f32.mrb[0].mxu0
  %2258 = vmatprep.mubr.f32.mxu0 0.0
  %2259 = vmatmul.mubr.f32.gmra.mrb[0].mxu0 %v608
  %v2260 = vpop.f32.mrb[0].mxu0
  %v2261 = vadd.f32 %v532, %v2260
  %v2262 = vpop.f32.mrb[0].mxu0
  %2263 = vmatprep.mubr.f32.mxu0 0.0
  %2264 = vmatmul.mubr.f32.gmra.mrb[0].mxu0 %v611
  %v2265 = vpop.f32.mrb[0].mxu0
  %v2266 = vadd.f32 %v532, %v2265
  %v2267 = vpop.f32.mrb[0].mxu0
  %2268 = vmatprep.mubr.f32.mxu0 0.0
  %2269 = vmatmul.mubr.f32.gmra.mrb[0].mxu0 %v614
  %v2270 = vpop.f32.mrb[0].mxu0
  %v2271 = vadd.f32 %v532, %v2270
  %v2272 = vpop.f32.mrb[0].mxu0
  %2273 = vmatprep.mubr.f32.mxu0 0.0
  %2274 = vmatmul.mubr.f32.gmra.mrb[0].mxu0 %v617
  %v2275 = vpop.f32.mrb[0].mxu0
  %v2276 = vadd.f32 %v532, %v2275
  %v2277 = vpop.f32.mrb[0].mxu0
  %2278 = vmatprep.mubr.f32.mxu0 0.0
  %2279 = vmatmul.mubr.f32.gmra.mrb[0].mxu0 %v620
  %v2280 = vpop.f32.mrb[0].mxu0
  %v2281 = vadd.f32 %v532, %v2280
  %v2282 = vpop.f32.mrb[0].mxu0
  %2283 = vmatprep.mubr.f32.mxu0 0.0
  %2284 = vmatmul.mubr.f32.gmra.mrb[0].mxu0 %v623
  %v2285 = vpop.f32.mrb[0].mxu0
  %v2286 = vadd.f32 %v532, %v2285
  %v2287 = vpop.f32.mrb[0].mxu0
  %2288 = vmatprep.mubr.f32.mxu0 0.0
  %2289 = vmatmul.mubr.f32.gmra.mrb[0].mxu0 %v626
  %v2290 = vpop.f32.mrb[0].mxu0
  %v2291 = vadd.f32 %v532, %v2290
  %v2292 = vpop.f32.mrb[0].mxu0
  %2293 = vmatprep.mubr.f32.mxu0 0.0
  %2294 = vmatmul.mubr.f32.gmra.mrb[0].mxu0 %v629
  %v2295 = vpop.f32.mrb[0].mxu0
  %v2296 = vadd.f32 %v532, %v2295
  %v2297 = vpop.f32.mrb[0].mxu0
  %2298 = vmatprep.mubr.f32.mxu0 0.0
  %2299 = vmatmul.mubr.f32.gmra.mrb[0].mxu0 %v632
  %v2300 = vpop.f32.mrb[0].mxu0
  %v2301 = vadd.f32 %v532, %v2300
  %v2302 = vpop.f32.mrb[0].mxu0
  %2303 = vmatprep.mubr.f32.mxu0 0.0
  %2304 = vmatmul.mubr.f32.gmra.mrb[0].mxu0 %v635
  %v2305 = vpop.f32.mrb[0].mxu0
  %v2306 = vadd.f32 %v532, %v2305
  %v2307 = vpop.f32.mrb[0].mxu0
  %2308 = vmatprep.mubr.f32.mxu0 0.0
  %2309 = vmatmul.mubr.f32.gmra.mrb[0].mxu0 %v638
  %v2310 = vpop.f32.mrb[0].mxu0
  %v2311 = vadd.f32 %v532, %v2310
  %v2312 = vpop.f32.mrb[0].mxu0
  %2313 = vmatprep.mubr.f32.mxu0 0.0
  %2314 = vmatmul.mubr.f32.gmra.mrb[0].mxu0 %v641
  %v2315 = vpop.f32.mrb[0].mxu0
  %v2316 = vadd.f32 %v532, %v2315
  %v2317 = vpop.f32.mrb[0].mxu0
  %2318 = vmatprep.mubr.f32.mxu0 0.0
  %2319 = vmatmul.mubr.f32.gmra.mrb[0].mxu0 %v644
  %v2320 = vpop.f32.mrb[0].mxu0
  %v2321 = vadd.f32 %v532, %v2320
  %v2322 = vpop.f32.mrb[0].mxu0
  %2323 = vmatprep.mubr.f32.mxu0 0.0
  %2324 = vmatmul.mubr.f32.gmra.mrb[0].mxu0 %v647
  %v2325 = vpop.f32.mrb[0].mxu0
  %v2326 = vadd.f32 %v532, %v2325
  %v2327 = vpop.f32.mrb[0].mxu0
  %2328 = vmatprep.mubr.f32.mxu0 0.0
  %2329 = vmatmul.mubr.f32.gmra.mrb[0].mxu0 %v650
  %v2330 = vpop.f32.mrb[0].mxu0
  %v2331 = vadd.f32 %v532, %v2330
  %v2332 = vpop.f32.mrb[0].mxu0
  %2333 = vmatprep.mubr.f32.mxu0 0.0
  %2334 = vmatmul.mubr.f32.gmra.mrb[0].mxu0 %v653
  %v2335 = vpop.f32.mrb[0].mxu0
  %v2336 = vadd.f32 %v532, %v2335
  %v2337 = vpop.f32.mrb[0].mxu0
  %2338 = vmatprep.mubr.f32.mxu0 0.0
  %2339 = vmatmul.mubr.f32.gmra.mrb[0].mxu0 %v656
  %v2340 = vpop.f32.mrb[0].mxu0
  %v2341 = vadd.f32 %v532, %v2340
  %v2342 = vpop.f32.mrb[0].mxu0
  %2343 = vmatprep.mubr.f32.mxu0 0.0
  %2344 = vmatmul.mubr.f32.gmra.mrb[0].mxu0 %v659
  %v2345 = vpop.f32.mrb[0].mxu0
  %v2346 = vadd.f32 %v532, %v2345
  %v2347 = vpop.f32.mrb[0].mxu0
  %2348 = vmatprep.mubr.f32.mxu0 0.0
  %2349 = vmatmul.mubr.f32.gmra.mrb[0].mxu0 %v662
  %v2350 = vpop.f32.mrb[0].mxu0
  %v2351 = vadd.f32 %v532, %v2350
  %v2352 = vpop.f32.mrb[0].mxu0
  %2353 = vmatprep.mubr.f32.mxu0 0.0
  %2354 = vmatmul.mubr.f32.gmra.mrb[0].mxu0 %v665
  %v2355 = vpop.f32.mrb[0].mxu0
  %v2356 = vadd.f32 %v532, %v2355
  %v2357 = vpop.f32.mrb[0].mxu0
  %2358 = vmatprep.mubr.f32.mxu0 0.0
  %2359 = vmatmul.mubr.f32.gmra.mrb[0].mxu0 %v668
  %v2360 = vpop.f32.mrb[0].mxu0
  %v2361 = vadd.f32 %v532, %v2360
  %v2362 = vpop.f32.mrb[0].mxu0
  %2363 = vmatprep.mubr.f32.mxu0 0.0
  %2364 = vmatmul.mubr.f32.gmra.mrb[0].mxu0 %v671
  %v2365 = vpop.f32.mrb[0].mxu0
  %v2366 = vadd.f32 %v532, %v2365
  %v2367 = vpop.f32.mrb[0].mxu0
  %2368 = vmatprep.mubr.f32.mxu0 0.0
  %2369 = vmatmul.mubr.f32.gmra.mrb[0].mxu0 %v674
  %v2370 = vpop.f32.mrb[0].mxu0
  %v2371 = vadd.f32 %v532, %v2370
  %v2372 = vpop.f32.mrb[0].mxu0
  %2373 = vmatprep.mubr.f32.mxu0 0.0
  %2374 = vmatmul.mubr.f32.gmra.mrb[0].mxu0 %v677
  %v2375 = vpop.f32.mrb[0].mxu0
  %v2376 = vadd.f32 %v532, %v2375
  %v2377 = vpop.f32.mrb[0].mxu0
  %2378 = vmatprep.mubr.f32.mxu0 0.0
  %2379 = vmatmul.mubr.f32.gmra.mrb[0].mxu0 %v680
  %v2380 = vpop.f32.mrb[0].mxu0
  %v2381 = vadd.f32 %v532, %v2380
  %v2382 = vpop.f32.mrb[0].mxu0
  %2383 = vmatprep.mubr.f32.mxu0 0.0
  %2384 = vmatmul.mubr.f32.gmra.mrb[0].mxu0 %v683
  %v2385 = vpop.f32.mrb[0].mxu0
  %v2386 = vadd.f32 %v532, %v2385
  %v2387 = vpop.f32.mrb[0].mxu0
  %2388 = vmatprep.mubr.f32.mxu0 0.0
  %2389 = vmatmul.mubr.f32.gmra.mrb[0].mxu0 %v686
  %v2390 = vpop.f32.mrb[0].mxu0
  %v2391 = vadd.f32 %v532, %v2390
  %v2392 = vpop.f32.mrb[0].mxu0
  %2393 = vmatprep.mubr.f32.mxu0 0.0
  %2394 = vmatmul.mubr.f32.gmra.mrb[0].mxu0 %v689
  %v2395 = vpop.f32.mrb[0].mxu0
  %v2396 = vadd.f32 %v532, %v2395
  %v2397 = vpop.f32.mrb[0].mxu0
  %2398 = vmatprep.mubr.f32.mxu0 0.0
  %2399 = vmatmul.mubr.f32.gmra.mrb[0].mxu0 %v692
  %v2400 = vpop.f32.mrb[0].mxu0
  %v2401 = vadd.f32 %v532, %v2400
  %v2402 = vpop.f32.mrb[0].mxu0
  %2403 = vmatprep.mubr.f32.mxu0 0.0
  %2404 = vmatmul.mubr.f32.gmra.mrb[0].mxu0 %v695
  %v2405 = vpop.f32.mrb[0].mxu0
  %v2406 = vadd.f32 %v532, %v2405
  %v2407 = vpop.f32.mrb[0].mxu0
  %2408 = vmatprep.mubr.f32.mxu0 0.0
  %2409 = vmatmul.mubr.f32.gmra.mrb[0].mxu0 %v698
  %v2410 = vpop.f32.mrb[0].mxu0
  %v2411 = vadd.f32 %v532, %v2410
  %v2412 = vpop.f32.mrb[0].mxu0
  %2413 = vmatprep.mubr.f32.mxu0 0.0
  %2414 = vmatmul.mubr.f32.gmra.mrb[0].mxu0 %v701
  %v2415 = vpop.f32.mrb[0].mxu0
  %v2416 = vadd.f32 %v532, %v2415
  %v2417 = vpop.f32.mrb[0].mxu0
  %2418 = vmatprep.mubr.f32.mxu0 0.0
  %2419 = vmatmul.mubr.f32.gmra.mrb[0].mxu0 %v704
  %v2420 = vpop.f32.mrb[0].mxu0
  %v2421 = vadd.f32 %v532, %v2420
  %v2422 = vpop.f32.mrb[0].mxu0
  %2423 = vmatprep.mubr.f32.mxu0 0.0
  %2424 = vmatmul.mubr.f32.gmra.mrb[0].mxu0 %v707
  %v2425 = vpop.f32.mrb[0].mxu0
  %v2426 = vadd.f32 %v532, %v2425
  %v2427 = vpop.f32.mrb[0].mxu0
  %2428 = vmatprep.mubr.f32.mxu0 0.0
  %2429 = vmatmul.mubr.f32.gmra.mrb[0].mxu0 %v710
  %v2430 = vpop.f32.mrb[0].mxu0
  %v2431 = vadd.f32 %v532, %v2430
  %v2432 = vpop.f32.mrb[0].mxu0
  %2433 = vmatprep.mubr.f32.mxu0 0.0
  %2434 = vmatmul.mubr.f32.gmra.mrb[0].mxu0 %v713
  %v2435 = vpop.f32.mrb[0].mxu0
  %v2436 = vadd.f32 %v532, %v2435
  %v2437 = vpop.f32.mrb[0].mxu0
  %2438 = vmatprep.mubr.f32.mxu0 0.0
  %2439 = vmatmul.mubr.f32.gmra.mrb[0].mxu0 %v716
  %v2440 = vpop.f32.mrb[0].mxu0
  %v2441 = vadd.f32 %v532, %v2440
  %v2442 = vpop.f32.mrb[0].mxu0
  %2443 = vmatprep.mubr.f32.mxu0 0.0
  %2444 = vmatmul.mubr.f32.gmra.mrb[0].mxu0 %v719
  %v2445 = vpop.f32.mrb[0].mxu0
  %v2446 = vadd.f32 %v532, %v2445
  %v2447 = vpop.f32.mrb[0].mxu0
  %2448 = vmatprep.mubr.f32.mxu0 0.0
  %2449 = vmatmul.mubr.f32.gmra.mrb[0].mxu0 %v722
  %v2450 = vpop.f32.mrb[0].mxu0
  %v2451 = vadd.f32 %v532, %v2450
  %v2452 = vpop.f32.mrb[0].mxu0
  %2453 = vmatprep.mubr.f32.mxu0 0.0
  %2454 = vmatmul.mubr.f32.gmra.mrb[0].mxu0 %v725
  %v2455 = vpop.f32.mrb[0].mxu0
  %v2456 = vadd.f32 %v532, %v2455
  %v2457 = vpop.f32.mrb[0].mxu0
  %2458 = vmatprep.mubr.f32.mxu0 0.0
  %2459 = vmatmul.mubr.f32.gmra.mrb[0].mxu0 %v728
  %v2460 = vpop.f32.mrb[0].mxu0
  %v2461 = vadd.f32 %v532, %v2460
  %v2462 = vpop.f32.mrb[0].mxu0
  %2463 = vmatprep.mubr.f32.mxu0 0.0
  %2464 = vmatmul.mubr.f32.gmra.mrb[0].mxu0 %v731
  %v2465 = vpop.f32.mrb[0].mxu0
  %v2466 = vadd.f32 %v532, %v2465
  %v2467 = vpop.f32.mrb[0].mxu0
  %2468 = vmatprep.mubr.f32.mxu0 0.0
  %2469 = vmatmul.mubr.f32.gmra.mrb[0].mxu0 %v734
  %v2470 = vpop.f32.mrb[0].mxu0
  %v2471 = vadd.f32 %v532, %v2470
  %v2472 = vpop.f32.mrb[0].mxu0
  %2473 = vmatprep.mubr.f32.mxu0 0.0
  %2474 = vmatmul.mubr.f32.gmra.mrb[0].mxu0 %v737
  %v2475 = vpop.f32.mrb[0].mxu0
  %v2476 = vadd.f32 %v532, %v2475
  %v2477 = vpop.f32.mrb[0].mxu0
  %2478 = vmatprep.mubr.f32.mxu0 0.0
  %2479 = vmatmul.mubr.f32.gmra.mrb[0].mxu0 %v740
  %v2480 = vpop.f32.mrb[0].mxu0
  %v2481 = vadd.f32 %v532, %v2480
  %v2482 = vpop.f32.mrb[0].mxu0
  %2483 = vmatprep.mubr.f32.mxu0 0.0
  %2484 = vmatmul.mubr.f32.gmra.mrb[0].mxu0 %v743
  %v2485 = vpop.f32.mrb[0].mxu0
  %v2486 = vadd.f32 %v532, %v2485
  %v2487 = vpop.f32.mrb[0].mxu0
  %2488 = vmatprep.mubr.f32.mxu0 0.0
  %2489 = vmatmul.mubr.f32.gmra.mrb[0].mxu0 %v746
  %v2490 = vpop.f32.mrb[0].mxu0
  %v2491 = vadd.f32 %v532, %v2490
  %v2492 = vpop.f32.mrb[0].mxu0
  %2493 = vmatprep.mubr.f32.mxu0 0.0
  %2494 = vmatmul.mubr.f32.gmra.mrb[0].mxu0 %v749
  %v2495 = vpop.f32.mrb[0].mxu0
  %v2496 = vadd.f32 %v532, %v2495
  %v2497 = vpop.f32.mrb[0].mxu0
  %2498 = vmatprep.mubr.f32.mxu0 0.0
  %2499 = vmatmul.mubr.f32.gmra.mrb[0].mxu0 %v752
  %v2500 = vpop.f32.mrb[0].mxu0
  %v2501 = vadd.f32 %v532, %v2500
  %v2502 = vpop.f32.mrb[0].mxu0
  %2503 = vmatprep.mubr.f32.mxu0 0.0
  %2504 = vmatmul.mubr.f32.gmra.mrb[0].mxu0 %v755
  %v2505 = vpop.f32.mrb[0].mxu0
  %v2506 = vadd.f32 %v532, %v2505
  %v2507 = vpop.f32.mrb[0].mxu0
  %2508 = vmatprep.mubr.f32.mxu0 0.0
  %2509 = vmatmul.mubr.f32.gmra.mrb[0].mxu0 %v758
  %v2510 = vpop.f32.mrb[0].mxu0
  %v2511 = vadd.f32 %v532, %v2510
  %v2512 = vpop.f32.mrb[0].mxu0
  %2513 = vmatprep.mubr.f32.mxu0 0.0
  %2514 = vmatmul.mubr.f32.gmra.mrb[0].mxu0 %v761
  %v2515 = vpop.f32.mrb[0].mxu0
  %v2516 = vadd.f32 %v532, %v2515
  %v2517 = vpop.f32.mrb[0].mxu0
  %2518 = vmatprep.mubr.f32.mxu0 0.0
  %2519 = vmatmul.mubr.f32.gmra.mrb[0].mxu0 %v764
  %v2520 = vpop.f32.mrb[0].mxu0
  %v2521 = vadd.f32 %v532, %v2520
  %v2522 = vpop.f32.mrb[0].mxu0
  %2523 = vmatprep.mubr.f32.mxu0 0.0
  %2524 = vmatmul.mubr.f32.gmra.mrb[0].mxu0 %v767
  %v2525 = vpop.f32.mrb[0].mxu0
  %v2526 = vadd.f32 %v532, %v2525
  %v2527 = vpop.f32.mrb[0].mxu0
  %2528 = vmatprep.mubr.f32.mxu0 0.0
  %2529 = vmatmul.mubr.f32.gmra.mrb[0].mxu0 %v770
  %v2530 = vpop.f32.mrb[0].mxu0
  %v2531 = vadd.f32 %v532, %v2530
  %v2532 = vpop.f32.mrb[0].mxu0
  %2533 = vmatprep.mubr.f32.mxu0 0.0
  %2534 = vmatmul.mubr.f32.gmra.mrb[0].mxu0 %v773
  %v2535 = vpop.f32.mrb[0].mxu0
  %v2536 = vadd.f32 %v532, %v2535
  %v2537 = vpop.f32.mrb[0].mxu0
  %2538 = vmatprep.mubr.f32.mxu0 0.0
  %2539 = vmatmul.mubr.f32.gmra.mrb[0].mxu0 %v776
  %v2540 = vpop.f32.mrb[0].mxu0
  %v2541 = vadd.f32 %v532, %v2540
  %v2542 = vpop.f32.mrb[0].mxu0
  %2543 = vmatprep.mubr.f32.mxu0 0.0
  %2544 = vmatmul.mubr.f32.gmra.mrb[0].mxu0 %v779
  %v2545 = vpop.f32.mrb[0].mxu0
  %v2546 = vadd.f32 %v532, %v2545
  %v2547 = vpop.f32.mrb[0].mxu0
  %2548 = vmatprep.mubr.f32.mxu0 0.0
  %2549 = vmatmul.mubr.f32.gmra.mrb[0].mxu0 %v782
  %v2550 = vpop.f32.mrb[0].mxu0
  %v2551 = vadd.f32 %v532, %v2550
  %v2552 = vpop.f32.mrb[0].mxu0
  %2553 = vmatprep.mubr.f32.mxu0 0.0
  %2554 = vmatmul.mubr.f32.gmra.mrb[0].mxu0 %v785
  %v2555 = vpop.f32.mrb[0].mxu0
  %v2556 = vadd.f32 %v532, %v2555
  %v2557 = vpop.f32.mrb[0].mxu0
  %2558 = vmatprep.mubr.f32.mxu0 0.0
  %2559 = vmatmul.mubr.f32.gmra.mrb[0].mxu0 %v788
  %v2560 = vpop.f32.mrb[0].mxu0
  %v2561 = vadd.f32 %v532, %v2560
  %v2562 = vpop.f32.mrb[0].mxu0
  %2563 = vmatprep.mubr.f32.mxu0 0.0
  %2564 = vmatmul.mubr.f32.gmra.mrb[0].mxu0 %v791
  %v2565 = vpop.f32.mrb[0].mxu0
  %v2566 = vadd.f32 %v532, %v2565
  %v2567 = vpop.f32.mrb[0].mxu0
  %2568 = vmatprep.mubr.f32.mxu0 0.0
  %2569 = vmatmul.mubr.f32.gmra.mrb[0].mxu0 %v794
  %v2570 = vpop.f32.mrb[0].mxu0
  %v2571 = vadd.f32 %v532, %v2570
  %v2572 = vpop.f32.mrb[0].mxu0
  %2573 = vmatprep.mubr.f32.mxu0 0.0
  %2574 = vmatmul.mubr.f32.gmra.mrb[0].mxu0 %v797
  %v2575 = vpop.f32.mrb[0].mxu0
  %v2576 = vadd.f32 %v532, %v2575
  %v2577 = vpop.f32.mrb[0].mxu0
  %2578 = vmatprep.mubr.f32.mxu0 0.0
  %2579 = vmatmul.mubr.f32.gmra.mrb[0].mxu0 %v800
  %v2580 = vpop.f32.mrb[0].mxu0
  %v2581 = vadd.f32 %v532, %v2580
  %v2582 = vpop.f32.mrb[0].mxu0
  %2583 = vmatprep.mubr.f32.mxu0 0.0
  %2584 = vmatmul.mubr.f32.gmra.mrb[0].mxu0 %v803
  %v2585 = vpop.f32.mrb[0].mxu0
  %v2586 = vadd.f32 %v532, %v2585
  %v2587 = vpop.f32.mrb[0].mxu0
  %2588 = vmatprep.mubr.f32.mxu0 0.0
  %2589 = vmatmul.mubr.f32.gmra.mrb[0].mxu0 %v806
  %v2590 = vpop.f32.mrb[0].mxu0
  %v2591 = vadd.f32 %v532, %v2590
  %v2592 = vpop.f32.mrb[0].mxu0
  %2593 = vmatprep.mubr.f32.mxu0 0.0
  %2594 = vmatmul.mubr.f32.gmra.mrb[0].mxu0 %v809
  %v2595 = vpop.f32.mrb[0].mxu0
  %v2596 = vadd.f32 %v532, %v2595
  %v2597 = vpop.f32.mrb[0].mxu0
  %2598 = vmatprep.mubr.f32.mxu0 0.0
  %2599 = vmatmul.mubr.f32.gmra.mrb[0].mxu0 %v812
  %v2600 = vpop.f32.mrb[0].mxu0
  %v2601 = vadd.f32 %v532, %v2600
  %v2602 = vpop.f32.mrb[0].mxu0
  %2603 = vmatprep.mubr.f32.mxu0 0.0
  %2604 = vmatmul.mubr.f32.gmra.mrb[0].mxu0 %v815
  %v2605 = vpop.f32.mrb[0].mxu0
  %v2606 = vadd.f32 %v532, %v2605
  %v2607 = vpop.f32.mrb[0].mxu0
  %2608 = vmatprep.mubr.f32.mxu0 0.0
  %2609 = vmatmul.mubr.f32.gmra.mrb[0].mxu0 %v818
  %v2610 = vpop.f32.mrb[0].mxu0
  %v2611 = vadd.f32 %v532, %v2610
  %v2612 = vpop.f32.mrb[0].mxu0
  %2613 = vmatprep.mubr.f32.mxu0 0.0
  %2614 = vmatmul.mubr.f32.gmra.mrb[0].mxu0 %v821
  %v2615 = vpop.f32.mrb[0].mxu0
  %v2616 = vadd.f32 %v532, %v2615
  %v2617 = vpop.f32.mrb[0].mxu0
  %2618 = vmatprep.mubr.f32.mxu0 0.0
  %2619 = vmatmul.mubr.f32.gmra.mrb[0].mxu0 %v824
  %v2620 = vpop.f32.mrb[0].mxu0
  %v2621 = vadd.f32 %v532, %v2620
  %v2622 = vpop.f32.mrb[0].mxu0
  %2623 = vmatprep.mubr.f32.mxu0 0.0
  %2624 = vmatmul.mubr.f32.gmra.mrb[0].mxu0 %v827
  %v2625 = vpop.f32.mrb[0].mxu0
  %v2626 = vadd.f32 %v532, %v2625
  %v2627 = vpop.f32.mrb[0].mxu0
  %2628 = vmatprep.mubr.f32.mxu0 0.0
  %2629 = vmatmul.mubr.f32.gmra.mrb[0].mxu0 %v830
  %v2630 = vpop.f32.mrb[0].mxu0
  %v2631 = vadd.f32 %v532, %v2630
  %v2632 = vpop.f32.mrb[0].mxu0
  %2633 = vmatprep.mubr.f32.mxu0 0.0
  %2634 = vmatmul.mubr.f32.gmra.mrb[0].mxu0 %v833
  %v2635 = vpop.f32.mrb[0].mxu0
  %v2636 = vadd.f32 %v532, %v2635
  %v2637 = vpop.f32.mrb[0].mxu0
  %2638 = vmatprep.mubr.f32.mxu0 0.0
  %2639 = vmatmul.mubr.f32.gmra.mrb[0].mxu0 %v836
  %v2640 = vpop.f32.mrb[0].mxu0
  %v2641 = vadd.f32 %v532, %v2640
  %v2642 = vpop.f32.mrb[0].mxu0
  %2643 = vmatprep.mubr.f32.mxu0 0.0
  %2644 = vmatmul.mubr.f32.gmra.mrb[0].mxu0 %v839
  %v2645 = vpop.f32.mrb[0].mxu0
  %v2646 = vadd.f32 %v532, %v2645
  %v2647 = vpop.f32.mrb[0].mxu0
  %2648 = vmatprep.mubr.f32.mxu0 0.0
  %2649 = vmatmul.mubr.f32.gmra.mrb[0].mxu0 %v842
  %v2650 = vpop.f32.mrb[0].mxu0
  %v2651 = vadd.f32 %v532, %v2650
  %v2652 = vpop.f32.mrb[0].mxu0
  %2653 = vmatprep.mubr.f32.mxu0 0.0
  %2654 = vmatmul.mubr.f32.gmra.mrb[0].mxu0 %v845
  %v2655 = vpop.f32.mrb[0].mxu0
  %v2656 = vadd.f32 %v532, %v2655
  %v2657 = vpop.f32.mrb[0].mxu0
  %2658 = vmatprep.mubr.f32.mxu0 0.0
  %2659 = vmatmul.mubr.f32.gmra.mrb[0].mxu0 %v848
  %v2660 = vpop.f32.mrb[0].mxu0
  %v2661 = vadd.f32 %v532, %v2660
  %v2662 = vpop.f32.mrb[0].mxu0
  %2663 = vmatprep.mubr.f32.mxu0 0.0
  %2664 = vmatmul.mubr.f32.gmra.mrb[0].mxu0 %v851
  %v2665 = vpop.f32.mrb[0].mxu0
  %v2666 = vadd.f32 %v532, %v2665
  %v2667 = vpop.f32.mrb[0].mxu0
  %2668 = vmatprep.mubr.f32.mxu0 0.0
  %2669 = vmatmul.mubr.f32.gmra.mrb[0].mxu0 %v854
  %v2670 = vpop.f32.mrb[0].mxu0
  %v2671 = vadd.f32 %v532, %v2670
  %v2672 = vpop.f32.mrb[0].mxu0
  %2673 = vmatprep.mubr.f32.mxu0 0.0
  %2674 = vmatmul.mubr.f32.gmra.mrb[0].mxu0 %v857
  %v2675 = vpop.f32.mrb[0].mxu0
  %v2676 = vadd.f32 %v532, %v2675
  %v2677 = vpop.f32.mrb[0].mxu0
  %2678 = vmatprep.mubr.f32.mxu0 0.0
  %2679 = vmatmul.mubr.f32.gmra.mrb[0].mxu0 %v860
  %v2680 = vpop.f32.mrb[0].mxu0
  %v2681 = vadd.f32 %v532, %v2680
  %v2682 = vpop.f32.mrb[0].mxu0
  %2683 = vmatprep.mubr.f32.mxu0 0.0
  %2684 = vmatmul.mubr.f32.gmra.mrb[0].mxu0 %v863
  %v2685 = vpop.f32.mrb[0].mxu0
  %v2686 = vadd.f32 %v532, %v2685
  %v2687 = vpop.f32.mrb[0].mxu0
  %2688 = vmatprep.mubr.f32.mxu0 0.0
  %2689 = vmatmul.mubr.f32.gmra.mrb[0].mxu0 %v866
  %v2690 = vpop.f32.mrb[0].mxu0
  %v2691 = vadd.f32 %v532, %v2690
  %v2692 = vpop.f32.mrb[0].mxu0
  %2693 = vmatprep.mubr.f32.mxu0 0.0
  %2694 = vmatmul.mubr.f32.gmra.mrb[0].mxu0 %v869
  %v2695 = vpop.f32.mrb[0].mxu0
  %v2696 = vadd.f32 %v532, %v2695
  %v2697 = vpop.f32.mrb[0].mxu0
  %2698 = vmatprep.mubr.f32.mxu0 0.0
  %2699 = vmatmul.mubr.f32.gmra.mrb[0].mxu0 %v872
  %v2700 = vpop.f32.mrb[0].mxu0
  %v2701 = vadd.f32 %v532, %v2700
  %v2702 = vpop.f32.mrb[0].mxu0
  %2703 = vmatprep.mubr.f32.mxu0 0.0
  %2704 = vmatmul.mubr.f32.gmra.mrb[0].mxu0 %v875
  %v2705 = vpop.f32.mrb[0].mxu0
  %v2706 = vadd.f32 %v532, %v2705
  %v2707 = vpop.f32.mrb[0].mxu0
  %2708 = vmatprep.mubr.f32.mxu0 0.0
  %2709 = vmatmul.mubr.f32.gmra.mrb[0].mxu0 %v878
  %v2710 = vpop.f32.mrb[0].mxu0
  %v2711 = vadd.f32 %v532, %v2710
  %v2712 = vpop.f32.mrb[0].mxu0
  %2713 = vmatprep.mubr.f32.mxu0 0.0
  %2714 = vmatmul.mubr.f32.gmra.mrb[0].mxu0 %v881
  %v2715 = vpop.f32.mrb[0].mxu0
  %v2716 = vadd.f32 %v532, %v2715
  %v2717 = vpop.f32.mrb[0].mxu0
  %2718 = vmatprep.mubr.f32.mxu0 0.0
  %2719 = vmatmul.mubr.f32.gmra.mrb[0].mxu0 %v884
  %v2720 = vpop.f32.mrb[0].mxu0
  %v2721 = vadd.f32 %v532, %v2720
  %v2722 = vpop.f32.mrb[0].mxu0
  %2723 = vmatprep.mubr.f32.mxu0 0.0
  %2724 = vmatmul.mubr.f32.gmra.mrb[0].mxu0 %v887
  %v2725 = vpop.f32.mrb[0].mxu0
  %v2726 = vadd.f32 %v532, %v2725
  %v2727 = vpop.f32.mrb[0].mxu0
  %2728 = vmatprep.mubr.f32.mxu0 0.0
  %2729 = vmatmul.mubr.f32.gmra.mrb[0].mxu0 %v890
  %v2730 = vpop.f32.mrb[0].mxu0
  %v2731 = vadd.f32 %v532, %v2730
  %v2732 = vpop.f32.mrb[0].mxu0
  %2733 = vmatprep.mubr.f32.mxu0 0.0
  %2734 = vmatmul.mubr.f32.gmra.mrb[0].mxu0 %v893
  %v2735 = vpop.f32.mrb[0].mxu0
  %v2736 = vadd.f32 %v532, %v2735
  %v2737 = vpop.f32.mrb[0].mxu0
  %2738 = vmatprep.mubr.f32.mxu0 0.0
  %2739 = vmatmul.mubr.f32.gmra.mrb[0].mxu0 %v896
  %v2740 = vpop.f32.mrb[0].mxu0
  %v2741 = vadd.f32 %v532, %v2740
  %v2742 = vpop.f32.mrb[0].mxu0
  %2743 = vmatprep.mubr.f32.mxu0 0.0
  %2744 = vmatmul.mubr.f32.gmra.mrb[0].mxu0 %v899
  %v2745 = vpop.f32.mrb[0].mxu0
  %v2746 = vadd.f32 %v532, %v2745
  %v2747 = vpop.f32.mrb[0].mxu0
  %2748 = vmatprep.mubr.f32.mxu0 0.0
  %2749 = vmatmul.mubr.f32.gmra.mrb[0].mxu0 %v902
  %v2750 = vpop.f32.mrb[0].mxu0
  %v2751 = vadd.f32 %v532, %v2750
  %v2752 = vpop.f32.mrb[0].mxu0
  %2753 = vmatprep.mubr.f32.mxu0 0.0
  %2754 = vmatmul.mubr.f32.gmra.mrb[0].mxu0 %v905
  %v2755 = vpop.f32.mrb[0].mxu0
  %v2756 = vadd.f32 %v532, %v2755
  %v2757 = vpop.f32.mrb[0].mxu0
  %2758 = vmatprep.mubr.f32.mxu0 0.0
  %2759 = vmatmul.mubr.f32.gmra.mrb[0].mxu0 %v908
  %v2760 = vpop.f32.mrb[0].mxu0
  %v2761 = vadd.f32 %v532, %v2760
  %v2762 = vpop.f32.mrb[0].mxu0
  %2763 = vmatprep.mubr.f32.mxu0 0.0
  %2764 = vmatmul.mubr.f32.gmra.mrb[0].mxu0 %v911
  %v2765 = vpop.f32.mrb[0].mxu0
  %v2766 = vadd.f32 %v532, %v2765
  %v2767 = vpop.f32.mrb[0].mxu0
  %2768 = vmatprep.mubr.f32.mxu0 0.0
  %2769 = vmatmul.mubr.f32.gmra.mrb[0].mxu0 %v914
  %v2770 = vpop.f32.mrb[0].mxu0
  %v2771 = vadd.f32 %v532, %v2770
  %v2772 = vpop.f32.mrb[0].mxu0
  %2773 = vmatprep.mubr.f32.mxu0 0.0
  %2774 = vmatmul.mubr.f32.gmra.mrb[0].mxu0 %v917
  %v2775 = vpop.f32.mrb[0].mxu0
  %v2776 = vadd.f32 %v532, %v2775
  %v2777 = vpop.f32.mrb[0].mxu0
  %2778 = vmatprep.mubr.f32.mxu0 0.0
  %2779 = vmatmul.mubr.f32.gmra.mrb[0].mxu0 %v920
  %v2780 = vpop.f32.mrb[0].mxu0
  %v2781 = vadd.f32 %v532, %v2780
  %v2782 = vpop.f32.mrb[0].mxu0
  %2783 = vmatprep.mubr.f32.mxu0 0.0
  %2784 = vmatmul.mubr.f32.gmra.mrb[0].mxu0 %v923
  %v2785 = vpop.f32.mrb[0].mxu0
  %v2786 = vadd.f32 %v532, %v2785
  %v2787 = vpop.f32.mrb[0].mxu0
  %2788 = vmatprep.mubr.f32.mxu0 0.0
  %2789 = vmatmul.mubr.f32.gmra.mrb[0].mxu0 %v926
  %v2790 = vpop.f32.mrb[0].mxu0
  %v2791 = vadd.f32 %v532, %v2790
  %v2792 = vpop.f32.mrb[0].mxu0
  %2793 = vmatprep.mubr.f32.mxu0 0.0
  %2794 = vmatmul.mubr.f32.gmra.mrb[0].mxu0 %v929
  %v2795 = vpop.f32.mrb[0].mxu0
  %v2796 = vadd.f32 %v532, %v2795
  %v2797 = vpop.f32.mrb[0].mxu0
  %2798 = vmatprep.mubr.f32.mxu0 0.0
  %2799 = vmatmul.mubr.f32.gmra.mrb[0].mxu0 %v932
  %v2800 = vpop.f32.mrb[0].mxu0
  %v2801 = vadd.f32 %v532, %v2800
  %v2802 = vpop.f32.mrb[0].mxu0
  %2803 = vmatprep.mubr.f32.mxu0 0.0
  %2804 = vmatmul.mubr.f32.gmra.mrb[0].mxu0 %v935
  %v2805 = vpop.f32.mrb[0].mxu0
  %v2806 = vadd.f32 %v532, %v2805
  %v2807 = vpop.f32.mrb[0].mxu0
  %2808 = vmatprep.mubr.f32.mxu0 0.0
  %2809 = vmatmul.mubr.f32.gmra.mrb[0].mxu0 %v938
  %v2810 = vpop.f32.mrb[0].mxu0
  %v2811 = vadd.f32 %v532, %v2810
  %v2812 = vpop.f32.mrb[0].mxu0
  %2813 = vmatprep.mubr.f32.mxu0 0.0
  %2814 = vmatmul.mubr.f32.gmra.mrb[0].mxu0 %v941
  %v2815 = vpop.f32.mrb[0].mxu0
  %v2816 = vadd.f32 %v532, %v2815
  %v2817 = vpop.f32.mrb[0].mxu0
  %2818 = vmatprep.mubr.f32.mxu0 0.0
  %2819 = vmatmul.mubr.f32.gmra.mrb[0].mxu0 %v944
  %v2820 = vpop.f32.mrb[0].mxu0
  %v2821 = vadd.f32 %v532, %v2820
  %v2822 = vpop.f32.mrb[0].mxu0
  %2823 = vmatprep.mubr.f32.mxu0 0.0
  %2824 = vmatmul.mubr.f32.gmra.mrb[0].mxu0 %v947
  %v2825 = vpop.f32.mrb[0].mxu0
  %v2826 = vadd.f32 %v532, %v2825
  %v2827 = vpop.f32.mrb[0].mxu0
  %2828 = vmatprep.mubr.f32.mxu0 0.0
  %2829 = vmatmul.mubr.f32.gmra.mrb[0].mxu0 %v950
  %v2830 = vpop.f32.mrb[0].mxu0
  %v2831 = vadd.f32 %v532, %v2830
  %v2832 = vpop.f32.mrb[0].mxu0
  %2833 = vmatprep.mubr.f32.mxu0 0.0
  %2834 = vmatmul.mubr.f32.gmra.mrb[0].mxu0 %v953
  %v2835 = vpop.f32.mrb[0].mxu0
  %v2836 = vadd.f32 %v532, %v2835
  %v2837 = vpop.f32.mrb[0].mxu0
  %2838 = vmatprep.mubr.f32.mxu0 0.0
  %2839 = vmatmul.mubr.f32.gmra.mrb[0].mxu0 %v956
  %v2840 = vpop.f32.mrb[0].mxu0
  %v2841 = vadd.f32 %v532, %v2840
  %v2842 = vpop.f32.mrb[0].mxu0
  %2843 = vmatprep.mubr.f32.mxu0 0.0
  %2844 = vmatmul.mubr.f32.gmra.mrb[0].mxu0 %v959
  %v2845 = vpop.f32.mrb[0].mxu0
  %v2846 = vadd.f32 %v532, %v2845
  %v2847 = vpop.f32.mrb[0].mxu0
  %2848 = vmatprep.mubr.f32.mxu0 0.0
  %2849 = vmatmul.mubr.f32.gmra.mrb[0].mxu0 %v962
  %v2850 = vpop.f32.mrb[0].mxu0
  %v2851 = vadd.f32 %v532, %v2850
  %v2852 = vpop.f32.mrb[0].mxu0
  %2853 = vmatprep.mubr.f32.mxu0 0.0
  %2854 = vmatmul.mubr.f32.gmra.mrb[0].mxu0 %v965
  %v2855 = vpop.f32.mrb[0].mxu0
  %v2856 = vadd.f32 %v532, %v2855
  %v2857 = vpop.f32.mrb[0].mxu0
  %2858 = vmatprep.mubr.f32.mxu0 0.0
  %2859 = vmatmul.mubr.f32.gmra.mrb[0].mxu0 %v968
  %v2860 = vpop.f32.mrb[0].mxu0
  %v2861 = vadd.f32 %v532, %v2860
  %v2862 = vpop.f32.mrb[0].mxu0
  %2863 = vmatprep.mubr.f32.mxu0 0.0
  %2864 = vmatmul.mubr.f32.gmra.mrb[0].mxu0 %v971
  %v2865 = vpop.f32.mrb[0].mxu0
  %v2866 = vadd.f32 %v532, %v2865
  %v2867 = vpop.f32.mrb[0].mxu0
  %2868 = vmatprep.mubr.f32.mxu0 0.0
  %2869 = vmatmul.mubr.f32.gmra.mrb[0].mxu0 %v974
  %v2870 = vpop.f32.mrb[0].mxu0
  %v2871 = vadd.f32 %v532, %v2870
  %v2872 = vpop.f32.mrb[0].mxu0
  %2873 = vmatprep.mubr.f32.mxu0 0.0
  %2874 = vmatmul.mubr.f32.gmra.mrb[0].mxu0 %v977
  %v2875 = vpop.f32.mrb[0].mxu0
  %v2876 = vadd.f32 %v532, %v2875
  %v2877 = vpop.f32.mrb[0].mxu0
  %2878 = vmatprep.mubr.f32.mxu0 0.0
  %2879 = vmatmul.mubr.f32.gmra.mrb[0].mxu0 %v980
  %v2880 = vpop.f32.mrb[0].mxu0
  %v2881 = vadd.f32 %v532, %v2880
  %v2882 = vpop.f32.mrb[0].mxu0
  %2883 = vmatprep.mubr.f32.mxu0 0.0
  %2884 = vmatmul.mubr.f32.gmra.mrb[0].mxu0 %v983
  %v2885 = vpop.f32.mrb[0].mxu0
  %v2886 = vadd.f32 %v532, %v2885
  %v2887 = vpop.f32.mrb[0].mxu0
  %2888 = vmatprep.mubr.f32.mxu0 0.0
  %2889 = vmatmul.mubr.f32.gmra.mrb[0].mxu0 %v986
  %v2890 = vpop.f32.mrb[0].mxu0
  %v2891 = vadd.f32 %v532, %v2890
  %v2892 = vpop.f32.mrb[0].mxu0
  %2893 = vmatprep.mubr.f32.mxu0 0.0
  %2894 = vmatmul.mubr.f32.gmra.mrb[0].mxu0 %v989
  %v2895 = vpop.f32.mrb[0].mxu0
  %v2896 = vadd.f32 %v532, %v2895
  %v2897 = vpop.f32.mrb[0].mxu0
  %2898 = vmatprep.mubr.f32.mxu0 0.0
  %2899 = vmatmul.mubr.f32.gmra.mrb[0].mxu0 %v992
  %v2900 = vpop.f32.mrb[0].mxu0
  %v2901 = vadd.f32 %v532, %v2900
  %v2902 = vpop.f32.mrb[0].mxu0
  %2903 = vmatprep.mubr.f32.mxu0 0.0
  %2904 = vmatmul.mubr.f32.gmra.mrb[0].mxu0 %v995
  %v2905 = vpop.f32.mrb[0].mxu0
  %v2906 = vadd.f32 %v532, %v2905
  %v2907 = vpop.f32.mrb[0].mxu0
  %2908 = vmatprep.mubr.f32.mxu0 0.0
  %2909 = vmatmul.mubr.f32.gmra.mrb[0].mxu0 %v998
  %v2910 = vpop.f32.mrb[0].mxu0
  %v2911 = vadd.f32 %v532, %v2910
  %v2912 = vpop.f32.mrb[0].mxu0
  %2913 = vmatprep.mubr.f32.mxu0 0.0
  %2914 = vmatmul.mubr.f32.gmra.mrb[0].mxu0 %v1001
  %v2915 = vpop.f32.mrb[0].mxu0
  %v2916 = vadd.f32 %v532, %v2915
  %v2917 = vpop.f32.mrb[0].mxu0
  %2918 = vmatprep.mubr.f32.mxu0 0.0
  %2919 = vmatmul.mubr.f32.gmra.mrb[0].mxu0 %v1004
  %v2920 = vpop.f32.mrb[0].mxu0
  %v2921 = vadd.f32 %v532, %v2920
  %v2922 = vpop.f32.mrb[0].mxu0
  %2923 = vmatprep.mubr.f32.mxu0 0.0
  %2924 = vmatmul.mubr.f32.gmra.mrb[0].mxu0 %v1007
  %v2925 = vpop.f32.mrb[0].mxu0
  %v2926 = vadd.f32 %v532, %v2925
  %v2927 = vpop.f32.mrb[0].mxu0
  %2928 = vmatprep.mubr.f32.mxu0 0.0
  %2929 = vmatmul.mubr.f32.gmra.mrb[0].mxu0 %v1010
  %v2930 = vpop.f32.mrb[0].mxu0
  %v2931 = vadd.f32 %v532, %v2930
  %v2932 = vpop.f32.mrb[0].mxu0
  %2933 = vmatprep.mubr.f32.mxu0 0.0
  %2934 = vmatmul.mubr.f32.gmra.mrb[0].mxu0 %v1013
  %v2935 = vpop.f32.mrb[0].mxu0
  %v2936 = vadd.f32 %v532, %v2935
  %v2937 = vpop.f32.mrb[0].mxu0
  %2938 = vmatprep.mubr.f32.mxu0 0.0
  %2939 = vmatmul.mubr.f32.gmra.mrb[0].mxu0 %v1016
  %v2940 = vpop.f32.mrb[0].mxu0
  %v2941 = vadd.f32 %v532, %v2940
  %v2942 = vpop.f32.mrb[0].mxu0
  %2943 = vmatprep.mubr.f32.mxu0 0.0
  %2944 = vmatmul.mubr.f32.gmra.mrb[0].mxu0 %v1019
  %v2945 = vpop.f32.mrb[0].mxu0
  %v2946 = vadd.f32 %v532, %v2945
  %v2947 = vpop.f32.mrb[0].mxu0
  %2948 = vmatprep.mubr.f32.mxu0 0.0
  %2949 = vmatmul.mubr.f32.gmra.mrb[0].mxu0 %v1022
  %v2950 = vpop.f32.mrb[0].mxu0
  %v2951 = vadd.f32 %v532, %v2950
  %v2952 = vpop.f32.mrb[0].mxu0
  %2953 = vmatprep.mubr.f32.mxu0 0.0
  %2954 = vmatmul.mubr.f32.gmra.mrb[0].mxu0 %v1025
  %v2955 = vpop.f32.mrb[0].mxu0
  %v2956 = vadd.f32 %v532, %v2955
  %v2957 = vpop.f32.mrb[0].mxu0
  %2958 = vmatprep.mubr.f32.mxu0 0.0
  %2959 = vmatmul.mubr.f32.gmra.mrb[0].mxu0 %v1028
  %v2960 = vpop.f32.mrb[0].mxu0
  %v2961 = vadd.f32 %v532, %v2960
  %v2962 = vpop.f32.mrb[0].mxu0
  %2963 = vmatprep.mubr.f32.mxu0 0.0
  %2964 = vmatmul.mubr.f32.gmra.mrb[0].mxu0 %v1031
  %v2965 = vpop.f32.mrb[0].mxu0
  %v2966 = vadd.f32 %v532, %v2965
  %v2967 = vpop.f32.mrb[0].mxu0
  %2968 = vmatprep.mubr.f32.mxu0 0.0
  %2969 = vmatmul.mubr.f32.gmra.mrb[0].mxu0 %v1034
  %v2970 = vpop.f32.mrb[0].mxu0
  %v2971 = vadd.f32 %v532, %v2970
  %v2972 = vpop.f32.mrb[0].mxu0
  %2973 = vmatprep.mubr.f32.mxu0 0.0
  %2974 = vmatmul.mubr.f32.gmra.mrb[0].mxu0 %v1037
  %v2975 = vpop.f32.mrb[0].mxu0
  %v2976 = vadd.f32 %v532, %v2975
  %v2977 = vpop.f32.mrb[0].mxu0
  %2978 = vmatprep.mubr.f32.mxu0 0.0
  %2979 = vmatmul.mubr.f32.gmra.mrb[0].mxu0 %v1040
  %v2980 = vpop.f32.mrb[0].mxu0
  %v2981 = vadd.f32 %v532, %v2980
  %v2982 = vpop.f32.mrb[0].mxu0
  %2983 = vmatprep.mubr.f32.mxu0 0.0
  %2984 = vmatmul.mubr.f32.gmra.mrb[0].mxu0 %v1043
  %v2985 = vpop.f32.mrb[0].mxu0
  %v2986 = vadd.f32 %v532, %v2985
  %v2987 = vpop.f32.mrb[0].mxu0
  %2988 = vmatprep.mubr.f32.mxu0 0.0
  %2989 = vmatmul.mubr.f32.gmra.mrb[0].mxu0 %v1046
  %v2990 = vpop.f32.mrb[0].mxu0
  %v2991 = vadd.f32 %v532, %v2990
  %v2992 = vpop.f32.mrb[0].mxu0
  %2993 = vmatprep.mubr.f32.mxu0 0.0
  %2994 = vmatmul.mubr.f32.gmra.mrb[0].mxu0 %v1049
  %v2995 = vpop.f32.mrb[0].mxu0
  %v2996 = vadd.f32 %v532, %v2995
  %v2997 = vpop.f32.mrb[0].mxu0
  %2998 = vmatprep.mubr.f32.mxu0 0.0
  %2999 = vmatmul.mubr.f32.gmra.mrb[0].mxu0 %v1052
  %v3000 = vpop.f32.mrb[0].mxu0
  %v3001 = vadd.f32 %v532, %v3000
  %v3002 = vpop.f32.mrb[0].mxu0
  %3003 = vmatprep.mubr.f32.mxu0 0.0
  %3004 = vmatmul.mubr.f32.gmra.mrb[0].mxu0 %v1055
  %v3005 = vpop.f32.mrb[0].mxu0
  %v3006 = vadd.f32 %v532, %v3005
  %v3007 = vpop.f32.mrb[0].mxu0
  %3008 = vmatprep.mubr.f32.mxu0 0.0
  %3009 = vmatmul.mubr.f32.gmra.mrb[0].mxu0 %v1058
  %v3010 = vpop.f32.mrb[0].mxu0
  %v3011 = vadd.f32 %v532, %v3010
  %v3012 = vpop.f32.mrb[0].mxu0
  %3013 = vmatprep.mubr.f32.mxu0 0.0
  %3014 = vmatmul.mubr.f32.gmra.mrb[0].mxu0 %v1061
  %v3015 = vpop.f32.mrb[0].mxu0
  %v3016 = vadd.f32 %v532, %v3015
  %v3017 = vpop.f32.mrb[0].mxu0
  %3018 = vmatprep.mubr.f32.mxu0 0.0
  %3019 = vmatmul.mubr.f32.gmra.mrb[0].mxu0 %v1064
  %v3020 = vpop.f32.mrb[0].mxu0
  %v3021 = vadd.f32 %v532, %v3020
  %v3022 = vpop.f32.mrb[0].mxu0
  %3023 = vmatprep.mubr.f32.mxu0 0.0
  %3024 = vmatmul.mubr.f32.gmra.mrb[0].mxu0 %v1067
  %v3025 = vpop.f32.mrb[0].mxu0
  %v3026 = vadd.f32 %v532, %v3025
  %v3027 = vpop.f32.mrb[0].mxu0
  %3028 = vmatprep.mubr.f32.mxu0 0.0
  %3029 = vmatmul.mubr.f32.gmra.mrb[0].mxu0 %v1070
  %v3030 = vpop.f32.mrb[0].mxu0
  %v3031 = vadd.f32 %v532, %v3030
  %v3032 = vpop.f32.mrb[0].mxu0
  %3033 = vmatprep.mubr.f32.mxu0 0.0
  %3034 = vmatmul.mubr.f32.gmra.mrb[0].mxu0 %v1073
  %v3035 = vpop.f32.mrb[0].mxu0
  %v3036 = vadd.f32 %v532, %v3035
  %v3037 = vpop.f32.mrb[0].mxu0
  %3038 = vmatprep.mubr.f32.mxu0 0.0
  %3039 = vmatmul.mubr.f32.gmra.mrb[0].mxu0 %v1076
  %v3040 = vpop.f32.mrb[0].mxu0
  %v3041 = vadd.f32 %v532, %v3040
  %v3042 = vpop.f32.mrb[0].mxu0
  %3043 = vmatprep.mubr.f32.mxu0 0.0
  %3044 = vmatmul.mubr.f32.gmra.mrb[0].mxu0 %v1079
  %v3045 = vpop.f32.mrb[0].mxu0
  %v3046 = vadd.f32 %v532, %v3045
  %v3047 = vpop.f32.mrb[0].mxu0
  %3048 = vmatprep.mubr.f32.mxu0 0.0
  %3049 = vmatmul.mubr.f32.gmra.mrb[0].mxu0 %v1082
  %v3050 = vpop.f32.mrb[0].mxu0
  %v3051 = vadd.f32 %v532, %v3050
  %v3052 = vpop.f32.mrb[0].mxu0
  %3053 = vmatprep.mubr.f32.mxu0 0.0
  %3054 = vmatmul.mubr.f32.gmra.mrb[0].mxu0 %v1085
  %v3055 = vpop.f32.mrb[0].mxu0
  %v3056 = vadd.f32 %v532, %v3055
  %v3057 = vpop.f32.mrb[0].mxu0
  %3058 = vmatprep.mubr.f32.mxu0 0.0
  %3059 = vmatmul.mubr.f32.gmra.mrb[0].mxu0 %v1088
  %v3060 = vpop.f32.mrb[0].mxu0
  %v3061 = vadd.f32 %v532, %v3060
  %v3062 = vpop.f32.mrb[0].mxu0
  %3063 = vmatprep.mubr.f32.mxu0 0.0
  %3064 = vmatmul.mubr.f32.gmra.mrb[0].mxu0 %v1091
  %v3065 = vpop.f32.mrb[0].mxu0
  %v3066 = vadd.f32 %v532, %v3065
  %v3067 = vpop.f32.mrb[0].mxu0
  %3068 = vmatprep.mubr.f32.mxu0 0.0
  %3069 = vmatmul.mubr.f32.gmra.mrb[0].mxu0 %v1094
  %v3070 = vpop.f32.mrb[0].mxu0
  %v3071 = vadd.f32 %v532, %v3070
  %v3072 = vpop.f32.mrb[0].mxu0
  %3073 = vmatprep.mubr.f32.mxu0 0.0
  %3074 = vmatmul.mubr.f32.gmra.mrb[0].mxu0 %v1097
  %v3075 = vpop.f32.mrb[0].mxu0
  %v3076 = vadd.f32 %v532, %v3075
  %v3077 = vpop.f32.mrb[0].mxu0
  %3078 = vmatprep.mubr.f32.mxu0 0.0
  %3079 = vmatmul.mubr.f32.gmra.mrb[0].mxu0 %v1100
  %v3080 = vpop.f32.mrb[0].mxu0
  %v3081 = vadd.f32 %v532, %v3080
  %v3082 = vpop.f32.mrb[0].mxu0
  %3083 = vmatprep.mubr.f32.mxu0 0.0
  %3084 = vmatmul.mubr.f32.gmra.mrb[0].mxu0 %v1103
  %v3085 = vpop.f32.mrb[0].mxu0
  %v3086 = vadd.f32 %v532, %v3085
  %v3087 = vpop.f32.mrb[0].mxu0
  %3088 = vmatprep.mubr.f32.mxu0 0.0
  %3089 = vmatmul.mubr.f32.gmra.mrb[0].mxu0 %v1106
  %v3090 = vpop.f32.mrb[0].mxu0
  %v3091 = vadd.f32 %v532, %v3090
  %v3092 = vpop.f32.mrb[0].mxu0
  %3093 = vmatprep.mubr.f32.mxu0 0.0
  %3094 = vmatmul.mubr.f32.gmra.mrb[0].mxu0 %v1109
  %v3095 = vpop.f32.mrb[0].mxu0
  %v3096 = vadd.f32 %v532, %v3095
  %v3097 = vpop.f32.mrb[0].mxu0
  %3098 = vmatprep.mubr.f32.mxu0 0.0
  %3099 = vmatmul.mubr.f32.gmra.mrb[0].mxu0 %v1112
  %v3100 = vpop.f32.mrb[0].mxu0
  %v3101 = vadd.f32 %v532, %v3100
  %v3102 = vpop.f32.mrb[0].mxu0
  %3103 = vmatprep.mubr.f32.mxu0 0.0
  %3104 = vmatmul.mubr.f32.gmra.mrb[0].mxu0 %v1115
  %v3105 = vpop.f32.mrb[0].mxu0
  %v3106 = vadd.f32 %v532, %v3105
  %v3107 = vpop.f32.mrb[0].mxu0
  %3108 = vmatprep.mubr.f32.mxu0 0.0
  %3109 = vmatmul.mubr.f32.gmra.mrb[0].mxu0 %v1118
  %v3110 = vpop.f32.mrb[0].mxu0
  %v3111 = vadd.f32 %v532, %v3110
  %v3112 = vpop.f32.mrb[0].mxu0
  %3113 = vmatprep.mubr.f32.mxu0 0.0
  %3114 = vmatmul.mubr.f32.gmra.mrb[0].mxu0 %v1121
  %v3115 = vpop.f32.mrb[0].mxu0
  %v3116 = vadd.f32 %v532, %v3115
  %v3117 = vpop.f32.mrb[0].mxu0
  %3118 = vmatprep.mubr.f32.mxu0 0.0
  %3119 = vmatmul.mubr.f32.gmra.mrb[0].mxu0 %v1124
  %v3120 = vpop.f32.mrb[0].mxu0
  %v3121 = vadd.f32 %v532, %v3120
  %v3122 = vpop.f32.mrb[0].mxu0
  %3123 = vmatprep.mubr.f32.mxu0 0.0
  %3124 = vmatmul.mubr.f32.gmra.mrb[0].mxu0 %v1127
  %v3125 = vpop.f32.mrb[0].mxu0
  %v3126 = vadd.f32 %v532, %v3125
  %v3127 = vpop.f32.mrb[0].mxu0
  %3128 = vmatprep.mubr.f32.mxu0 0.0
  %3129 = vmatmul.mubr.f32.gmra.mrb[0].mxu0 %v1130
  %v3130 = vpop.f32.mrb[0].mxu0
  %v3131 = vadd.f32 %v532, %v3130
  %v3132 = vpop.f32.mrb[0].mxu0
  %3133 = vmatprep.mubr.f32.mxu0 0.0
  %3134 = vmatmul.mubr.f32.gmra.mrb[0].mxu0 %v1133
  %v3135 = vpop.f32.mrb[0].mxu0
  %v3136 = vadd.f32 %v532, %v3135
  %v3137 = vpop.f32.mrb[0].mxu0
  %3138 = vmatprep.mubr.f32.mxu0 0.0
  %3139 = vmatmul.mubr.f32.gmra.mrb[0].mxu0 %v1136
  %v3140 = vpop.f32.mrb[0].mxu0
  %v3141 = vadd.f32 %v532, %v3140
  %v3142 = vpop.f32.mrb[0].mxu0
  %3143 = vmatprep.mubr.f32.mxu0 0.0
  %3144 = vmatmul.mubr.f32.gmra.mrb[0].mxu0 %v1139
  %v3145 = vpop.f32.mrb[0].mxu0
  %v3146 = vadd.f32 %v532, %v3145
  %v3147 = vpop.f32.mrb[0].mxu0
  %3148 = vmatprep.mubr.f32.mxu0 0.0
  %3149 = vmatmul.mubr.f32.gmra.mrb[0].mxu0 %v1142
  %v3150 = vpop.f32.mrb[0].mxu0
  %v3151 = vadd.f32 %v532, %v3150
  %v3152 = vpop.f32.mrb[0].mxu0
  %3153 = vmatprep.mubr.f32.mxu0 0.0
  %3154 = vmatmul.mubr.f32.gmra.mrb[0].mxu0 %v1145
  %v3155 = vpop.f32.mrb[0].mxu0
  %v3156 = vadd.f32 %v532, %v3155
  %v3157 = vpop.f32.mrb[0].mxu0
  %3158 = vmatprep.mubr.f32.mxu0 0.0
  %3159 = vmatmul.mubr.f32.gmra.mrb[0].mxu0 %v1148
  %v3160 = vpop.f32.mrb[0].mxu0
  %v3161 = vadd.f32 %v532, %v3160
  %v3162 = vpop.f32.mrb[0].mxu0
  %3163 = vmatprep.mubr.f32.mxu0 0.0
  %3164 = vmatmul.mubr.f32.gmra.mrb[0].mxu0 %v1151
  %v3165 = vpop.f32.mrb[0].mxu0
  %v3166 = vadd.f32 %v532, %v3165
  %v3167 = vpop.f32.mrb[0].mxu0
  %3168 = vmatprep.mubr.f32.mxu0 0.0
  %3169 = vmatmul.mubr.f32.gmra.mrb[0].mxu0 %v1154
  %v3170 = vpop.f32.mrb[0].mxu0
  %v3171 = vadd.f32 %v532, %v3170
  %v3172 = vpop.f32.mrb[0].mxu0
  %3173 = vmatprep.mubr.f32.mxu0 0.0
  %3174 = vmatmul.mubr.f32.gmra.mrb[0].mxu0 %v1157
  %v3175 = vpop.f32.mrb[0].mxu0
  %v3176 = vadd.f32 %v532, %v3175
  %v3177 = vpop.f32.mrb[0].mxu0
  %3178 = vmatprep.mubr.f32.mxu0 0.0
  %3179 = vmatmul.mubr.f32.gmra.mrb[0].mxu0 %v1160
  %v3180 = vpop.f32.mrb[0].mxu0
  %v3181 = vadd.f32 %v532, %v3180
  %v3182 = vpop.f32.mrb[0].mxu0
  %3183 = vmatprep.mubr.f32.mxu0 0.0
  %3184 = vmatmul.mubr.f32.gmra.mrb[0].mxu0 %v1163
  %v3185 = vpop.f32.mrb[0].mxu0
  %v3186 = vadd.f32 %v532, %v3185
  %v3187 = vpop.f32.mrb[0].mxu0
  %3188 = vmatprep.mubr.f32.mxu0 0.0
  %3189 = vmatmul.mubr.f32.gmra.mrb[0].mxu0 %v1166
  %v3190 = vpop.f32.mrb[0].mxu0
  %v3191 = vadd.f32 %v532, %v3190
  %v3192 = vpop.f32.mrb[0].mxu0
  %3193 = vmatprep.mubr.f32.mxu0 0.0
  %3194 = vmatmul.mubr.f32.gmra.mrb[0].mxu0 %v1169
  %v3195 = vpop.f32.mrb[0].mxu0
  %v3196 = vadd.f32 %v532, %v3195
  %v3197 = vpop.f32.mrb[0].mxu0
  %3198 = vmatprep.mubr.f32.mxu0 0.0
  %3199 = vmatmul.mubr.f32.gmra.mrb[0].mxu0 %v1172
  %v3200 = vpop.f32.mrb[0].mxu0
  %v3201 = vadd.f32 %v532, %v3200
  %v3202 = vpop.f32.mrb[0].mxu0
  %3203 = vmatprep.mubr.f32.mxu0 0.0
  %3204 = vmatmul.mubr.f32.gmra.mrb[0].mxu0 %v1175
  %v3205 = vpop.f32.mrb[0].mxu0
  %v3206 = vadd.f32 %v532, %v3205
  %v3207 = vpop.f32.mrb[0].mxu0
  %3208 = vmatprep.mubr.f32.mxu0 0.0
  %3209 = vmatmul.mubr.f32.gmra.mrb[0].mxu0 %v1178
  %v3210 = vpop.f32.mrb[0].mxu0
  %v3211 = vadd.f32 %v532, %v3210
  %v3212 = vpop.f32.mrb[0].mxu0
  %3213 = vmatprep.mubr.f32.mxu0 0.0
  %3214 = vmatmul.mubr.f32.gmra.mrb[0].mxu0 %v1181
  %v3215 = vpop.f32.mrb[0].mxu0
  %v3216 = vadd.f32 %v532, %v3215
  %v3217 = vpop.f32.mrb[0].mxu0
  %3218 = vmatprep.mubr.f32.mxu0 0.0
  %3219 = vmatmul.mubr.f32.gmra.mrb[0].mxu0 %v1184
  %v3220 = vpop.f32.mrb[0].mxu0
  %v3221 = vadd.f32 %v532, %v3220
  %v3222 = vpop.f32.mrb[0].mxu0
  %3223 = vmatprep.mubr.f32.mxu0 0.0
  %3224 = vmatmul.mubr.f32.gmra.mrb[0].mxu0 %v1187
  %v3225 = vpop.f32.mrb[0].mxu0
  %v3226 = vadd.f32 %v532, %v3225
  %v3227 = vpop.f32.mrb[0].mxu0
  %3228 = vmatprep.mubr.f32.mxu0 0.0
  %3229 = vmatmul.mubr.f32.gmra.mrb[0].mxu0 %v1190
  %v3230 = vpop.f32.mrb[0].mxu0
  %v3231 = vadd.f32 %v532, %v3230
  %v3232 = vpop.f32.mrb[0].mxu0
  %3233 = vmatprep.mubr.f32.mxu0 0.0
  %3234 = vmatmul.mubr.f32.gmra.mrb[0].mxu0 %v1193
  %v3235 = vpop.f32.mrb[0].mxu0
  %v3236 = vadd.f32 %v532, %v3235
  %v3237 = vpop.f32.mrb[0].mxu0
  %3238 = vmatprep.mubr.f32.mxu0 0.0
  %3239 = vmatmul.mubr.f32.gmra.mrb[0].mxu0 %v1196
  %v3240 = vpop.f32.mrb[0].mxu0
  %v3241 = vadd.f32 %v532, %v3240
  %v3242 = vpop.f32.mrb[0].mxu0
  %3243 = vmatprep.mubr.f32.mxu0 0.0
  %3244 = vmatmul.mubr.f32.gmra.mrb[0].mxu0 %v1199
  %v3245 = vpop.f32.mrb[0].mxu0
  %v3246 = vadd.f32 %v532, %v3245
  %v3247 = vpop.f32.mrb[0].mxu0
  %3248 = vmatprep.mubr.f32.mxu0 0.0
  %3249 = vmatmul.mubr.f32.gmra.mrb[0].mxu0 %v1202
  %v3250 = vpop.f32.mrb[0].mxu0
  %v3251 = vadd.f32 %v532, %v3250
  %v3252 = vpop.f32.mrb[0].mxu0
  %3253 = vmatprep.mubr.f32.mxu0 0.0
  %3254 = vmatmul.mubr.f32.gmra.mrb[0].mxu0 %v1205
  %v3255 = vpop.f32.mrb[0].mxu0
  %v3256 = vadd.f32 %v532, %v3255
  %v3257 = vpop.f32.mrb[0].mxu0
  %3258 = vmatprep.mubr.f32.mxu0 0.0
  %3259 = vmatmul.mubr.f32.gmra.mrb[0].mxu0 %v1208
  %v3260 = vpop.f32.mrb[0].mxu0
  %v3261 = vadd.f32 %v532, %v3260
  %v3262 = vpop.f32.mrb[0].mxu0
  %3263 = vmatprep.mubr.f32.mxu0 0.0
  %3264 = vmatmul.mubr.f32.gmra.mrb[0].mxu0 %v1211
  %v3265 = vpop.f32.mrb[0].mxu0
  %v3266 = vadd.f32 %v532, %v3265
  %v3267 = vpop.f32.mrb[0].mxu0
  %3268 = vmatprep.mubr.f32.mxu0 0.0
  %3269 = vmatmul.mubr.f32.gmra.mrb[0].mxu0 %v1214
  %v3270 = vpop.f32.mrb[0].mxu0
  %v3271 = vadd.f32 %v532, %v3270
  %v3272 = vpop.f32.mrb[0].mxu0
  %3273 = vmatprep.mubr.f32.mxu0 0.0
  %3274 = vmatmul.mubr.f32.gmra.mrb[0].mxu0 %v1217
  %v3275 = vpop.f32.mrb[0].mxu0
  %v3276 = vadd.f32 %v532, %v3275
  %v3277 = vpop.f32.mrb[0].mxu0
  %3278 = vmatprep.mubr.f32.mxu0 0.0
  %3279 = vmatmul.mubr.f32.gmra.mrb[0].mxu0 %v1220
  %v3280 = vpop.f32.mrb[0].mxu0
  %v3281 = vadd.f32 %v532, %v3280
  %v3282 = vpop.f32.mrb[0].mxu0
  %3283 = vmatprep.mubr.f32.mxu0 0.0
  %3284 = vmatmul.mubr.f32.gmra.mrb[0].mxu0 %v1223
  %v3285 = vpop.f32.mrb[0].mxu0
  %v3286 = vadd.f32 %v532, %v3285
  %v3287 = vpop.f32.mrb[0].mxu0
  %3288 = vmatprep.mubr.f32.mxu0 0.0
  %3289 = vmatmul.mubr.f32.gmra.mrb[0].mxu0 %v1226
  %v3290 = vpop.f32.mrb[0].mxu0
  %v3291 = vadd.f32 %v532, %v3290
  %v3292 = vpop.f32.mrb[0].mxu0
  %3293 = vmatprep.mubr.f32.mxu0 0.0
  %3294 = vmatmul.mubr.f32.gmra.mrb[0].mxu0 %v1229
  %v3295 = vpop.f32.mrb[0].mxu0
  %v3296 = vadd.f32 %v532, %v3295
  %v3297 = vpop.f32.mrb[0].mxu0
  %3298 = vmatprep.mubr.f32.mxu0 0.0
  %3299 = vmatmul.mubr.f32.gmra.mrb[0].mxu0 %v1232
  %v3300 = vpop.f32.mrb[0].mxu0
  %v3301 = vadd.f32 %v532, %v3300
  %v3302 = vpop.f32.mrb[0].mxu0
  %3303 = vmatprep.mubr.f32.mxu0 0.0
  %3304 = vmatmul.mubr.f32.gmra.mrb[0].mxu0 %v1235
  %v3305 = vpop.f32.mrb[0].mxu0
  %v3306 = vadd.f32 %v532, %v3305
  %v3307 = vpop.f32.mrb[0].mxu0
  %3308 = vmatprep.mubr.f32.mxu0 0.0
  %3309 = vmatmul.mubr.f32.gmra.mrb[0].mxu0 %v1238
  %v3310 = vpop.f32.mrb[0].mxu0
  %v3311 = vadd.f32 %v532, %v3310
  %v3312 = vpop.f32.mrb[0].mxu0
  %3313 = vmatprep.mubr.f32.mxu0 0.0
  %3314 = vmatmul.mubr.f32.gmra.mrb[0].mxu0 %v1241
  %v3315 = vpop.f32.mrb[0].mxu0
  %v3316 = vadd.f32 %v532, %v3315
  %v3317 = vpop.f32.mrb[0].mxu0
  %3318 = vmatprep.mubr.f32.mxu0 0.0
  %3319 = vmatmul.mubr.f32.gmra.mrb[0].mxu0 %v1244
  %v3320 = vpop.f32.mrb[0].mxu0
  %v3321 = vadd.f32 %v532, %v3320
  %v3322 = vpop.f32.mrb[0].mxu0
  %3323 = vmatprep.mubr.f32.mxu0 0.0
  %3324 = vmatmul.mubr.f32.gmra.mrb[0].mxu0 %v1247
  %v3325 = vpop.f32.mrb[0].mxu0
  %v3326 = vadd.f32 %v532, %v3325
  %v3327 = vpop.f32.mrb[0].mxu0
  %3328 = vmatprep.mubr.f32.mxu0 0.0
  %3329 = vmatmul.mubr.f32.gmra.mrb[0].mxu0 %v1250
  %v3330 = vpop.f32.mrb[0].mxu0
  %v3331 = vadd.f32 %v532, %v3330
  %v3332 = vpop.f32.mrb[0].mxu0
  %3333 = vmatprep.mubr.f32.mxu0 0.0
  %3334 = vmatmul.mubr.f32.gmra.mrb[0].mxu0 %v1253
  %v3335 = vpop.f32.mrb[0].mxu0
  %v3336 = vadd.f32 %v532, %v3335
  %v3337 = vpop.f32.mrb[0].mxu0
  %3338 = vmatprep.mubr.f32.mxu0 0.0
  %3339 = vmatmul.mubr.f32.gmra.mrb[0].mxu0 %v1256
  %v3340 = vpop.f32.mrb[0].mxu0
  %v3341 = vadd.f32 %v532, %v3340
  %v3342 = vpop.f32.mrb[0].mxu0
  %3343 = vmatprep.mubr.f32.mxu0 0.0
  %3344 = vmatmul.mubr.f32.gmra.mrb[0].mxu0 %v1259
  %v3345 = vpop.f32.mrb[0].mxu0
  %v3346 = vadd.f32 %v532, %v3345
  %v3347 = vpop.f32.mrb[0].mxu0
  %3348 = vmatprep.mubr.f32.mxu0 0.0
  %3349 = vmatmul.mubr.f32.gmra.mrb[0].mxu0 %v1262
  %v3350 = vpop.f32.mrb[0].mxu0
  %v3351 = vadd.f32 %v532, %v3350
  %v3352 = vpop.f32.mrb[0].mxu0
  %3353 = vmatprep.mubr.f32.mxu0 0.0
  %3354 = vmatmul.mubr.f32.gmra.mrb[0].mxu0 %v1265
  %v3355 = vpop.f32.mrb[0].mxu0
  %v3356 = vadd.f32 %v532, %v3355
  %v3357 = vpop.f32.mrb[0].mxu0
  %3358 = vmatprep.mubr.f32.mxu0 0.0
  %3359 = vmatmul.mubr.f32.gmra.mrb[0].mxu0 %v1268
  %v3360 = vpop.f32.mrb[0].mxu0
  %v3361 = vadd.f32 %v532, %v3360
  %v3362 = vpop.f32.mrb[0].mxu0
  %3363 = vmatprep.mubr.f32.mxu0 0.0
  %3364 = vmatmul.mubr.f32.gmra.mrb[0].mxu0 %v1271
  %v3365 = vpop.f32.mrb[0].mxu0
  %v3366 = vadd.f32 %v532, %v3365
  %v3367 = vpop.f32.mrb[0].mxu0
  %3368 = vmatprep.mubr.f32.mxu0 0.0
  %3369 = vmatmul.mubr.f32.gmra.mrb[0].mxu0 %v1274
  %v3370 = vpop.f32.mrb[0].mxu0
  %v3371 = vadd.f32 %v532, %v3370
  %v3372 = vpop.f32.mrb[0].mxu0
  %3373 = vmatprep.mubr.f32.mxu0 0.0
  %3374 = vmatmul.mubr.f32.gmra.mrb[0].mxu0 %v1277
  %v3375 = vpop.f32.mrb[0].mxu0
  %v3376 = vadd.f32 %v532, %v3375
  %v3377 = vpop.f32.mrb[0].mxu0
  %3378 = vmatprep.mubr.f32.mxu0 0.0
  %3379 = vmatmul.mubr.f32.gmra.mrb[0].mxu0 %v1280
  %v3380 = vpop.f32.mrb[0].mxu0
  %v3381 = vadd.f32 %v532, %v3380
  %v3382 = vpop.f32.mrb[0].mxu0
  %3383 = vmatprep.mubr.f32.mxu0 0.0
  %3384 = vmatmul.mubr.f32.gmra.mrb[0].mxu0 %v1283
  %v3385 = vpop.f32.mrb[0].mxu0
  %v3386 = vadd.f32 %v532, %v3385
  %v3387 = vpop.f32.mrb[0].mxu0
  %3388 = vmatprep.mubr.f32.mxu0 0.0
  %3389 = vmatmul.mubr.f32.gmra.mrb[0].mxu0 %v1286
  %v3390 = vpop.f32.mrb[0].mxu0
  %v3391 = vadd.f32 %v532, %v3390
  %v3392 = vpop.f32.mrb[0].mxu0
  %3393 = vmatprep.mubr.f32.mxu0 0.0
  %3394 = vmatmul.mubr.f32.gmra.mrb[0].mxu0 %v1289
  %v3395 = vpop.f32.mrb[0].mxu0
  %v3396 = vadd.f32 %v532, %v3395
  %v3397 = vpop.f32.mrb[0].mxu0
  %3398 = vmatprep.mubr.f32.mxu0 0.0
  %3399 = vmatmul.mubr.f32.gmra.mrb[0].mxu0 %v1292
  %v3400 = vpop.f32.mrb[0].mxu0
  %v3401 = vadd.f32 %v532, %v3400
  %v3402 = vpop.f32.mrb[0].mxu0
  %3403 = vmatprep.mubr.f32.mxu0 0.0
  %3404 = vmatmul.mubr.f32.gmra.mrb[0].mxu0 %v1295
  %v3405 = vpop.f32.mrb[0].mxu0
  %v3406 = vadd.f32 %v532, %v3405
  %v3407 = vpop.f32.mrb[0].mxu0
  %3408 = vmatprep.mubr.f32.mxu0 0.0
  %3409 = vmatmul.mubr.f32.gmra.mrb[0].mxu0 %v1298
  %v3410 = vpop.f32.mrb[0].mxu0
  %v3411 = vadd.f32 %v532, %v3410
  %v3412 = vpop.f32.mrb[0].mxu0
  %3413 = vmatprep.mubr.f32.mxu0 0.0
  %3414 = vmatmul.mubr.f32.gmra.mrb[0].mxu0 %v1301
  %v3415 = vpop.f32.mrb[0].mxu0
  %v3416 = vadd.f32 %v532, %v3415
  %v3417 = vpop.f32.mrb[0].mxu0
  %3418 = vmatprep.mubr.f32.mxu0 0.0
  %3419 = vmatmul.mubr.f32.gmra.mrb[0].mxu0 %v1304
  %v3420 = vpop.f32.mrb[0].mxu0
  %v3421 = vadd.f32 %v532, %v3420
  %v3422 = vpop.f32.mrb[0].mxu0
  %3423 = vmatprep.mubr.f32.mxu0 0.0
  %3424 = vmatmul.mubr.f32.gmra.mrb[0].mxu0 %v1307
  %v3425 = vpop.f32.mrb[0].mxu0
  %v3426 = vadd.f32 %v532, %v3425
  %v3427 = vpop.f32.mrb[0].mxu0
  %3428 = vmatprep.mubr.f32.mxu0 0.0
  %3429 = vmatmul.mubr.f32.gmra.mrb[0].mxu0 %v1310
  %v3430 = vpop.f32.mrb[0].mxu0
  %v3431 = vadd.f32 %v532, %v3430
  %v3432 = vpop.f32.mrb[0].mxu0
  %3433 = vmatprep.mubr.f32.mxu0 0.0
  %3434 = vmatmul.mubr.f32.gmra.mrb[0].mxu0 %v1313
  %v3435 = vpop.f32.mrb[0].mxu0
  %v3436 = vadd.f32 %v532, %v3435
  %v3437 = vpop.f32.mrb[0].mxu0
  %3438 = vmatprep.mubr.f32.mxu0 0.0
  %3439 = vmatmul.mubr.f32.gmra.mrb[0].mxu0 %v1316
  %v3440 = vpop.f32.mrb[0].mxu0
  %v3441 = vadd.f32 %v532, %v3440
  %v3442 = vpop.f32.mrb[0].mxu0
  %3443 = vmatprep.mubr.f32.mxu0 0.0
  %3444 = vmatmul.mubr.f32.gmra.mrb[0].mxu0 %v1319
  %v3445 = vpop.f32.mrb[0].mxu0
  %v3446 = vadd.f32 %v532, %v3445
  %v3447 = vpop.f32.mrb[0].mxu0
  %3448 = vmatprep.mubr.f32.mxu0 0.0
  %3449 = vmatmul.mubr.f32.gmra.mrb[0].mxu0 %v1322
  %v3450 = vpop.f32.mrb[0].mxu0
  %v3451 = vadd.f32 %v532, %v3450
  %v3452 = vpop.f32.mrb[0].mxu0
  %3453 = vmatprep.mubr.f32.mxu0 0.0
  %3454 = vmatmul.mubr.f32.gmra.mrb[0].mxu0 %v1325
  %v3455 = vpop.f32.mrb[0].mxu0
  %v3456 = vadd.f32 %v532, %v3455
  %v3457 = vpop.f32.mrb[0].mxu0
  %3458 = vmatprep.mubr.f32.mxu0 0.0
  %3459 = vmatmul.mubr.f32.gmra.mrb[0].mxu0 %v1328
  %v3460 = vpop.f32.mrb[0].mxu0
  %v3461 = vadd.f32 %v532, %v3460
  %v3462 = vpop.f32.mrb[0].mxu0
  %3463 = vmatprep.mubr.f32.mxu0 0.0
  %3464 = vmatmul.mubr.f32.gmra.mrb[0].mxu0 %v1331
  %v3465 = vpop.f32.mrb[0].mxu0
  %v3466 = vadd.f32 %v532, %v3465
  %v3467 = vpop.f32.mrb[0].mxu0
  %3468 = vmatprep.mubr.f32.mxu0 0.0
  %3469 = vmatmul.mubr.f32.gmra.mrb[0].mxu0 %v1334
  %v3470 = vpop.f32.mrb[0].mxu0
  %v3471 = vadd.f32 %v532, %v3470
  %v3472 = vpop.f32.mrb[0].mxu0
  %3473 = vmatprep.mubr.f32.mxu0 0.0
  %3474 = vmatmul.mubr.f32.gmra.mrb[0].mxu0 %v1337
  %v3475 = vpop.f32.mrb[0].mxu0
  %v3476 = vadd.f32 %v532, %v3475
  %v3477 = vpop.f32.mrb[0].mxu0
  %3478 = vmatprep.mubr.f32.mxu0 0.0
  %3479 = vmatmul.mubr.f32.gmra.mrb[0].mxu0 %v1340
  %v3480 = vpop.f32.mrb[0].mxu0
  %v3481 = vadd.f32 %v532, %v3480
  %v3482 = vpop.f32.mrb[0].mxu0
  %3483 = vmatprep.mubr.f32.mxu0 0.0
  %3484 = vmatmul.mubr.f32.gmra.mrb[0].mxu0 %v1343
  %v3485 = vpop.f32.mrb[0].mxu0
  %v3486 = vadd.f32 %v532, %v3485
  %v3487 = vpop.f32.mrb[0].mxu0
  %3488 = vmatprep.mubr.f32.mxu0 0.0
  %3489 = vmatmul.mubr.f32.gmra.mrb[0].mxu0 %v1346
  %v3490 = vpop.f32.mrb[0].mxu0
  %v3491 = vadd.f32 %v532, %v3490
  %v3492 = vpop.f32.mrb[0].mxu0
  %3493 = vmatprep.mubr.f32.mxu0 0.0
  %3494 = vmatmul.mubr.f32.gmra.mrb[0].mxu0 %v1349
  %v3495 = vpop.f32.mrb[0].mxu0
  %v3496 = vadd.f32 %v532, %v3495
  %v3497 = vpop.f32.mrb[0].mxu0
  %3498 = vmatprep.mubr.f32.mxu0 0.0
  %3499 = vmatmul.mubr.f32.gmra.mrb[0].mxu0 %v1352
  %v3500 = vpop.f32.mrb[0].mxu0
  %v3501 = vadd.f32 %v532, %v3500
  %v3502 = vpop.f32.mrb[0].mxu0
  %3503 = vmatprep.mubr.f32.mxu0 0.0
  %3504 = vmatmul.mubr.f32.gmra.mrb[0].mxu0 %v1355
  %v3505 = vpop.f32.mrb[0].mxu0
  %v3506 = vadd.f32 %v532, %v3505
  %v3507 = vpop.f32.mrb[0].mxu0
  %3508 = vmatprep.mubr.f32.mxu0 0.0
  %3509 = vmatmul.mubr.f32.gmra.mrb[0].mxu0 %v1358
  %v3510 = vpop.f32.mrb[0].mxu0
  %v3511 = vadd.f32 %v532, %v3510
  %v3512 = vpop.f32.mrb[0].mxu0
  %3513 = vmatprep.mubr.f32.mxu0 0.0
  %3514 = vmatmul.mubr.f32.gmra.mrb[0].mxu0 %v1361
  %v3515 = vpop.f32.mrb[0].mxu0
  %v3516 = vadd.f32 %v532, %v3515
  %v3517 = vpop.f32.mrb[0].mxu0
  %3518 = vmatprep.mubr.f32.mxu0 0.0
  %3519 = vmatmul.mubr.f32.gmra.mrb[0].mxu0 %v1364
  %v3520 = vpop.f32.mrb[0].mxu0
  %v3521 = vadd.f32 %v532, %v3520
  %v3522 = vpop.f32.mrb[0].mxu0
  %3523 = vmatprep.mubr.f32.mxu0 0.0
  %3524 = vmatmul.mubr.f32.gmra.mrb[0].mxu0 %v1367
  %v3525 = vpop.f32.mrb[0].mxu0
  %v3526 = vadd.f32 %v532, %v3525
  %v3527 = vpop.f32.mrb[0].mxu0
  %3528 = vmatprep.mubr.f32.mxu0 0.0
  %3529 = vmatmul.mubr.f32.gmra.mrb[0].mxu0 %v1370
  %v3530 = vpop.f32.mrb[0].mxu0
  %v3531 = vadd.f32 %v532, %v3530
  %v3532 = vpop.f32.mrb[0].mxu0
  %3533 = vmatprep.mubr.f32.mxu0 0.0
  %3534 = vmatmul.mubr.f32.gmra.mrb[0].mxu0 %v1373
  %v3535 = vpop.f32.mrb[0].mxu0
  %v3536 = vadd.f32 %v532, %v3535
  %v3537 = vpop.f32.mrb[0].mxu0
  %3538 = vmatprep.mubr.f32.mxu0 0.0
  %3539 = vmatmul.mubr.f32.gmra.mrb[0].mxu0 %v1376
  %v3540 = vpop.f32.mrb[0].mxu0
  %v3541 = vadd.f32 %v532, %v3540
  %v3542 = vpop.f32.mrb[0].mxu0
  %3543 = vmatprep.mubr.f32.mxu0 0.0
  %3544 = vmatmul.mubr.f32.gmra.mrb[0].mxu0 %v1379
  %v3545 = vpop.f32.mrb[0].mxu0
  %v3546 = vadd.f32 %v532, %v3545
  %v3547 = vpop.f32.mrb[0].mxu0
  %3548 = vmatprep.mubr.f32.mxu0 0.0
  %3549 = vmatmul.mubr.f32.gmra.mrb[0].mxu0 %v1382
  %v3550 = vpop.f32.mrb[0].mxu0
  %v3551 = vadd.f32 %v532, %v3550
  %v3552 = vpop.f32.mrb[0].mxu0
  %3553 = vmatprep.mubr.f32.mxu0 0.0
  %3554 = vmatmul.mubr.f32.gmra.mrb[0].mxu0 %v1385
  %v3555 = vpop.f32.mrb[0].mxu0
  %v3556 = vadd.f32 %v532, %v3555
  %v3557 = vpop.f32.mrb[0].mxu0
  %3558 = vmatprep.mubr.f32.mxu0 0.0
  %3559 = vmatmul.mubr.f32.gmra.mrb[0].mxu0 %v1388
  %v3560 = vpop.f32.mrb[0].mxu0
  %v3561 = vadd.f32 %v532, %v3560
  %v3562 = vpop.f32.mrb[0].mxu0
  %3563 = vmatprep.mubr.f32.mxu0 0.0
  %3564 = vmatmul.mubr.f32.gmra.mrb[0].mxu0 %v1391
  %v3565 = vpop.f32.mrb[0].mxu0
  %v3566 = vadd.f32 %v532, %v3565
  %v3567 = vpop.f32.mrb[0].mxu0
  %3568 = vmatprep.mubr.f32.mxu0 0.0
  %3569 = vmatmul.mubr.f32.gmra.mrb[0].mxu0 %v1394
  %v3570 = vpop.f32.mrb[0].mxu0
  %v3571 = vadd.f32 %v532, %v3570
  %v3572 = vpop.f32.mrb[0].mxu0
  %3573 = vmatprep.mubr.f32.mxu0 0.0
  %3574 = vmatmul.mubr.f32.gmra.mrb[0].mxu0 %v1397
  %v3575 = vpop.f32.mrb[0].mxu0
  %v3576 = vadd.f32 %v532, %v3575
  %v3577 = vpop.f32.mrb[0].mxu0
  %3578 = vmatprep.mubr.f32.mxu0 0.0
  %3579 = vmatmul.mubr.f32.gmra.mrb[0].mxu0 %v1400
  %v3580 = vpop.f32.mrb[0].mxu0
  %v3581 = vadd.f32 %v532, %v3580
  %v3582 = vpop.f32.mrb[0].mxu0
  %3583 = vmatprep.mubr.f32.mxu0 0.0
  %3584 = vmatmul.mubr.f32.gmra.mrb[0].mxu0 %v1403
  %v3585 = vpop.f32.mrb[0].mxu0
  %v3586 = vadd.f32 %v532, %v3585
  %v3587 = vpop.f32.mrb[0].mxu0
  %3588 = vmatprep.mubr.f32.mxu0 0.0
  %3589 = vmatmul.mubr.f32.gmra.mrb[0].mxu0 %v1406
  %v3590 = vpop.f32.mrb[0].mxu0
  %v3591 = vadd.f32 %v532, %v3590
  %v3592 = vpop.f32.mrb[0].mxu0
  %3593 = vmatprep.mubr.f32.mxu0 0.0
  %3594 = vmatmul.mubr.f32.gmra.mrb[0].mxu0 %v1409
  %v3595 = vpop.f32.mrb[0].mxu0
  %v3596 = vadd.f32 %v532, %v3595
  %v3597 = vpop.f32.mrb[0].mxu0
  %3598 = vmatprep.mubr.f32.mxu0 0.0
  %3599 = vmatmul.mubr.f32.gmra.mrb[0].mxu0 %v1412
  %v3600 = vpop.f32.mrb[0].mxu0
  %v3601 = vadd.f32 %v532, %v3600
  %v3602 = vpop.f32.mrb[0].mxu0
  %3603 = vmatprep.mubr.f32.mxu0 0.0
  %3604 = vmatmul.mubr.f32.gmra.mrb[0].mxu0 %v1415
  %v3605 = vpop.f32.mrb[0].mxu0
  %v3606 = vadd.f32 %v532, %v3605
  %v3607 = vpop.f32.mrb[0].mxu0
  %3608 = vmatprep.mubr.f32.mxu0 0.0
  %3609 = vmatmul.mubr.f32.gmra.mrb[0].mxu0 %v1418
  %v3610 = vpop.f32.mrb[0].mxu0
  %v3611 = vadd.f32 %v532, %v3610
  %v3612 = vpop.f32.mrb[0].mxu0
  %3613 = vmatprep.mubr.f32.mxu0 0.0
  %3614 = vmatmul.mubr.f32.gmra.mrb[0].mxu0 %v1421
  %v3615 = vpop.f32.mrb[0].mxu0
  %v3616 = vadd.f32 %v532, %v3615
  %v3617 = vpop.f32.mrb[0].mxu0
  %3618 = vmatprep.mubr.f32.mxu0 0.0
  %3619 = vmatmul.mubr.f32.gmra.mrb[0].mxu0 %v1424
  %v3620 = vpop.f32.mrb[0].mxu0
  %v3621 = vadd.f32 %v532, %v3620
  %v3622 = vpop.f32.mrb[0].mxu0
  %3623 = vmatprep.mubr.f32.mxu0 0.0
  %3624 = vmatmul.mubr.f32.gmra.mrb[0].mxu0 %v1427
  %v3625 = vpop.f32.mrb[0].mxu0
  %v3626 = vadd.f32 %v532, %v3625
  %v3627 = vpop.f32.mrb[0].mxu0
  %3628 = vmatprep.mubr.f32.mxu0 0.0
  %3629 = vmatmul.mubr.f32.gmra.mrb[0].mxu0 %v1430
  %v3630 = vpop.f32.mrb[0].mxu0
  %v3631 = vadd.f32 %v532, %v3630
  %v3632 = vpop.f32.mrb[0].mxu0
  %3633 = vmatprep.mubr.f32.mxu0 0.0
  %3634 = vmatmul.mubr.f32.gmra.mrb[0].mxu0 %v1433
  %v3635 = vpop.f32.mrb[0].mxu0
  %v3636 = vadd.f32 %v532, %v3635
  %v3637 = vpop.f32.mrb[0].mxu0
  %3638 = vmatprep.mubr.f32.mxu0 0.0
  %3639 = vmatmul.mubr.f32.gmra.mrb[0].mxu0 %v1436
  %v3640 = vpop.f32.mrb[0].mxu0
  %v3641 = vadd.f32 %v532, %v3640
  %v3642 = vpop.f32.mrb[0].mxu0
  %3643 = vmatprep.mubr.f32.mxu0 0.0
  %3644 = vmatmul.mubr.f32.gmra.mrb[0].mxu0 %v1439
  %v3645 = vpop.f32.mrb[0].mxu0
  %v3646 = vadd.f32 %v532, %v3645
  %v3647 = vpop.f32.mrb[0].mxu0
  %3648 = vmatprep.mubr.f32.mxu0 0.0
  %3649 = vmatmul.mubr.f32.gmra.mrb[0].mxu0 %v1442
  %v3650 = vpop.f32.mrb[0].mxu0
  %v3651 = vadd.f32 %v532, %v3650
  %v3652 = vpop.f32.mrb[0].mxu0
  %3653 = vmatprep.mubr.f32.mxu0 0.0
  %3654 = vmatmul.mubr.f32.gmra.mrb[0].mxu0 %v1445
  %v3655 = vpop.f32.mrb[0].mxu0
  %v3656 = vadd.f32 %v532, %v3655
  %v3657 = vpop.f32.mrb[0].mxu0
  %3658 = vmatprep.mubr.f32.mxu0 0.0
  %3659 = vmatmul.mubr.f32.gmra.mrb[0].mxu0 %v1448
  %v3660 = vpop.f32.mrb[0].mxu0
  %v3661 = vadd.f32 %v532, %v3660
  %v3662 = vpop.f32.mrb[0].mxu0
  %3663 = vmatprep.mubr.f32.mxu0 0.0
  %3664 = vmatmul.mubr.f32.gmra.mrb[0].mxu0 %v1451
  %v3665 = vpop.f32.mrb[0].mxu0
  %v3666 = vadd.f32 %v532, %v3665
  %v3667 = vpop.f32.mrb[0].mxu0
  %3668 = vmatprep.mubr.f32.mxu0 0.0
  %3669 = vmatmul.mubr.f32.gmra.mrb[0].mxu0 %v1454
  %v3670 = vpop.f32.mrb[0].mxu0
  %v3671 = vadd.f32 %v532, %v3670
  %v3672 = vpop.f32.mrb[0].mxu0
  %3673 = vmatprep.mubr.f32.mxu0 0.0
  %3674 = vmatmul.mubr.f32.gmra.mrb[0].mxu0 %v1457
  %v3675 = vpop.f32.mrb[0].mxu0
  %v3676 = vadd.f32 %v532, %v3675
  %v3677 = vpop.f32.mrb[0].mxu0
  %3678 = vmatprep.mubr.f32.mxu0 0.0
  %3679 = vmatmul.mubr.f32.gmra.mrb[0].mxu0 %v1460
  %v3680 = vpop.f32.mrb[0].mxu0
  %v3681 = vadd.f32 %v532, %v3680
  %v3682 = vpop.f32.mrb[0].mxu0
  %3683 = vmatprep.mubr.f32.mxu0 0.0
  %3684 = vmatmul.mubr.f32.gmra.mrb[0].mxu0 %v1463
  %v3685 = vpop.f32.mrb[0].mxu0
  %v3686 = vadd.f32 %v532, %v3685
  %v3687 = vpop.f32.mrb[0].mxu0
  %3688 = vmatprep.mubr.f32.mxu0 0.0
  %3689 = vmatmul.mubr.f32.gmra.mrb[0].mxu0 %v1466
  %v3690 = vpop.f32.mrb[0].mxu0
  %v3691 = vadd.f32 %v532, %v3690
  %v3692 = vpop.f32.mrb[0].mxu0
  %3693 = vmatprep.mubr.f32.mxu0 0.0
  %3694 = vmatmul.mubr.f32.gmra.mrb[0].mxu0 %v1469
  %v3695 = vpop.f32.mrb[0].mxu0
  %v3696 = vadd.f32 %v532, %v3695
  %v3697 = vpop.f32.mrb[0].mxu0
  %3698 = vmatprep.mubr.f32.mxu0 0.0
  %3699 = vmatmul.mubr.f32.gmra.mrb[0].mxu0 %v1472
  %v3700 = vpop.f32.mrb[0].mxu0
  %v3701 = vadd.f32 %v532, %v3700
  %v3702 = vpop.f32.mrb[0].mxu0
  %3703 = vmatprep.mubr.f32.mxu0 0.0
  %3704 = vmatmul.mubr.f32.gmra.mrb[0].mxu0 %v1475
  %v3705 = vpop.f32.mrb[0].mxu0
  %v3706 = vadd.f32 %v532, %v3705
  %v3707 = vpop.f32.mrb[0].mxu0
  %3708 = vmatprep.mubr.f32.mxu0 0.0
  %3709 = vmatmul.mubr.f32.gmra.mrb[0].mxu0 %v1478
  %v3710 = vpop.f32.mrb[0].mxu0
  %v3711 = vadd.f32 %v532, %v3710
  %v3712 = vpop.f32.mrb[0].mxu0
  %3713 = vmatprep.mubr.f32.mxu0 0.0
  %3714 = vmatmul.mubr.f32.gmra.mrb[0].mxu0 %v1481
  %v3715 = vpop.f32.mrb[0].mxu0
  %v3716 = vadd.f32 %v532, %v3715
  %v3717 = vpop.f32.mrb[0].mxu0
  %3718 = vmatprep.mubr.f32.mxu0 0.0
  %3719 = vmatmul.mubr.f32.gmra.mrb[0].mxu0 %v1484
  %v3720 = vpop.f32.mrb[0].mxu0
  %v3721 = vadd.f32 %v532, %v3720
  %v3722 = vpop.f32.mrb[0].mxu0
  %3723 = vmatprep.mubr.f32.mxu0 0.0
  %3724 = vmatmul.mubr.f32.gmra.mrb[0].mxu0 %v1487
  %v3725 = vpop.f32.mrb[0].mxu0
  %v3726 = vadd.f32 %v532, %v3725
  %v3727 = vpop.f32.mrb[0].mxu0
  %3728 = vmatprep.mubr.f32.mxu0 0.0
  %3729 = vmatmul.mubr.f32.gmra.mrb[0].mxu0 %v1490
  %v3730 = vpop.f32.mrb[0].mxu0
  %v3731 = vadd.f32 %v532, %v3730
  %v3732 = vpop.f32.mrb[0].mxu0
  %3733 = vmatprep.mubr.f32.mxu0 0.0
  %3734 = vmatmul.mubr.f32.gmra.mrb[0].mxu0 %v1493
  %v3735 = vpop.f32.mrb[0].mxu0
  %v3736 = vadd.f32 %v532, %v3735
  %v3737 = vpop.f32.mrb[0].mxu0
  %3738 = vmatprep.mubr.f32.mxu0 0.0
  %3739 = vmatmul.mubr.f32.gmra.mrb[0].mxu0 %v1496
  %v3740 = vpop.f32.mrb[0].mxu0
  %v3741 = vadd.f32 %v532, %v3740
  %v3742 = vpop.f32.mrb[0].mxu0
  %3743 = vmatprep.mubr.f32.mxu0 0.0
  %3744 = vmatmul.mubr.f32.gmra.mrb[0].mxu0 %v1499
  %v3745 = vpop.f32.mrb[0].mxu0
  %v3746 = vadd.f32 %v532, %v3745
  %v3747 = vpop.f32.mrb[0].mxu0
  %3748 = vmatprep.mubr.f32.mxu0 0.0
  %3749 = vmatmul.mubr.f32.gmra.mrb[0].mxu0 %v1502
  %v3750 = vpop.f32.mrb[0].mxu0
  %v3751 = vadd.f32 %v532, %v3750
  %v3752 = vpop.f32.mrb[0].mxu0
  %3753 = vmatprep.mubr.f32.mxu0 0.0
  %3754 = vmatmul.mubr.f32.gmra.mrb[0].mxu0 %v1505
  %v3755 = vpop.f32.mrb[0].mxu0
  %v3756 = vadd.f32 %v532, %v3755
  %v3757 = vpop.f32.mrb[0].mxu0
  %3758 = vmatprep.mubr.f32.mxu0 0.0
  %3759 = vmatmul.mubr.f32.gmra.mrb[0].mxu0 %v1508
  %v3760 = vpop.f32.mrb[0].mxu0
  %v3761 = vadd.f32 %v532, %v3760
  %v3762 = vpop.f32.mrb[0].mxu0
  %3763 = vmatprep.mubr.f32.mxu0 0.0
  %3764 = vmatmul.mubr.f32.gmra.mrb[0].mxu0 %v1511
  %v3765 = vpop.f32.mrb[0].mxu0
  %v3766 = vadd.f32 %v532, %v3765
  %v3767 = vpop.f32.mrb[0].mxu0
  %3768 = vmatprep.mubr.f32.mxu0 0.0
  %3769 = vmatmul.mubr.f32.gmra.mrb[0].mxu0 %v1514
  %v3770 = vpop.f32.mrb[0].mxu0
  %v3771 = vadd.f32 %v532, %v3770
  %v3772 = vpop.f32.mrb[0].mxu0
  %3773 = vmatprep.mubr.f32.mxu0 0.0
  %3774 = vmatmul.mubr.f32.gmra.mrb[0].mxu0 %v1517
  %v3775 = vpop.f32.mrb[0].mxu0
  %v3776 = vadd.f32 %v532, %v3775
  %v3777 = vpop.f32.mrb[0].mxu0
  %3778 = vmatprep.mubr.f32.mxu0 0.0
  %3779 = vmatmul.mubr.f32.gmra.mrb[0].mxu0 %v1520
  %v3780 = vpop.f32.mrb[0].mxu0
  %v3781 = vadd.f32 %v532, %v3780
  %v3782 = vpop.f32.mrb[0].mxu0
  %3783 = vmatprep.mubr.f32.mxu0 0.0
  %3784 = vmatmul.mubr.f32.gmra.mrb[0].mxu0 %v1523
  %v3785 = vpop.f32.mrb[0].mxu0
  %v3786 = vadd.f32 %v532, %v3785
  %v3787 = vpop.f32.mrb[0].mxu0
  %3788 = vmatprep.mubr.f32.mxu0 0.0
  %3789 = vmatmul.mubr.f32.gmra.mrb[0].mxu0 %v1526
  %v3790 = vpop.f32.mrb[0].mxu0
  %v3791 = vadd.f32 %v532, %v3790
  %v3792 = vpop.f32.mrb[0].mxu0
  %3793 = vmatprep.mubr.f32.mxu0 0.0
  %3794 = vmatmul.mubr.f32.gmra.mrb[0].mxu0 %v1529
  %v3795 = vpop.f32.mrb[0].mxu0
  %v3796 = vadd.f32 %v532, %v3795
  %v3797 = vpop.f32.mrb[0].mxu0
  %3798 = vmatprep.mubr.f32.mxu0 0.0
  %3799 = vmatmul.mubr.f32.gmra.mrb[0].mxu0 %v1532
  %v3800 = vpop.f32.mrb[0].mxu0
  %v3801 = vadd.f32 %v532, %v3800
  %v3802 = vpop.f32.mrb[0].mxu0
  %3803 = vmatprep.mubr.f32.mxu0 0.0
  %3804 = vmatmul.mubr.f32.gmra.mrb[0].mxu0 %v1535
  %v3805 = vpop.f32.mrb[0].mxu0
  %v3806 = vadd.f32 %v532, %v3805
  %v3807 = vpop.f32.mrb[0].mxu0
  %3808 = vmatprep.mubr.f32.mxu0 0.0
  %3809 = vmatmul.mubr.f32.gmra.mrb[0].mxu0 %v1538
  %v3810 = vpop.f32.mrb[0].mxu0
  %v3811 = vadd.f32 %v532, %v3810
  %v3812 = vpop.f32.mrb[0].mxu0
  %3813 = vmatprep.mubr.f32.mxu0 0.0
  %3814 = vmatmul.mubr.f32.gmra.mrb[0].mxu0 %v1541
  %v3815 = vpop.f32.mrb[0].mxu0
  %v3816 = vadd.f32 %v532, %v3815
  %v3817 = vpop.f32.mrb[0].mxu0
  %3818 = vmatprep.mubr.f32.mxu0 0.0
  %3819 = vmatmul.mubr.f32.gmra.mrb[0].mxu0 %v1544
  %v3820 = vpop.f32.mrb[0].mxu0
  %v3821 = vadd.f32 %v532, %v3820
  %v3822 = vpop.f32.mrb[0].mxu0
  %3823 = vmatprep.mubr.f32.mxu0 0.0
  %3824 = vmatmul.mubr.f32.gmra.mrb[0].mxu0 %v1547
  %v3825 = vpop.f32.mrb[0].mxu0
  %v3826 = vadd.f32 %v532, %v3825
  %v3827 = vpop.f32.mrb[0].mxu0
  %3828 = vmatprep.mubr.f32.mxu0 0.0
  %3829 = vmatmul.mubr.f32.gmra.mrb[0].mxu0 %v1550
  %v3830 = vpop.f32.mrb[0].mxu0
  %v3831 = vadd.f32 %v532, %v3830
  %v3832 = vpop.f32.mrb[0].mxu0
  %3833 = vmatprep.mubr.f32.mxu0 0.0
  %3834 = vmatmul.mubr.f32.gmra.mrb[0].mxu0 %v1553
  %v3835 = vpop.f32.mrb[0].mxu0
  %v3836 = vadd.f32 %v532, %v3835
  %v3837 = vpop.f32.mrb[0].mxu0
  %3838 = vmatprep.mubr.f32.mxu0 0.0
  %3839 = vmatmul.mubr.f32.gmra.mrb[0].mxu0 %v1556
  %v3840 = vpop.f32.mrb[0].mxu0
  %v3841 = vadd.f32 %v532, %v3840
  %v3842 = vpop.f32.mrb[0].mxu0
  %3843 = vmatprep.mubr.f32.mxu0 0.0
  %3844 = vmatmul.mubr.f32.gmra.mrb[0].mxu0 %v1559
  %v3845 = vpop.f32.mrb[0].mxu0
  %v3846 = vadd.f32 %v532, %v3845
  %v3847 = vpop.f32.mrb[0].mxu0
  %3848 = vmatprep.mubr.f32.mxu0 0.0
  %3849 = vmatmul.mubr.f32.gmra.mrb[0].mxu0 %v1562
  %v3850 = vpop.f32.mrb[0].mxu0
  %v3851 = vadd.f32 %v532, %v3850
  %v3852 = vpop.f32.mrb[0].mxu0
  %3853 = vmatprep.mubr.f32.mxu0 0.0
  %3854 = vmatmul.mubr.f32.gmra.mrb[0].mxu0 %v1565
  %v3855 = vpop.f32.mrb[0].mxu0
  %v3856 = vadd.f32 %v532, %v3855
  %v3857 = vpop.f32.mrb[0].mxu0
  %3858 = vmatprep.mubr.f32.mxu0 0.0
  %3859 = vmatmul.mubr.f32.gmra.mrb[0].mxu0 %v1568
  %v3860 = vpop.f32.mrb[0].mxu0
  %v3861 = vadd.f32 %v532, %v3860
  %v3862 = vpop.f32.mrb[0].mxu0
  %3863 = vmatprep.mubr.f32.mxu0 0.0
  %3864 = vmatmul.mubr.f32.gmra.mrb[0].mxu0 %v1571
  %v3865 = vpop.f32.mrb[0].mxu0
  %v3866 = vadd.f32 %v532, %v3865
  %v3867 = vpop.f32.mrb[0].mxu0
  %3868 = vmatprep.mubr.f32.mxu0 0.0
  %3869 = vmatmul.mubr.f32.gmra.mrb[0].mxu0 %v1574
  %v3870 = vpop.f32.mrb[0].mxu0
  %v3871 = vadd.f32 %v532, %v3870
  %v3872 = vpop.f32.mrb[0].mxu0
  %3873 = vmatprep.mubr.f32.mxu0 0.0
  %3874 = vmatmul.mubr.f32.gmra.mrb[0].mxu0 %v1577
  %v3875 = vpop.f32.mrb[0].mxu0
  %v3876 = vadd.f32 %v532, %v3875
  %v3877 = vpop.f32.mrb[0].mxu0
  %3878 = vmatprep.mubr.f32.mxu0 0.0
  %3879 = vmatmul.mubr.f32.gmra.mrb[0].mxu0 %v1580
  %v3880 = vpop.f32.mrb[0].mxu0
  %v3881 = vadd.f32 %v532, %v3880
  %v3882 = vpop.f32.mrb[0].mxu0
  %3883 = vmatprep.mubr.f32.mxu0 0.0
  %3884 = vmatmul.mubr.f32.gmra.mrb[0].mxu0 %v1583
  %v3885 = vpop.f32.mrb[0].mxu0
  %v3886 = vadd.f32 %v532, %v3885
  %v3887 = vpop.f32.mrb[0].mxu0
  %3888 = vmatprep.mubr.f32.mxu0 0.0
  %3889 = vmatmul.mubr.f32.gmra.mrb[0].mxu0 %v1586
  %v3890 = vpop.f32.mrb[0].mxu0
  %v3891 = vadd.f32 %v532, %v3890
  %v3892 = vpop.f32.mrb[0].mxu0
  %3893 = vmatprep.mubr.f32.mxu0 0.0
  %3894 = vmatmul.mubr.f32.gmra.mrb[0].mxu0 %v1589
  %v3895 = vpop.f32.mrb[0].mxu0
  %v3896 = vadd.f32 %v532, %v3895
  %v3897 = vpop.f32.mrb[0].mxu0
  %3898 = vmatprep.mubr.f32.mxu0 0.0
  %3899 = vmatmul.mubr.f32.gmra.mrb[0].mxu0 %v1592
  %v3900 = vpop.f32.mrb[0].mxu0
  %v3901 = vadd.f32 %v532, %v3900
  %v3902 = vpop.f32.mrb[0].mxu0
  %3903 = vmatprep.mubr.f32.mxu0 0.0
  %3904 = vmatmul.mubr.f32.gmra.mrb[0].mxu0 %v1595
  %v3905 = vpop.f32.mrb[0].mxu0
  %v3906 = vadd.f32 %v532, %v3905
  %v3907 = vpop.f32.mrb[0].mxu0
  %3908 = vmatprep.mubr.f32.mxu0 0.0
  %3909 = vmatmul.mubr.f32.gmra.mrb[0].mxu0 %v1598
  %v3910 = vpop.f32.mrb[0].mxu0
  %v3911 = vadd.f32 %v532, %v3910
  %v3912 = vpop.f32.mrb[0].mxu0
  %3913 = vmatprep.mubr.f32.mxu0 0.0
  %3914 = vmatmul.mubr.f32.gmra.mrb[0].mxu0 %v1601
  %v3915 = vpop.f32.mrb[0].mxu0
  %v3916 = vadd.f32 %v532, %v3915
  %v3917 = vpop.f32.mrb[0].mxu0
  %3918 = vmatprep.mubr.f32.mxu0 0.0
  %3919 = vmatmul.mubr.f32.gmra.mrb[0].mxu0 %v1604
  %v3920 = vpop.f32.mrb[0].mxu0
  %v3921 = vadd.f32 %v532, %v3920
  %v3922 = vpop.f32.mrb[0].mxu0
  %3923 = vmatprep.mubr.f32.mxu0 0.0
  %3924 = vmatmul.mubr.f32.gmra.mrb[0].mxu0 %v1607
  %v3925 = vpop.f32.mrb[0].mxu0
  %v3926 = vadd.f32 %v532, %v3925
  %v3927 = vpop.f32.mrb[0].mxu0
  %3928 = vmatprep.mubr.f32.mxu0 0.0
  %3929 = vmatmul.mubr.f32.gmra.mrb[0].mxu0 %v1610
  %v3930 = vpop.f32.mrb[0].mxu0
  %v3931 = vadd.f32 %v532, %v3930
  %v3932 = vpop.f32.mrb[0].mxu0
  %3933 = vmatprep.mubr.f32.mxu0 0.0
  %3934 = vmatmul.mubr.f32.gmra.mrb[0].mxu0 %v1613
  %v3935 = vpop.f32.mrb[0].mxu0
  %v3936 = vadd.f32 %v532, %v3935
  %v3937 = vpop.f32.mrb[0].mxu0
  %3938 = vmatprep.mubr.f32.mxu0 0.0
  %3939 = vmatmul.mubr.f32.gmra.mrb[0].mxu0 %v1616
  %v3940 = vpop.f32.mrb[0].mxu0
  %v3941 = vadd.f32 %v532, %v3940
  %v3942 = vpop.f32.mrb[0].mxu0
  %3943 = vmatprep.mubr.f32.mxu0 0.0
  %3944 = vmatmul.mubr.f32.gmra.mrb[0].mxu0 %v1619
  %v3945 = vpop.f32.mrb[0].mxu0
  %v3946 = vadd.f32 %v532, %v3945
  %v3947 = vpop.f32.mrb[0].mxu0
  %3948 = vmatprep.mubr.f32.mxu0 0.0
  %3949 = vmatmul.mubr.f32.gmra.mrb[0].mxu0 %v1622
  %v3950 = vpop.f32.mrb[0].mxu0
  %v3951 = vadd.f32 %v532, %v3950
  %v3952 = vpop.f32.mrb[0].mxu0
  %3953 = vmatprep.mubr.f32.mxu0 0.0
  %3954 = vmatmul.mubr.f32.gmra.mrb[0].mxu0 %v1625
  %v3955 = vpop.f32.mrb[0].mxu0
  %v3956 = vadd.f32 %v532, %v3955
  %v3957 = vpop.f32.mrb[0].mxu0
  %3958 = vmatprep.mubr.f32.mxu0 0.0
  %3959 = vmatmul.mubr.f32.gmra.mrb[0].mxu0 %v1628
  %v3960 = vpop.f32.mrb[0].mxu0
  %v3961 = vadd.f32 %v532, %v3960
  %v3962 = vpop.f32.mrb[0].mxu0
  %3963 = vmatprep.mubr.f32.mxu0 0.0
  %3964 = vmatmul.mubr.f32.gmra.mrb[0].mxu0 %v1631
  %v3965 = vpop.f32.mrb[0].mxu0
  %v3966 = vadd.f32 %v532, %v3965
  %v3967 = vpop.f32.mrb[0].mxu0
  %3968 = vmatprep.mubr.f32.mxu0 0.0
  %3969 = vmatmul.mubr.f32.gmra.mrb[0].mxu0 %v1634
  %v3970 = vpop.f32.mrb[0].mxu0
  %v3971 = vadd.f32 %v532, %v3970
  %v3972 = vpop.f32.mrb[0].mxu0
  %3973 = vmatprep.mubr.f32.mxu0 0.0
  %3974 = vmatmul.mubr.f32.gmra.mrb[0].mxu0 %v1637
  %v3975 = vpop.f32.mrb[0].mxu0
  %v3976 = vadd.f32 %v532, %v3975
  %v3977 = vpop.f32.mrb[0].mxu0
  %3978 = vmatprep.mubr.f32.mxu0 0.0
  %3979 = vmatmul.mubr.f32.gmra.mrb[0].mxu0 %v1640
  %v3980 = vpop.f32.mrb[0].mxu0
  %v3981 = vadd.f32 %v532, %v3980
  %v3982 = vpop.f32.mrb[0].mxu0
  %3983 = vmatprep.mubr.f32.mxu0 0.0
  %3984 = vmatmul.mubr.f32.gmra.mrb[0].mxu0 %v1643
  %v3985 = vpop.f32.mrb[0].mxu0
  %v3986 = vadd.f32 %v532, %v3985
  %v3987 = vpop.f32.mrb[0].mxu0
  %3988 = vmatprep.mubr.f32.mxu0 0.0
  %3989 = vmatmul.mubr.f32.gmra.mrb[0].mxu0 %v1646
  %v3990 = vpop.f32.mrb[0].mxu0
  %v3991 = vadd.f32 %v532, %v3990
  %v3992 = vpop.f32.mrb[0].mxu0
  %3993 = vmatprep.mubr.f32.mxu0 0.0
  %3994 = vmatmul.mubr.f32.gmra.mrb[0].mxu0 %v1649
  %v3995 = vpop.f32.mrb[0].mxu0
  %v3996 = vadd.f32 %v532, %v3995
  %v3997 = vpop.f32.mrb[0].mxu0
  %3998 = vmatprep.mubr.f32.mxu0 0.0
  %3999 = vmatmul.mubr.f32.gmra.mrb[0].mxu0 %v1652
  %v4000 = vpop.f32.mrb[0].mxu0
  %v4001 = vadd.f32 %v532, %v4000
  %v4002 = vpop.f32.mrb[0].mxu0
  %4003 = vmatprep.mubr.f32.mxu0 0.0
  %4004 = vmatmul.mubr.f32.gmra.mrb[0].mxu0 %v1655
  %v4005 = vpop.f32.mrb[0].mxu0
  %v4006 = vadd.f32 %v532, %v4005
  %v4007 = vpop.f32.mrb[0].mxu0
  %4008 = vmatprep.mubr.f32.mxu0 0.0
  %4009 = vmatmul.mubr.f32.gmra.mrb[0].mxu0 %v1658
  %v4010 = vpop.f32.mrb[0].mxu0
  %v4011 = vadd.f32 %v532, %v4010
  %v4012 = vpop.f32.mrb[0].mxu0
  %4013 = vmatprep.mubr.f32.mxu0 0.0
  %4014 = vmatmul.mubr.f32.gmra.mrb[0].mxu0 %v1661
  %v4015 = vpop.f32.mrb[0].mxu0
  %v4016 = vadd.f32 %v532, %v4015
  %v4017 = vpop.f32.mrb[0].mxu0
  %4018 = vmatprep.mubr.f32.mxu0 0.0
  %4019 = vmatmul.mubr.f32.gmra.mrb[0].mxu0 %v1664
  %v4020 = vpop.f32.mrb[0].mxu0
  %v4021 = vadd.f32 %v532, %v4020
  %v4022 = vpop.f32.mrb[0].mxu0
  %4023 = vmatprep.mubr.f32.mxu0 0.0
  %4024 = vmatmul.mubr.f32.gmra.mrb[0].mxu0 %v1667
  %v4025 = vpop.f32.mrb[0].mxu0
  %v4026 = vadd.f32 %v532, %v4025
  %v4027 = vpop.f32.mrb[0].mxu0
  %4028 = vmatprep.mubr.f32.mxu0 0.0
  %4029 = vmatmul.mubr.f32.gmra.mrb[0].mxu0 %v1670
  %v4030 = vpop.f32.mrb[0].mxu0
  %v4031 = vadd.f32 %v532, %v4030
  %v4032 = vpop.f32.mrb[0].mxu0
  %4033 = vmatprep.mubr.f32.mxu0 0.0
  %4034 = vmatmul.mubr.f32.gmra.mrb[0].mxu0 %v1673
  %v4035 = vpop.f32.mrb[0].mxu0
  %v4036 = vadd.f32 %v532, %v4035
  %v4037 = vpop.f32.mrb[0].mxu0
  %4038 = vmatprep.mubr.f32.mxu0 0.0
  %4039 = vmatmul.mubr.f32.gmra.mrb[0].mxu0 %v1676
  %v4040 = vpop.f32.mrb[0].mxu0
  %v4041 = vadd.f32 %v532, %v4040
  %v4042 = vpop.f32.mrb[0].mxu0
  %4043 = vmatprep.mubr.f32.mxu0 0.0
  %4044 = vmatmul.mubr.f32.gmra.mrb[0].mxu0 %v1679
  %v4045 = vpop.f32.mrb[0].mxu0
  %v4046 = vadd.f32 %v532, %v4045
  %v4047 = vpop.f32.mrb[0].mxu0
  %4048 = vmatprep.mubr.f32.mxu0 0.0
  %4049 = vmatmul.mubr.f32.gmra.mrb[0].mxu0 %v1682
  %v4050 = vpop.f32.mrb[0].mxu0
  %v4051 = vadd.f32 %v532, %v4050
  %v4052 = vpop.f32.mrb[0].mxu0
  %4053 = vmatprep.mubr.f32.mxu0 0.0
  %4054 = vmatmul.mubr.f32.gmra.mrb[0].mxu0 %v1685
  %v4055 = vpop.f32.mrb[0].mxu0
  %v4056 = vadd.f32 %v532, %v4055
  %v4057 = vpop.f32.mrb[0].mxu0
  %4058 = vmatprep.mubr.f32.mxu0 0.0
  %4059 = vmatmul.mubr.f32.gmra.mrb[0].mxu0 %v1688
  %v4060 = vpop.f32.mrb[0].mxu0
  %v4061 = vadd.f32 %v532, %v4060
  %v4062 = vpop.f32.mrb[0].mxu0
  %4063 = vmatprep.mubr.f32.mxu0 0.0
  %4064 = vmatmul.mubr.f32.gmra.mrb[0].mxu0 %v1691
  %v4065 = vpop.f32.mrb[0].mxu0
  %v4066 = vadd.f32 %v532, %v4065
  %v4067 = vpop.f32.mrb[0].mxu0
  %4068 = vmatprep.mubr.f32.mxu0 0.0
  %4069 = vmatmul.mubr.f32.gmra.mrb[0].mxu0 %v1694
  %v4070 = vpop.f32.mrb[0].mxu0
  %v4071 = vadd.f32 %v532, %v4070
  %v4072 = vpop.f32.mrb[0].mxu0
  %4073 = vmatprep.mubr.f32.mxu0 0.0
  %4074 = vmatmul.mubr.f32.gmra.mrb[0].mxu0 %v1697
  %v4075 = vpop.f32.mrb[0].mxu0
  %v4076 = vadd.f32 %v532, %v4075
  %v4077 = vpop.f32.mrb[0].mxu0
  %4078 = vmatprep.mubr.f32.mxu0 0.0
  %4079 = vmatmul.mubr.f32.gmra.mrb[0].mxu0 %v1700
  %v4080 = vpop.f32.mrb[0].mxu0
  %v4081 = vadd.f32 %v532, %v4080
  %v4082 = vpop.f32.mrb[0].mxu0
  %4083 = vmatprep.mubr.f32.mxu0 0.0
  %4084 = vmatmul.mubr.f32.gmra.mrb[0].mxu0 %v1703
  %v4085 = vpop.f32.mrb[0].mxu0
  %v4086 = vadd.f32 %v532, %v4085
  %v4087 = vpop.f32.mrb[0].mxu0
  %4088 = vmatprep.mubr.f32.mxu0 0.0
  %4089 = vmatmul.mubr.f32.gmra.mrb[0].mxu0 %v1706
  %v4090 = vpop.f32.mrb[0].mxu0
  %v4091 = vadd.f32 %v532, %v4090
  %v4092 = vpop.f32.mrb[0].mxu0
  %4093 = vmatprep.mubr.f32.mxu0 0.0
  %4094 = vmatmul.mubr.f32.gmra.mrb[0].mxu0 %v1709
  %v4095 = vpop.f32.mrb[0].mxu0
  %v4096 = vadd.f32 %v532, %v4095
  %v4097 = vpop.f32.mrb[0].mxu0
  %4098 = vmatprep.mubr.f32.mxu0 0.0
  %4099 = vmatmul.mubr.f32.gmra.mrb[0].mxu0 %v1712
  %v4100 = vpop.f32.mrb[0].mxu0
  %v4101 = vadd.f32 %v532, %v4100
  %v4102 = vpop.f32.mrb[0].mxu0
  %4103 = vmatprep.mubr.f32.mxu0 0.0
  %4104 = vmatmul.mubr.f32.gmra.mrb[0].mxu0 %v1715
  %v4105 = vpop.f32.mrb[0].mxu0
  %v4106 = vadd.f32 %v532, %v4105
  %v4107 = vpop.f32.mrb[0].mxu0
  %4108 = vmatprep.mubr.f32.mxu0 0.0
  %4109 = vmatmul.mubr.f32.gmra.mrb[0].mxu0 %v1718
  %v4110 = vpop.f32.mrb[0].mxu0
  %v4111 = vadd.f32 %v532, %v4110
  %v4112 = vpop.f32.mrb[0].mxu0
  %4113 = vmatprep.mubr.f32.mxu0 0.0
  %4114 = vmatmul.mubr.f32.gmra.mrb[0].mxu0 %v1721
  %v4115 = vpop.f32.mrb[0].mxu0
  %v4116 = vadd.f32 %v532, %v4115
  %v4117 = vpop.f32.mrb[0].mxu0
  %4118 = vmatprep.mubr.f32.mxu0 0.0
  %4119 = vmatmul.mubr.f32.gmra.mrb[0].mxu0 %v1724
  %v4120 = vpop.f32.mrb[0].mxu0
  %v4121 = vadd.f32 %v532, %v4120
  %v4122 = vpop.f32.mrb[0].mxu0
  %4123 = vmatprep.mubr.f32.mxu0 0.0
  %4124 = vmatmul.mubr.f32.gmra.mrb[0].mxu0 %v1727
  %v4125 = vpop.f32.mrb[0].mxu0
  %v4126 = vadd.f32 %v532, %v4125
  %v4127 = vpop.f32.mrb[0].mxu0
  %4128 = vmatprep.mubr.f32.mxu0 0.0
  %4129 = vmatmul.mubr.f32.gmra.mrb[0].mxu0 %v1730
  %v4130 = vpop.f32.mrb[0].mxu0
  %v4131 = vadd.f32 %v532, %v4130
  %v4132 = vpop.f32.mrb[0].mxu0
  %4133 = vmatprep.mubr.f32.mxu0 0.0
  %4134 = vmatmul.mubr.f32.gmra.mrb[0].mxu0 %v1733
  %v4135 = vpop.f32.mrb[0].mxu0
  %v4136 = vadd.f32 %v532, %v4135
  %v4137 = vpop.f32.mrb[0].mxu0
  %4138 = vmatprep.mubr.f32.mxu0 0.0
  %4139 = vmatmul.mubr.f32.gmra.mrb[0].mxu0 %v1736
  %v4140 = vpop.f32.mrb[0].mxu0
  %v4141 = vadd.f32 %v532, %v4140
  %v4142 = vpop.f32.mrb[0].mxu0
  %4143 = vmatprep.mubr.f32.mxu0 0.0
  %4144 = vmatmul.mubr.f32.gmra.mrb[0].mxu0 %v1739
  %v4145 = vpop.f32.mrb[0].mxu0
  %v4146 = vadd.f32 %v532, %v4145
  %v4147 = vpop.f32.mrb[0].mxu0
  %4148 = vmatprep.mubr.f32.mxu0 0.0
  %4149 = vmatmul.mubr.f32.gmra.mrb[0].mxu0 %v1742
  %v4150 = vpop.f32.mrb[0].mxu0
  %v4151 = vadd.f32 %v532, %v4150
  %v4152 = vpop.f32.mrb[0].mxu0
  %4153 = vmatprep.mubr.f32.mxu0 0.0
  %4154 = vmatmul.mubr.f32.gmra.mrb[0].mxu0 %v1745
  %v4155 = vpop.f32.mrb[0].mxu0
  %v4156 = vadd.f32 %v532, %v4155
  %v4157 = vpop.f32.mrb[0].mxu0
  %4158 = vmatprep.mubr.f32.mxu0 0.0
  %4159 = vmatmul.mubr.f32.gmra.mrb[0].mxu0 %v1748
  %v4160 = vpop.f32.mrb[0].mxu0
  %v4161 = vadd.f32 %v532, %v4160
  %v4162 = vpop.f32.mrb[0].mxu0
  %4163 = vmatprep.mubr.f32.mxu0 0.0
  %4164 = vmatmul.mubr.f32.gmra.mrb[0].mxu0 %v1751
  %v4165 = vpop.f32.mrb[0].mxu0
  %v4166 = vadd.f32 %v532, %v4165
  %v4167 = vpop.f32.mrb[0].mxu0
  %4168 = vmatprep.mubr.f32.mxu0 0.0
  %4169 = vmatmul.mubr.f32.gmra.mrb[0].mxu0 %v1754
  %v4170 = vpop.f32.mrb[0].mxu0
  %v4171 = vadd.f32 %v532, %v4170
  %v4172 = vpop.f32.mrb[0].mxu0
  %4173 = vmatprep.mubr.f32.mxu0 0.0
  %4174 = vmatmul.mubr.f32.gmra.mrb[0].mxu0 %v1757
  %v4175 = vpop.f32.mrb[0].mxu0
  %v4176 = vadd.f32 %v532, %v4175
  %v4177 = vpop.f32.mrb[0].mxu0
  %4178 = vmatprep.mubr.f32.mxu0 0.0
  %4179 = vmatmul.mubr.f32.gmra.mrb[0].mxu0 %v1760
  %v4180 = vpop.f32.mrb[0].mxu0
  %v4181 = vadd.f32 %v532, %v4180
  %v4182 = vpop.f32.mrb[0].mxu0
  %4183 = vmatprep.mubr.f32.mxu0 0.0
  %4184 = vmatmul.mubr.f32.gmra.mrb[0].mxu0 %v1763
  %v4185 = vpop.f32.mrb[0].mxu0
  %v4186 = vadd.f32 %v532, %v4185
  %v4187 = vpop.f32.mrb[0].mxu0
  %4188 = vmatprep.mubr.f32.mxu0 0.0
  %4189 = vmatmul.mubr.f32.gmra.mrb[0].mxu0 %v1766
  %v4190 = vpop.f32.mrb[0].mxu0
  %v4191 = vadd.f32 %v532, %v4190
  %v4192 = vpop.f32.mrb[0].mxu0
  %4193 = vmatprep.mubr.f32.mxu0 0.0
  %4194 = vmatmul.mubr.f32.gmra.mrb[0].mxu0 %v1769
  %v4195 = vpop.f32.mrb[0].mxu0
  %v4196 = vadd.f32 %v532, %v4195
  %v4197 = vpop.f32.mrb[0].mxu0
  %4198 = vmatprep.mubr.f32.mxu0 0.0
  %4199 = vmatmul.mubr.f32.gmra.mrb[0].mxu0 %v1772
  %v4200 = vpop.f32.mrb[0].mxu0
  %v4201 = vadd.f32 %v532, %v4200
  %v4202 = vpop.f32.mrb[0].mxu0
  %4203 = vmatprep.mubr.f32.mxu0 0.0
  %4204 = vmatmul.mubr.f32.gmra.mrb[0].mxu0 %v1775
  %v4205 = vpop.f32.mrb[0].mxu0
  %v4206 = vadd.f32 %v532, %v4205
  %v4207 = vpop.f32.mrb[0].mxu0
  %4208 = vmatprep.mubr.f32.mxu0 0.0
  %4209 = vmatmul.mubr.f32.gmra.mrb[0].mxu0 %v1778
  %v4210 = vpop.f32.mrb[0].mxu0
  %v4211 = vadd.f32 %v532, %v4210
  %v4212 = vpop.f32.mrb[0].mxu0
  %4213 = vmatprep.mubr.f32.mxu0 0.0
  %4214 = vmatmul.mubr.f32.gmra.mrb[0].mxu0 %v1781
  %v4215 = vpop.f32.mrb[0].mxu0
  %v4216 = vadd.f32 %v532, %v4215
  %v4217 = vpop.f32.mrb[0].mxu0
  %4218 = vmatprep.mubr.f32.mxu0 0.0
  %4219 = vmatmul.mubr.f32.gmra.mrb[0].mxu0 %v1784
  %v4220 = vpop.f32.mrb[0].mxu0
  %v4221 = vadd.f32 %v532, %v4220
  %v4222 = vpop.f32.mrb[0].mxu0
  %4223 = vmatprep.mubr.f32.mxu0 0.0
  %4224 = vmatmul.mubr.f32.gmra.mrb[0].mxu0 %v1787
  %v4225 = vpop.f32.mrb[0].mxu0
  %v4226 = vadd.f32 %v532, %v4225
  %v4227 = vpop.f32.mrb[0].mxu0
  %4228 = vmatprep.mubr.f32.mxu0 0.0
  %4229 = vmatmul.mubr.f32.gmra.mrb[0].mxu0 %v1790
  %v4230 = vpop.f32.mrb[0].mxu0
  %v4231 = vadd.f32 %v532, %v4230
  %v4232 = vpop.f32.mrb[0].mxu0
  %4233 = vmatprep.mubr.f32.mxu0 0.0
  %4234 = vmatmul.mubr.f32.gmra.mrb[0].mxu0 %v1793
  %v4235 = vpop.f32.mrb[0].mxu0
  %v4236 = vadd.f32 %v532, %v4235
  %v4237 = vpop.f32.mrb[0].mxu0
  %4238 = vmatprep.mubr.f32.mxu0 0.0
  %4239 = vmatmul.mubr.f32.gmra.mrb[0].mxu0 %v1796
  %v4240 = vpop.f32.mrb[0].mxu0
  %v4241 = vadd.f32 %v532, %v4240
  %v4242 = vpop.f32.mrb[0].mxu0
  %4243 = vmatprep.mubr.f32.mxu0 0.0
  %4244 = vmatmul.mubr.f32.gmra.mrb[0].mxu0 %v1799
  %v4245 = vpop.f32.mrb[0].mxu0
  %v4246 = vadd.f32 %v532, %v4245
  %v4247 = vpop.f32.mrb[0].mxu0
  %4248 = vmatprep.mubr.f32.mxu0 0.0
  %4249 = vmatmul.mubr.f32.gmra.mrb[0].mxu0 %v1802
  %v4250 = vpop.f32.mrb[0].mxu0
  %v4251 = vadd.f32 %v532, %v4250
  %v4252 = vpop.f32.mrb[0].mxu0
  %4253 = vmatprep.mubr.f32.mxu0 0.0
  %4254 = vmatmul.mubr.f32.gmra.mrb[0].mxu0 %v1805
  %v4255 = vpop.f32.mrb[0].mxu0
  %v4256 = vadd.f32 %v532, %v4255
  %v4257 = vpop.f32.mrb[0].mxu0
  %4258 = vmatprep.mubr.f32.mxu0 0.0
  %4259 = vmatmul.mubr.f32.gmra.mrb[0].mxu0 %v1808
  %v4260 = vpop.f32.mrb[0].mxu0
  %v4261 = vadd.f32 %v532, %v4260
  %v4262 = vpop.f32.mrb[0].mxu0
  %4263 = vmatprep.mubr.f32.mxu0 0.0
  %4264 = vmatmul.mubr.f32.gmra.mrb[0].mxu0 %v1811
  %v4265 = vpop.f32.mrb[0].mxu0
  %v4266 = vadd.f32 %v532, %v4265
  %v4267 = vpop.f32.mrb[0].mxu0
  %4268 = vmatprep.mubr.f32.mxu0 0.0
  %4269 = vmatmul.mubr.f32.gmra.mrb[0].mxu0 %v1814
  %v4270 = vpop.f32.mrb[0].mxu0
  %v4271 = vadd.f32 %v532, %v4270
  %v4272 = vpop.f32.mrb[0].mxu0
  %4273 = vmatprep.mubr.f32.mxu0 0.0
  %4274 = vmatmul.mubr.f32.gmra.mrb[0].mxu0 %v1817
  %v4275 = vpop.f32.mrb[0].mxu0
  %v4276 = vadd.f32 %v532, %v4275
  %v4277 = vpop.f32.mrb[0].mxu0
  %4278 = vmatprep.mubr.f32.mxu0 0.0
  %4279 = vmatmul.mubr.f32.gmra.mrb[0].mxu0 %v1820
  %v4280 = vpop.f32.mrb[0].mxu0
  %v4281 = vadd.f32 %v532, %v4280
  %v4282 = vpop.f32.mrb[0].mxu0
  %4283 = vmatprep.mubr.f32.mxu0 0.0
  %4284 = vmatmul.mubr.f32.gmra.mrb[0].mxu0 %v1823
  %v4285 = vpop.f32.mrb[0].mxu0
  %v4286 = vadd.f32 %v532, %v4285
  %v4287 = vpop.f32.mrb[0].mxu0
  %4288 = vmatprep.mubr.f32.mxu0 0.0
  %4289 = vmatmul.mubr.f32.gmra.mrb[0].mxu0 %v1826
  %v4290 = vpop.f32.mrb[0].mxu0
  %v4291 = vadd.f32 %v532, %v4290
  %v4292 = vpop.f32.mrb[0].mxu0
  %4293 = vmatprep.mubr.f32.mxu0 0.0
  %4294 = vmatmul.mubr.f32.gmra.mrb[0].mxu0 %v1829
  %v4295 = vpop.f32.mrb[0].mxu0
  %v4296 = vadd.f32 %v532, %v4295
  %v4297 = vpop.f32.mrb[0].mxu0
  %4298 = vmatprep.mubr.f32.mxu0 0.0
  %4299 = vmatmul.mubr.f32.gmra.mrb[0].mxu0 %v1832
  %v4300 = vpop.f32.mrb[0].mxu0
  %v4301 = vadd.f32 %v532, %v4300
  %v4302 = vpop.f32.mrb[0].mxu0
  %4303 = vmatprep.mubr.f32.mxu0 0.0
  %4304 = vmatmul.mubr.f32.gmra.mrb[0].mxu0 %v1835
  %v4305 = vpop.f32.mrb[0].mxu0
  %v4306 = vadd.f32 %v532, %v4305
  %v4307 = vpop.f32.mrb[0].mxu0
  %4308 = vmatprep.mubr.f32.mxu0 0.0
  %4309 = vmatmul.mubr.f32.gmra.mrb[0].mxu0 %v1838
  %v4310 = vpop.f32.mrb[0].mxu0
  %v4311 = vadd.f32 %v532, %v4310
  %v4312 = vpop.f32.mrb[0].mxu0
  %4313 = vmatprep.mubr.f32.mxu0 0.0
  %4314 = vmatmul.mubr.f32.gmra.mrb[0].mxu0 %v1841
  %v4315 = vpop.f32.mrb[0].mxu0
  %v4316 = vadd.f32 %v532, %v4315
  %v4317 = vpop.f32.mrb[0].mxu0
  %4318 = vmatprep.mubr.f32.mxu0 0.0
  %4319 = vmatmul.mubr.f32.gmra.mrb[0].mxu0 %v1844
  %v4320 = vpop.f32.mrb[0].mxu0
  %v4321 = vadd.f32 %v532, %v4320
  %v4322 = vpop.f32.mrb[0].mxu0
  %4323 = vmatprep.mubr.f32.mxu0 0.0
  %4324 = vmatmul.mubr.f32.gmra.mrb[0].mxu0 %v1847
  %v4325 = vpop.f32.mrb[0].mxu0
  %v4326 = vadd.f32 %v532, %v4325
  %v4327 = vpop.f32.mrb[0].mxu0
  %4328 = vmatprep.mubr.f32.mxu0 0.0
  %4329 = vmatmul.mubr.f32.gmra.mrb[0].mxu0 %v1850
  %v4330 = vpop.f32.mrb[0].mxu0
  %v4331 = vadd.f32 %v532, %v4330
  %v4332 = vpop.f32.mrb[0].mxu0
  %4333 = vmatprep.mubr.f32.mxu0 0.0
  %4334 = vmatmul.mubr.f32.gmra.mrb[0].mxu0 %v1853
  %v4335 = vpop.f32.mrb[0].mxu0
  %v4336 = vadd.f32 %v532, %v4335
  %v4337 = vpop.f32.mrb[0].mxu0
  %4338 = vmatprep.mubr.f32.mxu0 0.0
  %4339 = vmatmul.mubr.f32.gmra.mrb[0].mxu0 %v1856
  %v4340 = vpop.f32.mrb[0].mxu0
  %v4341 = vadd.f32 %v532, %v4340
  %v4342 = vpop.f32.mrb[0].mxu0
  %4343 = vmatprep.mubr.f32.mxu0 0.0
  %4344 = vmatmul.mubr.f32.gmra.mrb[0].mxu0 %v1859
  %v4345 = vpop.f32.mrb[0].mxu0
  %v4346 = vadd.f32 %v532, %v4345
  %v4347 = vpop.f32.mrb[0].mxu0
  %4348 = vmatprep.mubr.f32.mxu0 0.0
  %4349 = vmatmul.mubr.f32.gmra.mrb[0].mxu0 %v1862
  %v4350 = vpop.f32.mrb[0].mxu0
  %v4351 = vadd.f32 %v532, %v4350
  %v4352 = vpop.f32.mrb[0].mxu0
  %4353 = vmatprep.mubr.f32.mxu0 0.0
  %4354 = vmatmul.mubr.f32.gmra.mrb[0].mxu0 %v1865
  %v4355 = vpop.f32.mrb[0].mxu0
  %v4356 = vadd.f32 %v532, %v4355
  %v4357 = vpop.f32.mrb[0].mxu0
  %4358 = vmatprep.mubr.f32.mxu0 0.0
  %4359 = vmatmul.mubr.f32.gmra.mrb[0].mxu0 %v1868
  %v4360 = vpop.f32.mrb[0].mxu0
  %v4361 = vadd.f32 %v532, %v4360
  %v4362 = vpop.f32.mrb[0].mxu0
  %4363 = vmatprep.mubr.f32.mxu0 0.0
  %4364 = vmatmul.mubr.f32.gmra.mrb[0].mxu0 %v1871
  %v4365 = vpop.f32.mrb[0].mxu0
  %v4366 = vadd.f32 %v532, %v4365
  %v4367 = vpop.f32.mrb[0].mxu0
  %4368 = vmatprep.mubr.f32.mxu0 0.0
  %4369 = vmatmul.mubr.f32.gmra.mrb[0].mxu0 %v1874
  %v4370 = vpop.f32.mrb[0].mxu0
  %v4371 = vadd.f32 %v532, %v4370
  %v4372 = vpop.f32.mrb[0].mxu0
  %4373 = vmatprep.mubr.f32.mxu0 0.0
  %4374 = vmatmul.mubr.f32.gmra.mrb[0].mxu0 %v1877
  %v4375 = vpop.f32.mrb[0].mxu0
  %v4376 = vadd.f32 %v532, %v4375
  %v4377 = vpop.f32.mrb[0].mxu0
  %4378 = vmatprep.mubr.f32.mxu0 0.0
  %4379 = vmatmul.mubr.f32.gmra.mrb[0].mxu0 %v1880
  %v4380 = vpop.f32.mrb[0].mxu0
  %v4381 = vadd.f32 %v532, %v4380
  %v4382 = vpop.f32.mrb[0].mxu0
  %4383 = vmatprep.mubr.f32.mxu0 0.0
  %4384 = vmatmul.mubr.f32.gmra.mrb[0].mxu0 %v1883
  %v4385 = vpop.f32.mrb[0].mxu0
  %v4386 = vadd.f32 %v532, %v4385
  %v4387 = vpop.f32.mrb[0].mxu0
  %4388 = vmatprep.mubr.f32.mxu0 0.0
  %4389 = vmatmul.mubr.f32.gmra.mrb[0].mxu0 %v1886
  %v4390 = vpop.f32.mrb[0].mxu0
  %v4391 = vadd.f32 %v532, %v4390
  %v4392 = vpop.f32.mrb[0].mxu0
  %4393 = vmatprep.mubr.f32.mxu0 0.0
  %4394 = vmatmul.mubr.f32.gmra.mrb[0].mxu0 %v1889
  %v4395 = vpop.f32.mrb[0].mxu0
  %v4396 = vadd.f32 %v532, %v4395
  %v4397 = vpop.f32.mrb[0].mxu0
  %4398 = vmatprep.mubr.f32.mxu0 0.0
  %4399 = vmatmul.mubr.f32.gmra.mrb[0].mxu0 %v1892
  %v4400 = vpop.f32.mrb[0].mxu0
  %v4401 = vadd.f32 %v532, %v4400
  %v4402 = vpop.f32.mrb[0].mxu0
  %4403 = vmatprep.mubr.f32.mxu0 0.0
  %4404 = vmatmul.mubr.f32.gmra.mrb[0].mxu0 %v1895
  %v4405 = vpop.f32.mrb[0].mxu0
  %v4406 = vadd.f32 %v532, %v4405
  %v4407 = vpop.f32.mrb[0].mxu0
  %4408 = vmatprep.mubr.f32.mxu0 0.0
  %4409 = vmatmul.mubr.f32.gmra.mrb[0].mxu0 %v1898
  %v4410 = vpop.f32.mrb[0].mxu0
  %v4411 = vadd.f32 %v532, %v4410
  %v4412 = vpop.f32.mrb[0].mxu0
  %4413 = vmatprep.mubr.f32.mxu0 0.0
  %4414 = vmatmul.mubr.f32.gmra.mrb[0].mxu0 %v1901
  %v4415 = vpop.f32.mrb[0].mxu0
  %v4416 = vadd.f32 %v532, %v4415
  %v4417 = vpop.f32.mrb[0].mxu0
  %4418 = vmatprep.mubr.f32.mxu0 0.0
  %4419 = vmatmul.mubr.f32.gmra.mrb[0].mxu0 %v1904
  %v4420 = vpop.f32.mrb[0].mxu0
  %v4421 = vadd.f32 %v532, %v4420
  %v4422 = vpop.f32.mrb[0].mxu0
  %4423 = vmatprep.mubr.f32.mxu0 0.0
  %4424 = vmatmul.mubr.f32.gmra.mrb[0].mxu0 %v1907
  %v4425 = vpop.f32.mrb[0].mxu0
  %v4426 = vadd.f32 %v532, %v4425
  %v4427 = vpop.f32.mrb[0].mxu0
  %4428 = vmatprep.mubr.f32.mxu0 0.0
  %4429 = vmatmul.mubr.f32.gmra.mrb[0].mxu0 %v1910
  %v4430 = vpop.f32.mrb[0].mxu0
  %v4431 = vadd.f32 %v532, %v4430
  %v4432 = vpop.f32.mrb[0].mxu0
  %4433 = vmatprep.mubr.f32.mxu0 0.0
  %4434 = vmatmul.mubr.f32.gmra.mrb[0].mxu0 %v1913
  %v4435 = vpop.f32.mrb[0].mxu0
  %v4436 = vadd.f32 %v532, %v4435
  %v4437 = vpop.f32.mrb[0].mxu0
  %4438 = vmatprep.mubr.f32.mxu0 0.0
  %4439 = vmatmul.mubr.f32.gmra.mrb[0].mxu0 %v1916
  %v4440 = vpop.f32.mrb[0].mxu0
  %v4441 = vadd.f32 %v532, %v4440
  %v4442 = vpop.f32.mrb[0].mxu0
  %4443 = vmatprep.mubr.f32.mxu0 0.0
  %4444 = vmatmul.mubr.f32.gmra.mrb[0].mxu0 %v1919
  %v4445 = vpop.f32.mrb[0].mxu0
  %v4446 = vadd.f32 %v532, %v4445
  %v4447 = vpop.f32.mrb[0].mxu0
  %4448 = vmatprep.mubr.f32.mxu0 0.0
  %4449 = vmatmul.mubr.f32.gmra.mrb[0].mxu0 %v1922
  %v4450 = vpop.f32.mrb[0].mxu0
  %v4451 = vadd.f32 %v532, %v4450
  %v4452 = vpop.f32.mrb[0].mxu0
  %4453 = vmatprep.mubr.f32.mxu0 0.0
  %4454 = vmatmul.mubr.f32.gmra.mrb[0].mxu0 %v1925
  %v4455 = vpop.f32.mrb[0].mxu0
  %v4456 = vadd.f32 %v532, %v4455
  %v4457 = vpop.f32.mrb[0].mxu0
  %4458 = vmatprep.mubr.f32.mxu0 0.0
  %4459 = vmatmul.mubr.f32.gmra.mrb[0].mxu0 %v1928
  %v4460 = vpop.f32.mrb[0].mxu0
  %v4461 = vadd.f32 %v532, %v4460
  %v4462 = vpop.f32.mrb[0].mxu0
  %4463 = vmatprep.mubr.f32.mxu0 0.0
  %4464 = vmatmul.mubr.f32.gmra.mrb[0].mxu0 %v1931
  %v4465 = vpop.f32.mrb[0].mxu0
  %v4466 = vadd.f32 %v532, %v4465
  %v4467 = vpop.f32.mrb[0].mxu0
  %4468 = vmatprep.mubr.f32.mxu0 0.0
  %4469 = vmatmul.mubr.f32.gmra.mrb[0].mxu0 %v1934
  %v4470 = vpop.f32.mrb[0].mxu0
  %v4471 = vadd.f32 %v532, %v4470
  %v4472 = vpop.f32.mrb[0].mxu0
  %4473 = vmatprep.mubr.f32.mxu0 0.0
  %4474 = vmatmul.mubr.f32.gmra.mrb[0].mxu0 %v1937
  %v4475 = vpop.f32.mrb[0].mxu0
  %v4476 = vadd.f32 %v532, %v4475
  %v4477 = vpop.f32.mrb[0].mxu0
  %4478 = vmatprep.mubr.f32.mxu0 0.0
  %4479 = vmatmul.mubr.f32.gmra.mrb[0].mxu0 %v1940
  %v4480 = vpop.f32.mrb[0].mxu0
  %v4481 = vadd.f32 %v532, %v4480
  %v4482 = vpop.f32.mrb[0].mxu0
  %4483 = vmatprep.mubr.f32.mxu0 0.0
  %4484 = vmatmul.mubr.f32.gmra.mrb[0].mxu0 %v1943
  %v4485 = vpop.f32.mrb[0].mxu0
  %v4486 = vadd.f32 %v532, %v4485
  %v4487 = vpop.f32.mrb[0].mxu0
  %4488 = vmatprep.mubr.f32.mxu0 0.0
  %4489 = vmatmul.mubr.f32.gmra.mrb[0].mxu0 %v1946
  %v4490 = vpop.f32.mrb[0].mxu0
  %v4491 = vadd.f32 %v532, %v4490
  %v4492 = vpop.f32.mrb[0].mxu0
  %4493 = vmatprep.mubr.f32.mxu0 0.0
  %4494 = vmatmul.mubr.f32.gmra.mrb[0].mxu0 %v1949
  %v4495 = vpop.f32.mrb[0].mxu0
  %v4496 = vadd.f32 %v532, %v4495
  %v4497 = vpop.f32.mrb[0].mxu0
  %4498 = vmatprep.mubr.f32.mxu0 0.0
  %4499 = vmatmul.mubr.f32.gmra.mrb[0].mxu0 %v1952
  %v4500 = vpop.f32.mrb[0].mxu0
  %v4501 = vadd.f32 %v532, %v4500
  %v4502 = vpop.f32.mrb[0].mxu0
  %4503 = vmatprep.mubr.f32.mxu0 0.0
  %4504 = vmatmul.mubr.f32.gmra.mrb[0].mxu0 %v1955
  %v4505 = vpop.f32.mrb[0].mxu0
  %v4506 = vadd.f32 %v532, %v4505
  %v4507 = vpop.f32.mrb[0].mxu0
  %4508 = vmatprep.mubr.f32.mxu0 0.0
  %4509 = vmatmul.mubr.f32.gmra.mrb[0].mxu0 %v1958
  %v4510 = vpop.f32.mrb[0].mxu0
  %v4511 = vadd.f32 %v532, %v4510
  %v4512 = vpop.f32.mrb[0].mxu0
  %4513 = vmatprep.mubr.f32.mxu0 0.0
  %4514 = vmatmul.mubr.f32.gmra.mrb[0].mxu0 %v1961
  %v4515 = vpop.f32.mrb[0].mxu0
  %v4516 = vadd.f32 %v532, %v4515
  %v4517 = vpop.f32.mrb[0].mxu0
  %4518 = vmatprep.mubr.f32.mxu0 0.0
  %4519 = vmatmul.mubr.f32.gmra.mrb[0].mxu0 %v1964
  %v4520 = vpop.f32.mrb[0].mxu0
  %v4521 = vadd.f32 %v532, %v4520
  %v4522 = vpop.f32.mrb[0].mxu0
  %4523 = vmatprep.mubr.f32.mxu0 0.0
  %4524 = vmatmul.mubr.f32.gmra.mrb[0].mxu0 %v1967
  %v4525 = vpop.f32.mrb[0].mxu0
  %v4526 = vadd.f32 %v532, %v4525
  %v4527 = vpop.f32.mrb[0].mxu0
  %4528 = vmatprep.mubr.f32.mxu0 0.0
  %4529 = vmatmul.mubr.f32.gmra.mrb[0].mxu0 %v1970
  %v4530 = vpop.f32.mrb[0].mxu0
  %v4531 = vadd.f32 %v532, %v4530
  %v4532 = vpop.f32.mrb[0].mxu0
  %4533 = vmatprep.mubr.f32.mxu0 0.0
  %4534 = vmatmul.mubr.f32.gmra.mrb[0].mxu0 %v1973
  %v4535 = vpop.f32.mrb[0].mxu0
  %v4536 = vadd.f32 %v532, %v4535
  %v4537 = vpop.f32.mrb[0].mxu0
  %4538 = vmatprep.mubr.f32.mxu0 0.0
  %4539 = vmatmul.mubr.f32.gmra.mrb[0].mxu0 %v1976
  %v4540 = vpop.f32.mrb[0].mxu0
  %v4541 = vadd.f32 %v532, %v4540
  %v4542 = vpop.f32.mrb[0].mxu0
  %4543 = vmatprep.mubr.f32.mxu0 0.0
  %4544 = vmatmul.mubr.f32.gmra.mrb[0].mxu0 %v1979
  %v4545 = vpop.f32.mrb[0].mxu0
  %v4546 = vadd.f32 %v532, %v4545
  %v4547 = vpop.f32.mrb[0].mxu0
  %4548 = vmatprep.mubr.f32.mxu0 0.0
  %4549 = vmatmul.mubr.f32.gmra.mrb[0].mxu0 %v1982
  %v4550 = vpop.f32.mrb[0].mxu0
  %v4551 = vadd.f32 %v532, %v4550
  %v4552 = vpop.f32.mrb[0].mxu0
  %4553 = vmatprep.mubr.f32.mxu0 0.0
  %4554 = vmatmul.mubr.f32.gmra.mrb[0].mxu0 %v1985
  %v4555 = vpop.f32.mrb[0].mxu0
  %v4556 = vadd.f32 %v532, %v4555
  %v4557 = vpop.f32.mrb[0].mxu0
  %4558 = vmatprep.mubr.f32.mxu0 0.0
  %4559 = vmatmul.mubr.f32.gmra.mrb[0].mxu0 %v1988
  %v4560 = vpop.f32.mrb[0].mxu0
  %v4561 = vadd.f32 %v532, %v4560
  %v4562 = vpop.f32.mrb[0].mxu0
  %4563 = vmatprep.mubr.f32.mxu0 0.0
  %4564 = vmatmul.mubr.f32.gmra.mrb[0].mxu0 %v1991
  %v4565 = vpop.f32.mrb[0].mxu0
  %v4566 = vadd.f32 %v532, %v4565
  %v4567 = vpop.f32.mrb[0].mxu0
  %4568 = vmatprep.mubr.f32.mxu0 0.0
  %4569 = vmatmul.mubr.f32.gmra.mrb[0].mxu0 %v1994
  %v4570 = vpop.f32.mrb[0].mxu0
  %v4571 = vadd.f32 %v532, %v4570
  %v4572 = vpop.f32.mrb[0].mxu0
  %4573 = vmatprep.mubr.f32.mxu0 0.0
  %4574 = vmatmul.mubr.f32.gmra.mrb[0].mxu0 %v1997
  %v4575 = vpop.f32.mrb[0].mxu0
  %v4576 = vadd.f32 %v532, %v4575
  %v4577 = vpop.f32.mrb[0].mxu0
  %4578 = vmatprep.mubr.f32.mxu0 0.0
  %4579 = vmatmul.mubr.f32.gmra.mrb[0].mxu0 %v2000
  %v4580 = vpop.f32.mrb[0].mxu0
  %v4581 = vadd.f32 %v532, %v4580
  %v4582 = vpop.f32.mrb[0].mxu0
  %4583 = vmatprep.mubr.f32.mxu0 0.0
  %4584 = vmatmul.mubr.f32.gmra.mrb[0].mxu0 %v2003
  %v4585 = vpop.f32.mrb[0].mxu0
  %v4586 = vadd.f32 %v532, %v4585
  %v4587 = vpop.f32.mrb[0].mxu0
  %4588 = vmatprep.mubr.f32.mxu0 0.0
  %4589 = vmatmul.mubr.f32.gmra.mrb[0].mxu0 %v2006
  %v4590 = vpop.f32.mrb[0].mxu0
  %v4591 = vadd.f32 %v532, %v4590
  %v4592 = vpop.f32.mrb[0].mxu0
  %4593 = vmatprep.mubr.f32.mxu0 0.0
  %4594 = vmatmul.mubr.f32.gmra.mrb[0].mxu0 %v2009
  %v4595 = vpop.f32.mrb[0].mxu0
  %v4596 = vadd.f32 %v532, %v4595
  %v4597 = vpop.f32.mrb[0].mxu0
  %4598 = vmatprep.mubr.f32.mxu0 0.0
  %4599 = vmatmul.mubr.f32.gmra.mrb[0].mxu0 %v2012
  %v4600 = vpop.f32.mrb[0].mxu0
  %v4601 = vadd.f32 %v532, %v4600
  %v4602 = vpop.f32.mrb[0].mxu0
  %4603 = vmatprep.mubr.f32.mxu0 0.0
  %4604 = vmatmul.mubr.f32.gmra.mrb[0].mxu0 %v2015
  %v4605 = vpop.f32.mrb[0].mxu0
  %v4606 = vadd.f32 %v532, %v4605
  %v4607 = vpop.f32.mrb[0].mxu0
  %4608 = vmatprep.mubr.f32.mxu0 0.0
  %4609 = vmatmul.mubr.f32.gmra.mrb[0].mxu0 %v2018
  %v4610 = vpop.f32.mrb[0].mxu0
  %v4611 = vadd.f32 %v532, %v4610
  %v4612 = vpop.f32.mrb[0].mxu0
  %4613 = vmatprep.mubr.f32.mxu0 0.0
  %4614 = vmatmul.mubr.f32.gmra.mrb[0].mxu0 %v2021
  %v4615 = vpop.f32.mrb[0].mxu0
  %v4616 = vadd.f32 %v532, %v4615
  %v4617 = vpop.f32.mrb[0].mxu0
  %4618 = vmatprep.mubr.f32.mxu0 0.0
  %4619 = vmatmul.mubr.f32.gmra.mrb[0].mxu0 %v2024
  %v4620 = vpop.f32.mrb[0].mxu0
  %v4621 = vadd.f32 %v532, %v4620
  %v4622 = vpop.f32.mrb[0].mxu0
  %4623 = vmatprep.mubr.f32.mxu0 0.0
  %4624 = vmatmul.mubr.f32.gmra.mrb[0].mxu0 %v2027
  %v4625 = vpop.f32.mrb[0].mxu0
  %v4626 = vadd.f32 %v532, %v4625
  %v4627 = vpop.f32.mrb[0].mxu0
  %4628 = vmatprep.mubr.f32.mxu0 0.0
  %4629 = vmatmul.mubr.f32.gmra.mrb[0].mxu0 %v2030
  %v4630 = vpop.f32.mrb[0].mxu0
  %v4631 = vadd.f32 %v532, %v4630
  %v4632 = vpop.f32.mrb[0].mxu0
  %4633 = vmatprep.mubr.f32.mxu0 0.0
  %4634 = vmatmul.mubr.f32.gmra.mrb[0].mxu0 %v2033
  %v4635 = vpop.f32.mrb[0].mxu0
  %v4636 = vadd.f32 %v532, %v4635
  %v4637 = vpop.f32.mrb[0].mxu0
  %4638 = vmatprep.mubr.f32.mxu0 0.0
  %4639 = vmatmul.mubr.f32.gmra.mrb[0].mxu0 %v2036
  %v4640 = vpop.f32.mrb[0].mxu0
  %v4641 = vadd.f32 %v532, %v4640
  %v4642 = vpop.f32.mrb[0].mxu0
  %4643 = vmatprep.mubr.f32.mxu0 0.0
  %4644 = vmatmul.mubr.f32.gmra.mrb[0].mxu0 %v2039
  %v4645 = vpop.f32.mrb[0].mxu0
  %v4646 = vadd.f32 %v532, %v4645
  %v4647 = vpop.f32.mrb[0].mxu0
  %4648 = vmatprep.mubr.f32.mxu0 0.0
  %4649 = vmatmul.mubr.f32.gmra.mrb[0].mxu0 %v2042
  %v4650 = vpop.f32.mrb[0].mxu0
  %v4651 = vadd.f32 %v532, %v4650
  %v4652 = vpop.f32.mrb[0].mxu0
  %4653 = vmatprep.mubr.f32.mxu0 0.0
  %4654 = vmatmul.mubr.f32.gmra.mrb[0].mxu0 %v2045
  %v4655 = vpop.f32.mrb[0].mxu0
  %v4656 = vadd.f32 %v532, %v4655
  %v4657 = vpop.f32.mrb[0].mxu0
  %4658 = vmatprep.mubr.f32.mxu0 0.0
  %4659 = vmatmul.mubr.f32.gmra.mrb[0].mxu0 %v2048
  %v4660 = vpop.f32.mrb[0].mxu0
  %v4661 = vadd.f32 %v532, %v4660
  %v4662 = vpop.f32.mrb[0].mxu0
  %4663 = vmatprep.mubr.f32.mxu0 0.0
  %4664 = vmatmul.mubr.f32.gmra.mrb[0].mxu0 %v2051
  %v4665 = vpop.f32.mrb[0].mxu0
  %v4666 = vadd.f32 %v532, %v4665
  %v4667 = vpop.f32.mrb[0].mxu0
  %4668 = vmatprep.mubr.f32.mxu0 0.0
  %4669 = vmatmul.mubr.f32.gmra.mrb[0].mxu0 %v2054
  %v4670 = vpop.f32.mrb[0].mxu0
  %v4671 = vadd.f32 %v532, %v4670
  %v4672 = vpop.f32.mrb[0].mxu0
  %4673 = vmatprep.mubr.f32.mxu0 0.0
  %4674 = vmatmul.mubr.f32.gmra.mrb[0].mxu0 %v2057
  %v4675 = vpop.f32.mrb[0].mxu0
  %v4676 = vadd.f32 %v532, %v4675
  %v4677 = vpop.f32.mrb[0].mxu0
  %4678 = vmatprep.mubr.f32.mxu0 0.0
  %4679 = vmatmul.mubr.f32.gmra.mrb[0].mxu0 %v2060
  %v4680 = vpop.f32.mrb[0].mxu0
  %v4681 = vadd.f32 %v532, %v4680
  %v4682 = vpop.f32.mrb[0].mxu0
  %4683 = vmatprep.mubr.f32.mxu0 0.0
  %4684 = vmatmul.mubr.f32.gmra.mrb[0].mxu0 %v2063
  %v4685 = vpop.f32.mrb[0].mxu0
  %v4686 = vadd.f32 %v532, %v4685
  %v4687 = vpop.f32.mrb[0].mxu0
  %4688 = vmatprep.mubr.f32.mxu0 0.0
  %4689 = vmatmul.mubr.f32.gmra.mrb[0].mxu0 %v2066
  %v4690 = vpop.f32.mrb[0].mxu0
  %v4691 = vadd.f32 %v532, %v4690
  %v4692 = vpop.f32.mrb[0].mxu0
  %4693 = vmatprep.mubr.f32.mxu0 0.0
  %4694 = vmatmul.mubr.f32.gmra.mrb[0].mxu0 %v2069
  %v4695 = vpop.f32.mrb[0].mxu0
  %v4696 = vadd.f32 %v532, %v4695
  %v4697 = vpop.f32.mrb[0].mxu0
  %4698 = vdwg.mxu0
  %vm4699 = vcmask 39936
  %4700 = vst.msk [vmem:[%s3] sm:$0xff] %vm4699, %v2141
  %4701 = vst.msk [vmem:[%s3 + $0x8] sm:$0xff] %vm4699, %v2146
  %4702 = vst.msk [vmem:[%s3 + $0x10] sm:$0xff] %vm4699, %v2151
  %4703 = vst.msk [vmem:[%s3 + $0x18] sm:$0xff] %vm4699, %v2156
  %4704 = vst.msk [vmem:[%s3 + $0x20] sm:$0xff] %vm4699, %v2161
  %4705 = vst.msk [vmem:[%s3 + $0x28] sm:$0xff] %vm4699, %v2166
  %4706 = vst.msk [vmem:[%s3 + $0x30] sm:$0xff] %vm4699, %v2171
  %4707 = vst.msk [vmem:[%s3 + $0x38] sm:$0xff] %vm4699, %v2176
  %4708 = vst.msk [vmem:[%s3 + $0x40] sm:$0xff] %vm4699, %v2181
  %4709 = vst.msk [vmem:[%s3 + $0x48] sm:$0xff] %vm4699, %v2186
  %4710 = vst.msk [vmem:[%s3 + $0x50] sm:$0xff] %vm4699, %v2191
  %4711 = vst.msk [vmem:[%s3 + $0x58] sm:$0xff] %vm4699, %v2196
  %4712 = vst.msk [vmem:[%s3 + $0x60] sm:$0xff] %vm4699, %v2201
  %4713 = vst.msk [vmem:[%s3 + $0x68] sm:$0xff] %vm4699, %v2206
  %4714 = vst.msk [vmem:[%s3 + $0x70] sm:$0xff] %vm4699, %v2211
  %4715 = vst.msk [vmem:[%s3 + $0x78] sm:$0xff] %vm4699, %v2216
  %4716 = vst.msk [vmem:[%s3 + $0x80] sm:$0xff] %vm4699, %v2221
  %4717 = vst.msk [vmem:[%s3 + $0x88] sm:$0xff] %vm4699, %v2226
  %4718 = vst.msk [vmem:[%s3 + $0x90] sm:$0xff] %vm4699, %v2231
  %4719 = vst.msk [vmem:[%s3 + $0x98] sm:$0xff] %vm4699, %v2236
  %4720 = vst.msk [vmem:[%s3 + $0xa0] sm:$0xff] %vm4699, %v2241
  %4721 = vst.msk [vmem:[%s3 + $0xa8] sm:$0xff] %vm4699, %v2246
  %4722 = vst.msk [vmem:[%s3 + $0xb0] sm:$0xff] %vm4699, %v2251
  %4723 = vst.msk [vmem:[%s3 + $0xb8] sm:$0xff] %vm4699, %v2256
  %4724 = vst.msk [vmem:[%s3 + $0xc0] sm:$0xff] %vm4699, %v2261
  %4725 = vst.msk [vmem:[%s3 + $0xc8] sm:$0xff] %vm4699, %v2266
  %4726 = vst.msk [vmem:[%s3 + $0xd0] sm:$0xff] %vm4699, %v2271
  %4727 = vst.msk [vmem:[%s3 + $0xd8] sm:$0xff] %vm4699, %v2276
  %4728 = vst.msk [vmem:[%s3 + $0xe0] sm:$0xff] %vm4699, %v2281
  %4729 = vst.msk [vmem:[%s3 + $0xe8] sm:$0xff] %vm4699, %v2286
  %4730 = vst.msk [vmem:[%s3 + $0xf0] sm:$0xff] %vm4699, %v2291
  %4731 = vst.msk [vmem:[%s3 + $0xf8] sm:$0xff] %vm4699, %v2296
  %4732 = vst.msk [vmem:[%s3 + $0x100] sm:$0xff] %vm4699, %v2301
  %4733 = vst.msk [vmem:[%s3 + $0x108] sm:$0xff] %vm4699, %v2306
  %4734 = vst.msk [vmem:[%s3 + $0x110] sm:$0xff] %vm4699, %v2311
  %4735 = vst.msk [vmem:[%s3 + $0x118] sm:$0xff] %vm4699, %v2316
  %4736 = vst.msk [vmem:[%s3 + $0x120] sm:$0xff] %vm4699, %v2321
  %4737 = vst.msk [vmem:[%s3 + $0x128] sm:$0xff] %vm4699, %v2326
  %4738 = vst.msk [vmem:[%s3 + $0x130] sm:$0xff] %vm4699, %v2331
  %4739 = vst.msk [vmem:[%s3 + $0x138] sm:$0xff] %vm4699, %v2336
  %4740 = vst.msk [vmem:[%s3 + $0x140] sm:$0xff] %vm4699, %v2341
  %4741 = vst.msk [vmem:[%s3 + $0x148] sm:$0xff] %vm4699, %v2346
  %4742 = vst.msk [vmem:[%s3 + $0x150] sm:$0xff] %vm4699, %v2351
  %4743 = vst.msk [vmem:[%s3 + $0x158] sm:$0xff] %vm4699, %v2356
  %4744 = vst.msk [vmem:[%s3 + $0x160] sm:$0xff] %vm4699, %v2361
  %4745 = vst.msk [vmem:[%s3 + $0x168] sm:$0xff] %vm4699, %v2366
  %4746 = vst.msk [vmem:[%s3 + $0x170] sm:$0xff] %vm4699, %v2371
  %4747 = vst.msk [vmem:[%s3 + $0x178] sm:$0xff] %vm4699, %v2376
  %4748 = vst.msk [vmem:[%s3 + $0x180] sm:$0xff] %vm4699, %v2381
  %4749 = vst.msk [vmem:[%s3 + $0x188] sm:$0xff] %vm4699, %v2386
  %4750 = vst.msk [vmem:[%s3 + $0x190] sm:$0xff] %vm4699, %v2391
  %4751 = vst.msk [vmem:[%s3 + $0x198] sm:$0xff] %vm4699, %v2396
  %4752 = vst.msk [vmem:[%s3 + $0x1a0] sm:$0xff] %vm4699, %v2401
  %4753 = vst.msk [vmem:[%s3 + $0x1a8] sm:$0xff] %vm4699, %v2406
  %4754 = vst.msk [vmem:[%s3 + $0x1b0] sm:$0xff] %vm4699, %v2411
  %4755 = vst.msk [vmem:[%s3 + $0x1b8] sm:$0xff] %vm4699, %v2416
  %4756 = vst.msk [vmem:[%s3 + $0x1c0] sm:$0xff] %vm4699, %v2421
  %4757 = vst.msk [vmem:[%s3 + $0x1c8] sm:$0xff] %vm4699, %v2426
  %4758 = vst.msk [vmem:[%s3 + $0x1d0] sm:$0xff] %vm4699, %v2431
  %4759 = vst.msk [vmem:[%s3 + $0x1d8] sm:$0xff] %vm4699, %v2436
  %4760 = vst.msk [vmem:[%s3 + $0x1e0] sm:$0xff] %vm4699, %v2441
  %4761 = vst.msk [vmem:[%s3 + $0x1e8] sm:$0xff] %vm4699, %v2446
  %4762 = vst.msk [vmem:[%s3 + $0x1f0] sm:$0xff] %vm4699, %v2451
  %4763 = vst.msk [vmem:[%s3 + $0x1f8] sm:$0xff] %vm4699, %v2456
  %4764 = vst.msk [vmem:[%s3 + $0x200] sm:$0xff] %vm4699, %v2461
  %4765 = vst.msk [vmem:[%s3 + $0x208] sm:$0xff] %vm4699, %v2466
  %4766 = vst.msk [vmem:[%s3 + $0x210] sm:$0xff] %vm4699, %v2471
  %4767 = vst.msk [vmem:[%s3 + $0x218] sm:$0xff] %vm4699, %v2476
  %4768 = vst.msk [vmem:[%s3 + $0x220] sm:$0xff] %vm4699, %v2481
  %4769 = vst.msk [vmem:[%s3 + $0x228] sm:$0xff] %vm4699, %v2486
  %4770 = vst.msk [vmem:[%s3 + $0x230] sm:$0xff] %vm4699, %v2491
  %4771 = vst.msk [vmem:[%s3 + $0x238] sm:$0xff] %vm4699, %v2496
  %4772 = vst.msk [vmem:[%s3 + $0x240] sm:$0xff] %vm4699, %v2501
  %4773 = vst.msk [vmem:[%s3 + $0x248] sm:$0xff] %vm4699, %v2506
  %4774 = vst.msk [vmem:[%s3 + $0x250] sm:$0xff] %vm4699, %v2511
  %4775 = vst.msk [vmem:[%s3 + $0x258] sm:$0xff] %vm4699, %v2516
  %4776 = vst.msk [vmem:[%s3 + $0x260] sm:$0xff] %vm4699, %v2521
  %4777 = vst.msk [vmem:[%s3 + $0x268] sm:$0xff] %vm4699, %v2526
  %4778 = vst.msk [vmem:[%s3 + $0x270] sm:$0xff] %vm4699, %v2531
  %4779 = vst.msk [vmem:[%s3 + $0x278] sm:$0xff] %vm4699, %v2536
  %4780 = vst.msk [vmem:[%s3 + $0x280] sm:$0xff] %vm4699, %v2541
  %4781 = vst.msk [vmem:[%s3 + $0x288] sm:$0xff] %vm4699, %v2546
  %4782 = vst.msk [vmem:[%s3 + $0x290] sm:$0xff] %vm4699, %v2551
  %4783 = vst.msk [vmem:[%s3 + $0x298] sm:$0xff] %vm4699, %v2556
  %4784 = vst.msk [vmem:[%s3 + $0x2a0] sm:$0xff] %vm4699, %v2561
  %4785 = vst.msk [vmem:[%s3 + $0x2a8] sm:$0xff] %vm4699, %v2566
  %4786 = vst.msk [vmem:[%s3 + $0x2b0] sm:$0xff] %vm4699, %v2571
  %4787 = vst.msk [vmem:[%s3 + $0x2b8] sm:$0xff] %vm4699, %v2576
  %4788 = vst.msk [vmem:[%s3 + $0x2c0] sm:$0xff] %vm4699, %v2581
  %4789 = vst.msk [vmem:[%s3 + $0x2c8] sm:$0xff] %vm4699, %v2586
  %4790 = vst.msk [vmem:[%s3 + $0x2d0] sm:$0xff] %vm4699, %v2591
  %4791 = vst.msk [vmem:[%s3 + $0x2d8] sm:$0xff] %vm4699, %v2596
  %4792 = vst.msk [vmem:[%s3 + $0x2e0] sm:$0xff] %vm4699, %v2601
  %4793 = vst.msk [vmem:[%s3 + $0x2e8] sm:$0xff] %vm4699, %v2606
  %4794 = vst.msk [vmem:[%s3 + $0x2f0] sm:$0xff] %vm4699, %v2611
  %4795 = vst.msk [vmem:[%s3 + $0x2f8] sm:$0xff] %vm4699, %v2616
  %4796 = vst.msk [vmem:[%s3 + $0x300] sm:$0xff] %vm4699, %v2621
  %4797 = vst.msk [vmem:[%s3 + $0x308] sm:$0xff] %vm4699, %v2626
  %4798 = vst.msk [vmem:[%s3 + $0x310] sm:$0xff] %vm4699, %v2631
  %4799 = vst.msk [vmem:[%s3 + $0x318] sm:$0xff] %vm4699, %v2636
  %4800 = vst.msk [vmem:[%s3 + $0x320] sm:$0xff] %vm4699, %v2641
  %4801 = vst.msk [vmem:[%s3 + $0x328] sm:$0xff] %vm4699, %v2646
  %4802 = vst.msk [vmem:[%s3 + $0x330] sm:$0xff] %vm4699, %v2651
  %4803 = vst.msk [vmem:[%s3 + $0x338] sm:$0xff] %vm4699, %v2656
  %4804 = vst.msk [vmem:[%s3 + $0x340] sm:$0xff] %vm4699, %v2661
  %4805 = vst.msk [vmem:[%s3 + $0x348] sm:$0xff] %vm4699, %v2666
  %4806 = vst.msk [vmem:[%s3 + $0x350] sm:$0xff] %vm4699, %v2671
  %4807 = vst.msk [vmem:[%s3 + $0x358] sm:$0xff] %vm4699, %v2676
  %4808 = vst.msk [vmem:[%s3 + $0x360] sm:$0xff] %vm4699, %v2681
  %4809 = vst.msk [vmem:[%s3 + $0x368] sm:$0xff] %vm4699, %v2686
  %4810 = vst.msk [vmem:[%s3 + $0x370] sm:$0xff] %vm4699, %v2691
  %4811 = vst.msk [vmem:[%s3 + $0x378] sm:$0xff] %vm4699, %v2696
  %4812 = vst.msk [vmem:[%s3 + $0x380] sm:$0xff] %vm4699, %v2701
  %4813 = vst.msk [vmem:[%s3 + $0x388] sm:$0xff] %vm4699, %v2706
  %4814 = vst.msk [vmem:[%s3 + $0x390] sm:$0xff] %vm4699, %v2711
  %4815 = vst.msk [vmem:[%s3 + $0x398] sm:$0xff] %vm4699, %v2716
  %4816 = vst.msk [vmem:[%s3 + $0x3a0] sm:$0xff] %vm4699, %v2721
  %4817 = vst.msk [vmem:[%s3 + $0x3a8] sm:$0xff] %vm4699, %v2726
  %4818 = vst.msk [vmem:[%s3 + $0x3b0] sm:$0xff] %vm4699, %v2731
  %4819 = vst.msk [vmem:[%s3 + $0x3b8] sm:$0xff] %vm4699, %v2736
  %4820 = vst.msk [vmem:[%s3 + $0x3c0] sm:$0xff] %vm4699, %v2741
  %4821 = vst.msk [vmem:[%s3 + $0x3c8] sm:$0xff] %vm4699, %v2746
  %4822 = vst.msk [vmem:[%s3 + $0x3d0] sm:$0xff] %vm4699, %v2751
  %4823 = vst.msk [vmem:[%s3 + $0x3d8] sm:$0xff] %vm4699, %v2756
  %4824 = vst.msk [vmem:[%s3 + $0x3e0] sm:$0xff] %vm4699, %v2761
  %4825 = vst.msk [vmem:[%s3 + $0x3e8] sm:$0xff] %vm4699, %v2766
  %4826 = vst.msk [vmem:[%s3 + $0x3f0] sm:$0xff] %vm4699, %v2771
  %4827 = vst.msk [vmem:[%s3 + $0x3f8] sm:$0xff] %vm4699, %v2776
  %4828 = vst.msk [vmem:[%s3 + $0x400] sm:$0xff] %vm4699, %v2781
  %4829 = vst.msk [vmem:[%s3 + $0x408] sm:$0xff] %vm4699, %v2786
  %4830 = vst.msk [vmem:[%s3 + $0x410] sm:$0xff] %vm4699, %v2791
  %4831 = vst.msk [vmem:[%s3 + $0x418] sm:$0xff] %vm4699, %v2796
  %4832 = vst.msk [vmem:[%s3 + $0x420] sm:$0xff] %vm4699, %v2801
  %4833 = vst.msk [vmem:[%s3 + $0x428] sm:$0xff] %vm4699, %v2806
  %4834 = vst.msk [vmem:[%s3 + $0x430] sm:$0xff] %vm4699, %v2811
  %4835 = vst.msk [vmem:[%s3 + $0x438] sm:$0xff] %vm4699, %v2816
  %4836 = vst.msk [vmem:[%s3 + $0x440] sm:$0xff] %vm4699, %v2821
  %4837 = vst.msk [vmem:[%s3 + $0x448] sm:$0xff] %vm4699, %v2826
  %4838 = vst.msk [vmem:[%s3 + $0x450] sm:$0xff] %vm4699, %v2831
  %4839 = vst.msk [vmem:[%s3 + $0x458] sm:$0xff] %vm4699, %v2836
  %4840 = vst.msk [vmem:[%s3 + $0x460] sm:$0xff] %vm4699, %v2841
  %4841 = vst.msk [vmem:[%s3 + $0x468] sm:$0xff] %vm4699, %v2846
  %4842 = vst.msk [vmem:[%s3 + $0x470] sm:$0xff] %vm4699, %v2851
  %4843 = vst.msk [vmem:[%s3 + $0x478] sm:$0xff] %vm4699, %v2856
  %4844 = vst.msk [vmem:[%s3 + $0x480] sm:$0xff] %vm4699, %v2861
  %4845 = vst.msk [vmem:[%s3 + $0x488] sm:$0xff] %vm4699, %v2866
  %4846 = vst.msk [vmem:[%s3 + $0x490] sm:$0xff] %vm4699, %v2871
  %4847 = vst.msk [vmem:[%s3 + $0x498] sm:$0xff] %vm4699, %v2876
  %4848 = vst.msk [vmem:[%s3 + $0x4a0] sm:$0xff] %vm4699, %v2881
  %4849 = vst.msk [vmem:[%s3 + $0x4a8] sm:$0xff] %vm4699, %v2886
  %4850 = vst.msk [vmem:[%s3 + $0x4b0] sm:$0xff] %vm4699, %v2891
  %4851 = vst.msk [vmem:[%s3 + $0x4b8] sm:$0xff] %vm4699, %v2896
  %4852 = vst.msk [vmem:[%s3 + $0x4c0] sm:$0xff] %vm4699, %v2901
  %4853 = vst.msk [vmem:[%s3 + $0x4c8] sm:$0xff] %vm4699, %v2906
  %4854 = vst.msk [vmem:[%s3 + $0x4d0] sm:$0xff] %vm4699, %v2911
  %4855 = vst.msk [vmem:[%s3 + $0x4d8] sm:$0xff] %vm4699, %v2916
  %4856 = vst.msk [vmem:[%s3 + $0x4e0] sm:$0xff] %vm4699, %v2921
  %4857 = vst.msk [vmem:[%s3 + $0x4e8] sm:$0xff] %vm4699, %v2926
  %4858 = vst.msk [vmem:[%s3 + $0x4f0] sm:$0xff] %vm4699, %v2931
  %4859 = vst.msk [vmem:[%s3 + $0x4f8] sm:$0xff] %vm4699, %v2936
  %4860 = vst.msk [vmem:[%s3 + $0x500] sm:$0xff] %vm4699, %v2941
  %4861 = vst.msk [vmem:[%s3 + $0x508] sm:$0xff] %vm4699, %v2946
  %4862 = vst.msk [vmem:[%s3 + $0x510] sm:$0xff] %vm4699, %v2951
  %4863 = vst.msk [vmem:[%s3 + $0x518] sm:$0xff] %vm4699, %v2956
  %4864 = vst.msk [vmem:[%s3 + $0x520] sm:$0xff] %vm4699, %v2961
  %4865 = vst.msk [vmem:[%s3 + $0x528] sm:$0xff] %vm4699, %v2966
  %4866 = vst.msk [vmem:[%s3 + $0x530] sm:$0xff] %vm4699, %v2971
  %4867 = vst.msk [vmem:[%s3 + $0x538] sm:$0xff] %vm4699, %v2976
  %4868 = vst.msk [vmem:[%s3 + $0x540] sm:$0xff] %vm4699, %v2981
  %4869 = vst.msk [vmem:[%s3 + $0x548] sm:$0xff] %vm4699, %v2986
  %4870 = vst.msk [vmem:[%s3 + $0x550] sm:$0xff] %vm4699, %v2991
  %4871 = vst.msk [vmem:[%s3 + $0x558] sm:$0xff] %vm4699, %v2996
  %4872 = vst.msk [vmem:[%s3 + $0x560] sm:$0xff] %vm4699, %v3001
  %4873 = vst.msk [vmem:[%s3 + $0x568] sm:$0xff] %vm4699, %v3006
  %4874 = vst.msk [vmem:[%s3 + $0x570] sm:$0xff] %vm4699, %v3011
  %4875 = vst.msk [vmem:[%s3 + $0x578] sm:$0xff] %vm4699, %v3016
  %4876 = vst.msk [vmem:[%s3 + $0x580] sm:$0xff] %vm4699, %v3021
  %4877 = vst.msk [vmem:[%s3 + $0x588] sm:$0xff] %vm4699, %v3026
  %4878 = vst.msk [vmem:[%s3 + $0x590] sm:$0xff] %vm4699, %v3031
  %4879 = vst.msk [vmem:[%s3 + $0x598] sm:$0xff] %vm4699, %v3036
  %4880 = vst.msk [vmem:[%s3 + $0x5a0] sm:$0xff] %vm4699, %v3041
  %4881 = vst.msk [vmem:[%s3 + $0x5a8] sm:$0xff] %vm4699, %v3046
  %4882 = vst.msk [vmem:[%s3 + $0x5b0] sm:$0xff] %vm4699, %v3051
  %4883 = vst.msk [vmem:[%s3 + $0x5b8] sm:$0xff] %vm4699, %v3056
  %4884 = vst.msk [vmem:[%s3 + $0x5c0] sm:$0xff] %vm4699, %v3061
  %4885 = vst.msk [vmem:[%s3 + $0x5c8] sm:$0xff] %vm4699, %v3066
  %4886 = vst.msk [vmem:[%s3 + $0x5d0] sm:$0xff] %vm4699, %v3071
  %4887 = vst.msk [vmem:[%s3 + $0x5d8] sm:$0xff] %vm4699, %v3076
  %4888 = vst.msk [vmem:[%s3 + $0x5e0] sm:$0xff] %vm4699, %v3081
  %4889 = vst.msk [vmem:[%s3 + $0x5e8] sm:$0xff] %vm4699, %v3086
  %4890 = vst.msk [vmem:[%s3 + $0x5f0] sm:$0xff] %vm4699, %v3091
  %4891 = vst.msk [vmem:[%s3 + $0x5f8] sm:$0xff] %vm4699, %v3096
  %4892 = vst.msk [vmem:[%s3 + $0x600] sm:$0xff] %vm4699, %v3101
  %4893 = vst.msk [vmem:[%s3 + $0x608] sm:$0xff] %vm4699, %v3106
  %4894 = vst.msk [vmem:[%s3 + $0x610] sm:$0xff] %vm4699, %v3111
  %4895 = vst.msk [vmem:[%s3 + $0x618] sm:$0xff] %vm4699, %v3116
  %4896 = vst.msk [vmem:[%s3 + $0x620] sm:$0xff] %vm4699, %v3121
  %4897 = vst.msk [vmem:[%s3 + $0x628] sm:$0xff] %vm4699, %v3126
  %4898 = vst.msk [vmem:[%s3 + $0x630] sm:$0xff] %vm4699, %v3131
  %4899 = vst.msk [vmem:[%s3 + $0x638] sm:$0xff] %vm4699, %v3136
  %4900 = vst.msk [vmem:[%s3 + $0x640] sm:$0xff] %vm4699, %v3141
  %4901 = vst.msk [vmem:[%s3 + $0x648] sm:$0xff] %vm4699, %v3146
  %4902 = vst.msk [vmem:[%s3 + $0x650] sm:$0xff] %vm4699, %v3151
  %4903 = vst.msk [vmem:[%s3 + $0x658] sm:$0xff] %vm4699, %v3156
  %4904 = vst.msk [vmem:[%s3 + $0x660] sm:$0xff] %vm4699, %v3161
  %4905 = vst.msk [vmem:[%s3 + $0x668] sm:$0xff] %vm4699, %v3166
  %4906 = vst.msk [vmem:[%s3 + $0x670] sm:$0xff] %vm4699, %v3171
  %4907 = vst.msk [vmem:[%s3 + $0x678] sm:$0xff] %vm4699, %v3176
  %4908 = vst.msk [vmem:[%s3 + $0x680] sm:$0xff] %vm4699, %v3181
  %4909 = vst.msk [vmem:[%s3 + $0x688] sm:$0xff] %vm4699, %v3186
  %4910 = vst.msk [vmem:[%s3 + $0x690] sm:$0xff] %vm4699, %v3191
  %4911 = vst.msk [vmem:[%s3 + $0x698] sm:$0xff] %vm4699, %v3196
  %4912 = vst.msk [vmem:[%s3 + $0x6a0] sm:$0xff] %vm4699, %v3201
  %4913 = vst.msk [vmem:[%s3 + $0x6a8] sm:$0xff] %vm4699, %v3206
  %4914 = vst.msk [vmem:[%s3 + $0x6b0] sm:$0xff] %vm4699, %v3211
  %4915 = vst.msk [vmem:[%s3 + $0x6b8] sm:$0xff] %vm4699, %v3216
  %4916 = vst.msk [vmem:[%s3 + $0x6c0] sm:$0xff] %vm4699, %v3221
  %4917 = vst.msk [vmem:[%s3 + $0x6c8] sm:$0xff] %vm4699, %v3226
  %4918 = vst.msk [vmem:[%s3 + $0x6d0] sm:$0xff] %vm4699, %v3231
  %4919 = vst.msk [vmem:[%s3 + $0x6d8] sm:$0xff] %vm4699, %v3236
  %4920 = vst.msk [vmem:[%s3 + $0x6e0] sm:$0xff] %vm4699, %v3241
  %4921 = vst.msk [vmem:[%s3 + $0x6e8] sm:$0xff] %vm4699, %v3246
  %4922 = vst.msk [vmem:[%s3 + $0x6f0] sm:$0xff] %vm4699, %v3251
  %4923 = vst.msk [vmem:[%s3 + $0x6f8] sm:$0xff] %vm4699, %v3256
  %4924 = vst.msk [vmem:[%s3 + $0x700] sm:$0xff] %vm4699, %v3261
  %4925 = vst.msk [vmem:[%s3 + $0x708] sm:$0xff] %vm4699, %v3266
  %4926 = vst.msk [vmem:[%s3 + $0x710] sm:$0xff] %vm4699, %v3271
  %4927 = vst.msk [vmem:[%s3 + $0x718] sm:$0xff] %vm4699, %v3276
  %4928 = vst.msk [vmem:[%s3 + $0x720] sm:$0xff] %vm4699, %v3281
  %4929 = vst.msk [vmem:[%s3 + $0x728] sm:$0xff] %vm4699, %v3286
  %4930 = vst.msk [vmem:[%s3 + $0x730] sm:$0xff] %vm4699, %v3291
  %4931 = vst.msk [vmem:[%s3 + $0x738] sm:$0xff] %vm4699, %v3296
  %4932 = vst.msk [vmem:[%s3 + $0x740] sm:$0xff] %vm4699, %v3301
  %4933 = vst.msk [vmem:[%s3 + $0x748] sm:$0xff] %vm4699, %v3306
  %4934 = vst.msk [vmem:[%s3 + $0x750] sm:$0xff] %vm4699, %v3311
  %4935 = vst.msk [vmem:[%s3 + $0x758] sm:$0xff] %vm4699, %v3316
  %4936 = vst.msk [vmem:[%s3 + $0x760] sm:$0xff] %vm4699, %v3321
  %4937 = vst.msk [vmem:[%s3 + $0x768] sm:$0xff] %vm4699, %v3326
  %4938 = vst.msk [vmem:[%s3 + $0x770] sm:$0xff] %vm4699, %v3331
  %4939 = vst.msk [vmem:[%s3 + $0x778] sm:$0xff] %vm4699, %v3336
  %4940 = vst.msk [vmem:[%s3 + $0x780] sm:$0xff] %vm4699, %v3341
  %4941 = vst.msk [vmem:[%s3 + $0x788] sm:$0xff] %vm4699, %v3346
  %4942 = vst.msk [vmem:[%s3 + $0x790] sm:$0xff] %vm4699, %v3351
  %4943 = vst.msk [vmem:[%s3 + $0x798] sm:$0xff] %vm4699, %v3356
  %4944 = vst.msk [vmem:[%s3 + $0x7a0] sm:$0xff] %vm4699, %v3361
  %4945 = vst.msk [vmem:[%s3 + $0x7a8] sm:$0xff] %vm4699, %v3366
  %4946 = vst.msk [vmem:[%s3 + $0x7b0] sm:$0xff] %vm4699, %v3371
  %4947 = vst.msk [vmem:[%s3 + $0x7b8] sm:$0xff] %vm4699, %v3376
  %4948 = vst.msk [vmem:[%s3 + $0x7c0] sm:$0xff] %vm4699, %v3381
  %4949 = vst.msk [vmem:[%s3 + $0x7c8] sm:$0xff] %vm4699, %v3386
  %4950 = vst.msk [vmem:[%s3 + $0x7d0] sm:$0xff] %vm4699, %v3391
  %4951 = vst.msk [vmem:[%s3 + $0x7d8] sm:$0xff] %vm4699, %v3396
  %4952 = vst.msk [vmem:[%s3 + $0x7e0] sm:$0xff] %vm4699, %v3401
  %4953 = vst.msk [vmem:[%s3 + $0x7e8] sm:$0xff] %vm4699, %v3406
  %4954 = vst.msk [vmem:[%s3 + $0x7f0] sm:$0xff] %vm4699, %v3411
  %4955 = vst.msk [vmem:[%s3 + $0x7f8] sm:$0xff] %vm4699, %v3416
  %4956 = vst.msk [vmem:[%s3 + $0x800] sm:$0xff] %vm4699, %v3421
  %4957 = vst.msk [vmem:[%s3 + $0x808] sm:$0xff] %vm4699, %v3426
  %4958 = vst.msk [vmem:[%s3 + $0x810] sm:$0xff] %vm4699, %v3431
  %4959 = vst.msk [vmem:[%s3 + $0x818] sm:$0xff] %vm4699, %v3436
  %4960 = vst.msk [vmem:[%s3 + $0x820] sm:$0xff] %vm4699, %v3441
  %4961 = vst.msk [vmem:[%s3 + $0x828] sm:$0xff] %vm4699, %v3446
  %4962 = vst.msk [vmem:[%s3 + $0x830] sm:$0xff] %vm4699, %v3451
  %4963 = vst.msk [vmem:[%s3 + $0x838] sm:$0xff] %vm4699, %v3456
  %4964 = vst.msk [vmem:[%s3 + $0x840] sm:$0xff] %vm4699, %v3461
  %4965 = vst.msk [vmem:[%s3 + $0x848] sm:$0xff] %vm4699, %v3466
  %4966 = vst.msk [vmem:[%s3 + $0x850] sm:$0xff] %vm4699, %v3471
  %4967 = vst.msk [vmem:[%s3 + $0x858] sm:$0xff] %vm4699, %v3476
  %4968 = vst.msk [vmem:[%s3 + $0x860] sm:$0xff] %vm4699, %v3481
  %4969 = vst.msk [vmem:[%s3 + $0x868] sm:$0xff] %vm4699, %v3486
  %4970 = vst.msk [vmem:[%s3 + $0x870] sm:$0xff] %vm4699, %v3491
  %4971 = vst.msk [vmem:[%s3 + $0x878] sm:$0xff] %vm4699, %v3496
  %4972 = vst.msk [vmem:[%s3 + $0x880] sm:$0xff] %vm4699, %v3501
  %4973 = vst.msk [vmem:[%s3 + $0x888] sm:$0xff] %vm4699, %v3506
  %4974 = vst.msk [vmem:[%s3 + $0x890] sm:$0xff] %vm4699, %v3511
  %4975 = vst.msk [vmem:[%s3 + $0x898] sm:$0xff] %vm4699, %v3516
  %4976 = vst.msk [vmem:[%s3 + $0x8a0] sm:$0xff] %vm4699, %v3521
  %4977 = vst.msk [vmem:[%s3 + $0x8a8] sm:$0xff] %vm4699, %v3526
  %4978 = vst.msk [vmem:[%s3 + $0x8b0] sm:$0xff] %vm4699, %v3531
  %4979 = vst.msk [vmem:[%s3 + $0x8b8] sm:$0xff] %vm4699, %v3536
  %4980 = vst.msk [vmem:[%s3 + $0x8c0] sm:$0xff] %vm4699, %v3541
  %4981 = vst.msk [vmem:[%s3 + $0x8c8] sm:$0xff] %vm4699, %v3546
  %4982 = vst.msk [vmem:[%s3 + $0x8d0] sm:$0xff] %vm4699, %v3551
  %4983 = vst.msk [vmem:[%s3 + $0x8d8] sm:$0xff] %vm4699, %v3556
  %4984 = vst.msk [vmem:[%s3 + $0x8e0] sm:$0xff] %vm4699, %v3561
  %4985 = vst.msk [vmem:[%s3 + $0x8e8] sm:$0xff] %vm4699, %v3566
  %4986 = vst.msk [vmem:[%s3 + $0x8f0] sm:$0xff] %vm4699, %v3571
  %4987 = vst.msk [vmem:[%s3 + $0x8f8] sm:$0xff] %vm4699, %v3576
  %4988 = vst.msk [vmem:[%s3 + $0x900] sm:$0xff] %vm4699, %v3581
  %4989 = vst.msk [vmem:[%s3 + $0x908] sm:$0xff] %vm4699, %v3586
  %4990 = vst.msk [vmem:[%s3 + $0x910] sm:$0xff] %vm4699, %v3591
  %4991 = vst.msk [vmem:[%s3 + $0x918] sm:$0xff] %vm4699, %v3596
  %4992 = vst.msk [vmem:[%s3 + $0x920] sm:$0xff] %vm4699, %v3601
  %4993 = vst.msk [vmem:[%s3 + $0x928] sm:$0xff] %vm4699, %v3606
  %4994 = vst.msk [vmem:[%s3 + $0x930] sm:$0xff] %vm4699, %v3611
  %4995 = vst.msk [vmem:[%s3 + $0x938] sm:$0xff] %vm4699, %v3616
  %4996 = vst.msk [vmem:[%s3 + $0x940] sm:$0xff] %vm4699, %v3621
  %4997 = vst.msk [vmem:[%s3 + $0x948] sm:$0xff] %vm4699, %v3626
  %4998 = vst.msk [vmem:[%s3 + $0x950] sm:$0xff] %vm4699, %v3631
  %4999 = vst.msk [vmem:[%s3 + $0x958] sm:$0xff] %vm4699, %v3636
  %5000 = vst.msk [vmem:[%s3 + $0x960] sm:$0xff] %vm4699, %v3641
  %5001 = vst.msk [vmem:[%s3 + $0x968] sm:$0xff] %vm4699, %v3646
  %5002 = vst.msk [vmem:[%s3 + $0x970] sm:$0xff] %vm4699, %v3651
  %5003 = vst.msk [vmem:[%s3 + $0x978] sm:$0xff] %vm4699, %v3656
  %5004 = vst.msk [vmem:[%s3 + $0x980] sm:$0xff] %vm4699, %v3661
  %5005 = vst.msk [vmem:[%s3 + $0x988] sm:$0xff] %vm4699, %v3666
  %5006 = vst.msk [vmem:[%s3 + $0x990] sm:$0xff] %vm4699, %v3671
  %5007 = vst.msk [vmem:[%s3 + $0x998] sm:$0xff] %vm4699, %v3676
  %5008 = vst.msk [vmem:[%s3 + $0x9a0] sm:$0xff] %vm4699, %v3681
  %5009 = vst.msk [vmem:[%s3 + $0x9a8] sm:$0xff] %vm4699, %v3686
  %5010 = vst.msk [vmem:[%s3 + $0x9b0] sm:$0xff] %vm4699, %v3691
  %5011 = vst.msk [vmem:[%s3 + $0x9b8] sm:$0xff] %vm4699, %v3696
  %5012 = vst.msk [vmem:[%s3 + $0x9c0] sm:$0xff] %vm4699, %v3701
  %5013 = vst.msk [vmem:[%s3 + $0x9c8] sm:$0xff] %vm4699, %v3706
  %5014 = vst.msk [vmem:[%s3 + $0x9d0] sm:$0xff] %vm4699, %v3711
  %5015 = vst.msk [vmem:[%s3 + $0x9d8] sm:$0xff] %vm4699, %v3716
  %5016 = vst.msk [vmem:[%s3 + $0x9e0] sm:$0xff] %vm4699, %v3721
  %5017 = vst.msk [vmem:[%s3 + $0x9e8] sm:$0xff] %vm4699, %v3726
  %5018 = vst.msk [vmem:[%s3 + $0x9f0] sm:$0xff] %vm4699, %v3731
  %5019 = vst.msk [vmem:[%s3 + $0x9f8] sm:$0xff] %vm4699, %v3736
  %5020 = vst.msk [vmem:[%s3 + $0xa00] sm:$0xff] %vm4699, %v3741
  %5021 = vst.msk [vmem:[%s3 + $0xa08] sm:$0xff] %vm4699, %v3746
  %5022 = vst.msk [vmem:[%s3 + $0xa10] sm:$0xff] %vm4699, %v3751
  %5023 = vst.msk [vmem:[%s3 + $0xa18] sm:$0xff] %vm4699, %v3756
  %5024 = vst.msk [vmem:[%s3 + $0xa20] sm:$0xff] %vm4699, %v3761
  %5025 = vst.msk [vmem:[%s3 + $0xa28] sm:$0xff] %vm4699, %v3766
  %5026 = vst.msk [vmem:[%s3 + $0xa30] sm:$0xff] %vm4699, %v3771
  %5027 = vst.msk [vmem:[%s3 + $0xa38] sm:$0xff] %vm4699, %v3776
  %5028 = vst.msk [vmem:[%s3 + $0xa40] sm:$0xff] %vm4699, %v3781
  %5029 = vst.msk [vmem:[%s3 + $0xa48] sm:$0xff] %vm4699, %v3786
  %5030 = vst.msk [vmem:[%s3 + $0xa50] sm:$0xff] %vm4699, %v3791
  %5031 = vst.msk [vmem:[%s3 + $0xa58] sm:$0xff] %vm4699, %v3796
  %5032 = vst.msk [vmem:[%s3 + $0xa60] sm:$0xff] %vm4699, %v3801
  %5033 = vst.msk [vmem:[%s3 + $0xa68] sm:$0xff] %vm4699, %v3806
  %5034 = vst.msk [vmem:[%s3 + $0xa70] sm:$0xff] %vm4699, %v3811
  %5035 = vst.msk [vmem:[%s3 + $0xa78] sm:$0xff] %vm4699, %v3816
  %5036 = vst.msk [vmem:[%s3 + $0xa80] sm:$0xff] %vm4699, %v3821
  %5037 = vst.msk [vmem:[%s3 + $0xa88] sm:$0xff] %vm4699, %v3826
  %5038 = vst.msk [vmem:[%s3 + $0xa90] sm:$0xff] %vm4699, %v3831
  %5039 = vst.msk [vmem:[%s3 + $0xa98] sm:$0xff] %vm4699, %v3836
  %5040 = vst.msk [vmem:[%s3 + $0xaa0] sm:$0xff] %vm4699, %v3841
  %5041 = vst.msk [vmem:[%s3 + $0xaa8] sm:$0xff] %vm4699, %v3846
  %5042 = vst.msk [vmem:[%s3 + $0xab0] sm:$0xff] %vm4699, %v3851
  %5043 = vst.msk [vmem:[%s3 + $0xab8] sm:$0xff] %vm4699, %v3856
  %5044 = vst.msk [vmem:[%s3 + $0xac0] sm:$0xff] %vm4699, %v3861
  %5045 = vst.msk [vmem:[%s3 + $0xac8] sm:$0xff] %vm4699, %v3866
  %5046 = vst.msk [vmem:[%s3 + $0xad0] sm:$0xff] %vm4699, %v3871
  %5047 = vst.msk [vmem:[%s3 + $0xad8] sm:$0xff] %vm4699, %v3876
  %5048 = vst.msk [vmem:[%s3 + $0xae0] sm:$0xff] %vm4699, %v3881
  %5049 = vst.msk [vmem:[%s3 + $0xae8] sm:$0xff] %vm4699, %v3886
  %5050 = vst.msk [vmem:[%s3 + $0xaf0] sm:$0xff] %vm4699, %v3891
  %5051 = vst.msk [vmem:[%s3 + $0xaf8] sm:$0xff] %vm4699, %v3896
  %5052 = vst.msk [vmem:[%s3 + $0xb00] sm:$0xff] %vm4699, %v3901
  %5053 = vst.msk [vmem:[%s3 + $0xb08] sm:$0xff] %vm4699, %v3906
  %5054 = vst.msk [vmem:[%s3 + $0xb10] sm:$0xff] %vm4699, %v3911
  %5055 = vst.msk [vmem:[%s3 + $0xb18] sm:$0xff] %vm4699, %v3916
  %5056 = vst.msk [vmem:[%s3 + $0xb20] sm:$0xff] %vm4699, %v3921
  %5057 = vst.msk [vmem:[%s3 + $0xb28] sm:$0xff] %vm4699, %v3926
  %5058 = vst.msk [vmem:[%s3 + $0xb30] sm:$0xff] %vm4699, %v3931
  %5059 = vst.msk [vmem:[%s3 + $0xb38] sm:$0xff] %vm4699, %v3936
  %5060 = vst.msk [vmem:[%s3 + $0xb40] sm:$0xff] %vm4699, %v3941
  %5061 = vst.msk [vmem:[%s3 + $0xb48] sm:$0xff] %vm4699, %v3946
  %5062 = vst.msk [vmem:[%s3 + $0xb50] sm:$0xff] %vm4699, %v3951
  %5063 = vst.msk [vmem:[%s3 + $0xb58] sm:$0xff] %vm4699, %v3956
  %5064 = vst.msk [vmem:[%s3 + $0xb60] sm:$0xff] %vm4699, %v3961
  %5065 = vst.msk [vmem:[%s3 + $0xb68] sm:$0xff] %vm4699, %v3966
  %5066 = vst.msk [vmem:[%s3 + $0xb70] sm:$0xff] %vm4699, %v3971
  %5067 = vst.msk [vmem:[%s3 + $0xb78] sm:$0xff] %vm4699, %v3976
  %5068 = vst.msk [vmem:[%s3 + $0xb80] sm:$0xff] %vm4699, %v3981
  %5069 = vst.msk [vmem:[%s3 + $0xb88] sm:$0xff] %vm4699, %v3986
  %5070 = vst.msk [vmem:[%s3 + $0xb90] sm:$0xff] %vm4699, %v3991
  %5071 = vst.msk [vmem:[%s3 + $0xb98] sm:$0xff] %vm4699, %v3996
  %5072 = vst.msk [vmem:[%s3 + $0xba0] sm:$0xff] %vm4699, %v4001
  %5073 = vst.msk [vmem:[%s3 + $0xba8] sm:$0xff] %vm4699, %v4006
  %5074 = vst.msk [vmem:[%s3 + $0xbb0] sm:$0xff] %vm4699, %v4011
  %5075 = vst.msk [vmem:[%s3 + $0xbb8] sm:$0xff] %vm4699, %v4016
  %5076 = vst.msk [vmem:[%s3 + $0xbc0] sm:$0xff] %vm4699, %v4021
  %5077 = vst.msk [vmem:[%s3 + $0xbc8] sm:$0xff] %vm4699, %v4026
  %5078 = vst.msk [vmem:[%s3 + $0xbd0] sm:$0xff] %vm4699, %v4031
  %5079 = vst.msk [vmem:[%s3 + $0xbd8] sm:$0xff] %vm4699, %v4036
  %5080 = vst.msk [vmem:[%s3 + $0xbe0] sm:$0xff] %vm4699, %v4041
  %5081 = vst.msk [vmem:[%s3 + $0xbe8] sm:$0xff] %vm4699, %v4046
  %5082 = vst.msk [vmem:[%s3 + $0xbf0] sm:$0xff] %vm4699, %v4051
  %5083 = vst.msk [vmem:[%s3 + $0xbf8] sm:$0xff] %vm4699, %v4056
  %5084 = vst.msk [vmem:[%s3 + $0xc00] sm:$0xff] %vm4699, %v4061
  %5085 = vst.msk [vmem:[%s3 + $0xc08] sm:$0xff] %vm4699, %v4066
  %5086 = vst.msk [vmem:[%s3 + $0xc10] sm:$0xff] %vm4699, %v4071
  %5087 = vst.msk [vmem:[%s3 + $0xc18] sm:$0xff] %vm4699, %v4076
  %5088 = vst.msk [vmem:[%s3 + $0xc20] sm:$0xff] %vm4699, %v4081
  %5089 = vst.msk [vmem:[%s3 + $0xc28] sm:$0xff] %vm4699, %v4086
  %5090 = vst.msk [vmem:[%s3 + $0xc30] sm:$0xff] %vm4699, %v4091
  %5091 = vst.msk [vmem:[%s3 + $0xc38] sm:$0xff] %vm4699, %v4096
  %5092 = vst.msk [vmem:[%s3 + $0xc40] sm:$0xff] %vm4699, %v4101
  %5093 = vst.msk [vmem:[%s3 + $0xc48] sm:$0xff] %vm4699, %v4106
  %5094 = vst.msk [vmem:[%s3 + $0xc50] sm:$0xff] %vm4699, %v4111
  %5095 = vst.msk [vmem:[%s3 + $0xc58] sm:$0xff] %vm4699, %v4116
  %5096 = vst.msk [vmem:[%s3 + $0xc60] sm:$0xff] %vm4699, %v4121
  %5097 = vst.msk [vmem:[%s3 + $0xc68] sm:$0xff] %vm4699, %v4126
  %5098 = vst.msk [vmem:[%s3 + $0xc70] sm:$0xff] %vm4699, %v4131
  %5099 = vst.msk [vmem:[%s3 + $0xc78] sm:$0xff] %vm4699, %v4136
  %5100 = vst.msk [vmem:[%s3 + $0xc80] sm:$0xff] %vm4699, %v4141
  %5101 = vst.msk [vmem:[%s3 + $0xc88] sm:$0xff] %vm4699, %v4146
  %5102 = vst.msk [vmem:[%s3 + $0xc90] sm:$0xff] %vm4699, %v4151
  %5103 = vst.msk [vmem:[%s3 + $0xc98] sm:$0xff] %vm4699, %v4156
  %5104 = vst.msk [vmem:[%s3 + $0xca0] sm:$0xff] %vm4699, %v4161
  %5105 = vst.msk [vmem:[%s3 + $0xca8] sm:$0xff] %vm4699, %v4166
  %5106 = vst.msk [vmem:[%s3 + $0xcb0] sm:$0xff] %vm4699, %v4171
  %5107 = vst.msk [vmem:[%s3 + $0xcb8] sm:$0xff] %vm4699, %v4176
  %5108 = vst.msk [vmem:[%s3 + $0xcc0] sm:$0xff] %vm4699, %v4181
  %5109 = vst.msk [vmem:[%s3 + $0xcc8] sm:$0xff] %vm4699, %v4186
  %5110 = vst.msk [vmem:[%s3 + $0xcd0] sm:$0xff] %vm4699, %v4191
  %5111 = vst.msk [vmem:[%s3 + $0xcd8] sm:$0xff] %vm4699, %v4196
  %5112 = vst.msk [vmem:[%s3 + $0xce0] sm:$0xff] %vm4699, %v4201
  %5113 = vst.msk [vmem:[%s3 + $0xce8] sm:$0xff] %vm4699, %v4206
  %5114 = vst.msk [vmem:[%s3 + $0xcf0] sm:$0xff] %vm4699, %v4211
  %5115 = vst.msk [vmem:[%s3 + $0xcf8] sm:$0xff] %vm4699, %v4216
  %5116 = vst.msk [vmem:[%s3 + $0xd00] sm:$0xff] %vm4699, %v4221
  %5117 = vst.msk [vmem:[%s3 + $0xd08] sm:$0xff] %vm4699, %v4226
  %5118 = vst.msk [vmem:[%s3 + $0xd10] sm:$0xff] %vm4699, %v4231
  %5119 = vst.msk [vmem:[%s3 + $0xd18] sm:$0xff] %vm4699, %v4236
  %5120 = vst.msk [vmem:[%s3 + $0xd20] sm:$0xff] %vm4699, %v4241
  %5121 = vst.msk [vmem:[%s3 + $0xd28] sm:$0xff] %vm4699, %v4246
  %5122 = vst.msk [vmem:[%s3 + $0xd30] sm:$0xff] %vm4699, %v4251
  %5123 = vst.msk [vmem:[%s3 + $0xd38] sm:$0xff] %vm4699, %v4256
  %5124 = vst.msk [vmem:[%s3 + $0xd40] sm:$0xff] %vm4699, %v4261
  %5125 = vst.msk [vmem:[%s3 + $0xd48] sm:$0xff] %vm4699, %v4266
  %5126 = vst.msk [vmem:[%s3 + $0xd50] sm:$0xff] %vm4699, %v4271
  %5127 = vst.msk [vmem:[%s3 + $0xd58] sm:$0xff] %vm4699, %v4276
  %5128 = vst.msk [vmem:[%s3 + $0xd60] sm:$0xff] %vm4699, %v4281
  %5129 = vst.msk [vmem:[%s3 + $0xd68] sm:$0xff] %vm4699, %v4286
  %5130 = vst.msk [vmem:[%s3 + $0xd70] sm:$0xff] %vm4699, %v4291
  %5131 = vst.msk [vmem:[%s3 + $0xd78] sm:$0xff] %vm4699, %v4296
  %5132 = vst.msk [vmem:[%s3 + $0xd80] sm:$0xff] %vm4699, %v4301
  %5133 = vst.msk [vmem:[%s3 + $0xd88] sm:$0xff] %vm4699, %v4306
  %5134 = vst.msk [vmem:[%s3 + $0xd90] sm:$0xff] %vm4699, %v4311
  %5135 = vst.msk [vmem:[%s3 + $0xd98] sm:$0xff] %vm4699, %v4316
  %5136 = vst.msk [vmem:[%s3 + $0xda0] sm:$0xff] %vm4699, %v4321
  %5137 = vst.msk [vmem:[%s3 + $0xda8] sm:$0xff] %vm4699, %v4326
  %5138 = vst.msk [vmem:[%s3 + $0xdb0] sm:$0xff] %vm4699, %v4331
  %5139 = vst.msk [vmem:[%s3 + $0xdb8] sm:$0xff] %vm4699, %v4336
  %5140 = vst.msk [vmem:[%s3 + $0xdc0] sm:$0xff] %vm4699, %v4341
  %5141 = vst.msk [vmem:[%s3 + $0xdc8] sm:$0xff] %vm4699, %v4346
  %5142 = vst.msk [vmem:[%s3 + $0xdd0] sm:$0xff] %vm4699, %v4351
  %5143 = vst.msk [vmem:[%s3 + $0xdd8] sm:$0xff] %vm4699, %v4356
  %5144 = vst.msk [vmem:[%s3 + $0xde0] sm:$0xff] %vm4699, %v4361
  %5145 = vst.msk [vmem:[%s3 + $0xde8] sm:$0xff] %vm4699, %v4366
  %5146 = vst.msk [vmem:[%s3 + $0xdf0] sm:$0xff] %vm4699, %v4371
  %5147 = vst.msk [vmem:[%s3 + $0xdf8] sm:$0xff] %vm4699, %v4376
  %5148 = vst.msk [vmem:[%s3 + $0xe00] sm:$0xff] %vm4699, %v4381
  %5149 = vst.msk [vmem:[%s3 + $0xe08] sm:$0xff] %vm4699, %v4386
  %5150 = vst.msk [vmem:[%s3 + $0xe10] sm:$0xff] %vm4699, %v4391
  %5151 = vst.msk [vmem:[%s3 + $0xe18] sm:$0xff] %vm4699, %v4396
  %5152 = vst.msk [vmem:[%s3 + $0xe20] sm:$0xff] %vm4699, %v4401
  %5153 = vst.msk [vmem:[%s3 + $0xe28] sm:$0xff] %vm4699, %v4406
  %5154 = vst.msk [vmem:[%s3 + $0xe30] sm:$0xff] %vm4699, %v4411
  %5155 = vst.msk [vmem:[%s3 + $0xe38] sm:$0xff] %vm4699, %v4416
  %5156 = vst.msk [vmem:[%s3 + $0xe40] sm:$0xff] %vm4699, %v4421
  %5157 = vst.msk [vmem:[%s3 + $0xe48] sm:$0xff] %vm4699, %v4426
  %5158 = vst.msk [vmem:[%s3 + $0xe50] sm:$0xff] %vm4699, %v4431
  %5159 = vst.msk [vmem:[%s3 + $0xe58] sm:$0xff] %vm4699, %v4436
  %5160 = vst.msk [vmem:[%s3 + $0xe60] sm:$0xff] %vm4699, %v4441
  %5161 = vst.msk [vmem:[%s3 + $0xe68] sm:$0xff] %vm4699, %v4446
  %5162 = vst.msk [vmem:[%s3 + $0xe70] sm:$0xff] %vm4699, %v4451
  %5163 = vst.msk [vmem:[%s3 + $0xe78] sm:$0xff] %vm4699, %v4456
  %5164 = vst.msk [vmem:[%s3 + $0xe80] sm:$0xff] %vm4699, %v4461
  %5165 = vst.msk [vmem:[%s3 + $0xe88] sm:$0xff] %vm4699, %v4466
  %5166 = vst.msk [vmem:[%s3 + $0xe90] sm:$0xff] %vm4699, %v4471
  %5167 = vst.msk [vmem:[%s3 + $0xe98] sm:$0xff] %vm4699, %v4476
  %5168 = vst.msk [vmem:[%s3 + $0xea0] sm:$0xff] %vm4699, %v4481
  %5169 = vst.msk [vmem:[%s3 + $0xea8] sm:$0xff] %vm4699, %v4486
  %5170 = vst.msk [vmem:[%s3 + $0xeb0] sm:$0xff] %vm4699, %v4491
  %5171 = vst.msk [vmem:[%s3 + $0xeb8] sm:$0xff] %vm4699, %v4496
  %5172 = vst.msk [vmem:[%s3 + $0xec0] sm:$0xff] %vm4699, %v4501
  %5173 = vst.msk [vmem:[%s3 + $0xec8] sm:$0xff] %vm4699, %v4506
  %5174 = vst.msk [vmem:[%s3 + $0xed0] sm:$0xff] %vm4699, %v4511
  %5175 = vst.msk [vmem:[%s3 + $0xed8] sm:$0xff] %vm4699, %v4516
  %5176 = vst.msk [vmem:[%s3 + $0xee0] sm:$0xff] %vm4699, %v4521
  %5177 = vst.msk [vmem:[%s3 + $0xee8] sm:$0xff] %vm4699, %v4526
  %5178 = vst.msk [vmem:[%s3 + $0xef0] sm:$0xff] %vm4699, %v4531
  %5179 = vst.msk [vmem:[%s3 + $0xef8] sm:$0xff] %vm4699, %v4536
  %5180 = vst.msk [vmem:[%s3 + $0xf00] sm:$0xff] %vm4699, %v4541
  %5181 = vst.msk [vmem:[%s3 + $0xf08] sm:$0xff] %vm4699, %v4546
  %5182 = vst.msk [vmem:[%s3 + $0xf10] sm:$0xff] %vm4699, %v4551
  %5183 = vst.msk [vmem:[%s3 + $0xf18] sm:$0xff] %vm4699, %v4556
  %5184 = vst.msk [vmem:[%s3 + $0xf20] sm:$0xff] %vm4699, %v4561
  %5185 = vst.msk [vmem:[%s3 + $0xf28] sm:$0xff] %vm4699, %v4566
  %5186 = vst.msk [vmem:[%s3 + $0xf30] sm:$0xff] %vm4699, %v4571
  %5187 = vst.msk [vmem:[%s3 + $0xf38] sm:$0xff] %vm4699, %v4576
  %5188 = vst.msk [vmem:[%s3 + $0xf40] sm:$0xff] %vm4699, %v4581
  %5189 = vst.msk [vmem:[%s3 + $0xf48] sm:$0xff] %vm4699, %v4586
  %5190 = vst.msk [vmem:[%s3 + $0xf50] sm:$0xff] %vm4699, %v4591
  %5191 = vst.msk [vmem:[%s3 + $0xf58] sm:$0xff] %vm4699, %v4596
  %5192 = vst.msk [vmem:[%s3 + $0xf60] sm:$0xff] %vm4699, %v4601
  %5193 = vst.msk [vmem:[%s3 + $0xf68] sm:$0xff] %vm4699, %v4606
  %5194 = vst.msk [vmem:[%s3 + $0xf70] sm:$0xff] %vm4699, %v4611
  %5195 = vst.msk [vmem:[%s3 + $0xf78] sm:$0xff] %vm4699, %v4616
  %5196 = vst.msk [vmem:[%s3 + $0xf80] sm:$0xff] %vm4699, %v4621
  %5197 = vst.msk [vmem:[%s3 + $0xf88] sm:$0xff] %vm4699, %v4626
  %5198 = vst.msk [vmem:[%s3 + $0xf90] sm:$0xff] %vm4699, %v4631
  %5199 = vst.msk [vmem:[%s3 + $0xf98] sm:$0xff] %vm4699, %v4636
  %5200 = vst.msk [vmem:[%s3 + $0xfa0] sm:$0xff] %vm4699, %v4641
  %5201 = vst.msk [vmem:[%s3 + $0xfa8] sm:$0xff] %vm4699, %v4646
  %5202 = vst.msk [vmem:[%s3 + $0xfb0] sm:$0xff] %vm4699, %v4651
  %5203 = vst.msk [vmem:[%s3 + $0xfb8] sm:$0xff] %vm4699, %v4656
  %5204 = vst.msk [vmem:[%s3 + $0xfc0] sm:$0xff] %vm4699, %v4661
  %5205 = vst.msk [vmem:[%s3 + $0xfc8] sm:$0xff] %vm4699, %v4666
  %5206 = vst.msk [vmem:[%s3 + $0xfd0] sm:$0xff] %vm4699, %v4671
  %5207 = vst.msk [vmem:[%s3 + $0xfd8] sm:$0xff] %vm4699, %v4676
  %5208 = vst.msk [vmem:[%s3 + $0xfe0] sm:$0xff] %vm4699, %v4681
  %5209 = vst.msk [vmem:[%s3 + $0xfe8] sm:$0xff] %vm4699, %v4686
  %5210 = vst.msk [vmem:[%s3 + $0xff0] sm:$0xff] %vm4699, %v4691
  %5211 = vst.msk [vmem:[%s3 + $0xff8] sm:$0xff] %vm4699, %v4696
  // Predicated region
  $region14: #{tpu_custom_call.1} parent=0 // pred_check
    _
  $region15: #{tpu_custom_call.1} parent=0 // pred_check_branch
    %5213 = sbr.rel (0) target = $region17
  $region16: #{tpu_custom_call.1} parent=0 // pred_region
    _
  $region17: #{tpu_custom_call.1} parent=0 // pred_fallthru
    _
  // Predicated region
  $region18: #{tpu_custom_call.1} parent=0 // pred_check
    _
  $region19: #{tpu_custom_call.1} parent=0 // pred_check_branch
    %5215 = sbr.rel (0) target = $region21
  $region20: #{tpu_custom_call.1} parent=0 // pred_region
    _
  $region21: #{tpu_custom_call.1} parent=0 // pred_fallthru
    _

</llo_original>
